<compile_context>
chip_gen: v7x
topology: tpu7x:2x2x1
jax: 0.10.0
libtpu: 0.0.40
codegen_flags: <defaults>
</compile_context>

<pallas_src>
import math
import jax
import jax.numpy as jnp
from jax.experimental import pallas as pl
from jax.experimental.pallas import tpu as pltpu

# -----------------------------------------------------------------------------
# Hyper-parameters (small, consistent with the module's __init__ signature)
# -----------------------------------------------------------------------------
NODE_NUM            = 8
COV_NUM             = 2
IN_FEATURE_LIST     = [16, 24]          # hidden is appended inside __init__
BLOCK_NUM           = 1
HIDDEN              = 32
ATTN_HEADS          = 2
FEED_FORWARD_HIDDEN = 64
P_SAMPLE            = 0.5               # sampler params (sampler itself undefined in ref)
MIN_LEN             = 3
MAX_LEN             = 6
NUM_GRAPHS          = 8                 # length of the temporal graph sequence

HEAD_DIM      = HIDDEN // ATTN_HEADS
LOG_SQRT_2PI  = 0.5 * math.log(2.0 * math.pi)


# -----------------------------------------------------------------------------
# Small helpers usable inside kernels
# -----------------------------------------------------------------------------
def _softplus(x):
    # numerically stable softplus built only from exp/log/abs/max
    return jnp.maximum(x, 0.0) + jnp.log(1.0 + jnp.exp(-jnp.abs(x)))


def _gelu(x):
    # tanh-approx GELU (BERT-style).  TODO(synk): reference TransformerBlock is
    # undefined; PyTorch nn.GELU default is the exact erf form (small drift).
    c = math.sqrt(2.0 / math.pi)
    return 0.5 * x * (1.0 + jnp.tanh(c * (x + 0.044715 * x * x * x)))


def _const_spec(shape):
    """Full-array BlockSpec whose block index is constant across the grid."""
    nd = len(shape)
    if nd == 2:
        return pl.BlockSpec(shape, lambda i: (0, 0))
    if nd == 3:
        return pl.BlockSpec(shape, lambda i: (0, 0, 0))
    raise ValueError(f"unsupported rank {nd}")


# -----------------------------------------------------------------------------
# The single fused MIB forward kernel
# -----------------------------------------------------------------------------
def _make_mib_kernel(n_extra, win_len, n_blocks):
    B = 2 * NODE_NUM                 # nodes of both encoder passes, folded into rows

    def kernel(adj_ref, xw0_ref, b0_ref, *rest):
        # ------------------------- unpack positional refs ---------------------
        idx = 0
        gcn_extra = rest[idx:idx + 2 * n_extra]; idx += 2 * n_extra
        h0_ref, pe_ref, mask_ref = rest[idx], rest[idx + 1], rest[idx + 2]; idx += 3
        blk_refs = rest[idx:idx + 12 * n_blocks]; idx += 12 * n_blocks
        eps_ref, locw_ref, locb_ref, sclw_ref, sclb_ref = rest[idx:idx + 5]; idx += 5
        out_ref = rest[idx]

        n = NODE_NUM
        hdim = HIDDEN
        tl = 2 * win_len             # total timesteps (both passes stacked)

        # ---------------- GCN: all timesteps of both passes, batched ----------
        adj = adj_ref[...]                                            # [2L, N, N]
        eye = (jax.lax.broadcasted_iota(jnp.int32, (n, n), 0)
               == jax.lax.broadcasted_iota(jnp.int32, (n, n), 1)).astype(jnp.float32)
        a_hat = adj + eye[None, :, :]
        d_is = jax.lax.rsqrt(jnp.sum(a_hat, axis=-1, keepdims=True))  # [2L, N, 1]

        def agg(m):
            # D^{-1/2}(A+I)D^{-1/2} @ m, batched over all timesteps at once
            return d_is * jnp.einsum('tij,tjf->tif', a_hat, d_is * m,
                                     preferred_element_type=jnp.float32)

        h = agg(xw0_ref[...][None, :, :]) + b0_ref[...]               # GCN layer 0
        for li in range(n_extra):                                     # remaining layers
            h = jnp.maximum(h, 0.0)                                   # relu between layers
            w = gcn_extra[2 * li][...]
            b = gcn_extra[2 * li + 1][...]
            hw = jnp.dot(h.reshape(tl * n, w.shape[0]), w,            # one wide 2-D dot
                         preferred_element_type=jnp.float32)
            h = agg(hw.reshape(tl, n, w.shape[1])) + b                # [2L, N, H]

        # ------- build transformer input rows, sequence-major: row = s*B + b --
        cls = jnp.broadcast_to(h0_ref[...] + pe_ref[0:1, :], (B, hdim))
        pieces = [cls]
        for t in range(win_len):
            row = jnp.concatenate([h[t], h[win_len + t]], axis=0)     # [2N, H]
            pieces.append(row + pe_ref[t + 1:t + 2, :])
        x = jnp.concatenate(pieces, axis=0)                           # [S*2N, H]

        # ------------------------- transformer blocks -------------------------
        def ln(t, g, b):
            mu = jnp.mean(t, axis=-1, keepdims=True)
            var = jnp.mean((t - mu) ** 2, axis=-1, keepdims=True)
            return (t - mu) * jax.lax.rsqrt(var + 1e-5) * g + b

        mask = mask_ref[...]                                          # additive block-diag
        inv_sqrt_d = 1.0 / math.sqrt(HEAD_DIM)
        dn_tr_b = (((1,), (1,)), ((), ()))                            # q @ k^T

        for bi in range(n_blocks):
            (ln1g, ln1b, wqkv, bqkv, wo, bo,
             ln2g, ln2b, w1, b1, w2, b2) = blk_refs[12 * bi:12 * (bi + 1)]

            # ---- multi-head self-attention (fused QKV, masked full matmuls) --
            y = ln(x, ln1g[...], ln1b[...])
            qkv = jnp.dot(y, wqkv[...], preferred_element_type=jnp.float32) + bqkv[...]
            heads = []
            for hi in range(ATTN_HEADS):
                q = qkv[:, hi * HEAD_DIM:(hi + 1) * HEAD_DIM]
                k = qkv[:, hdim + hi * HEAD_DIM:hdim + (hi + 1) * HEAD_DIM]
                v = qkv[:, 2 * hdim + hi * HEAD_DIM:2 * hdim + (hi + 1) * HEAD_DIM]
                sc = jax.lax.dot_general(q, k, dn_tr_b,
                                         preferred_element_type=jnp.float32)
                sc = sc * inv_sqrt_d + mask
                sc = sc - jnp.max(sc, axis=-1, keepdims=True)
                p = jnp.exp(sc)
                # approx reciprocal (EUP); tiny relative error vs exact softmax
                p = p * pl.reciprocal(jnp.sum(p, axis=-1, keepdims=True), approx=True)
                heads.append(jnp.dot(p, v, preferred_element_type=jnp.float32))
            attn = jnp.dot(jnp.concatenate(heads, axis=-1), wo[...],
                           preferred_element_type=jnp.float32) + bo[...]
            x = x + attn                                              # residual 1

            # ---- feed-forward --------------------------------------------------
            y2 = ln(x, ln2g[...], ln2b[...])
            ff = _gelu(jnp.dot(y2, w1[...], preferred_element_type=jnp.float32) + b1[...])
            ff = jnp.dot(ff, w2[...], preferred_element_type=jnp.float32) + b2[...]
            x = x + ff                                                # residual 2

        # ------ distribution heads (CLS rows), rsample, both KL terms ---------
        # TODO(synk): Sampler / distribution head are undefined in the reference;
        # modeled as a diagonal Gaussian (linear loc head, softplus scale head).
        x_cls = x[:B, :]                                              # rows with s == 0
        loc = jnp.dot(x_cls, locw_ref[...], preferred_element_type=jnp.float32) + locb_ref[...]
        pre = jnp.dot(x_cls, sclw_ref[...], preferred_element_type=jnp.float32) + sclb_ref[...]
        scale = _softplus(pre) + 1e-6
        sample = loc + scale * eps_ref[...]                           # rsample

        loc_o, loc_t = loc[:n, :], loc[n:, :]
        scl_o, scl_t = scale[:n, :], scale[n:, :]
        x_org, x_oth = sample[:n, :], sample[n:, :]

        def log_prob(v, m, s):
            d = v - m
            return -(d * d) / (2.0 * s * s) - jnp.log(s) - LOG_SQRT_2PI

        kl1 = log_prob(x_org, loc_o, scl_o) - log_prob(x_org, loc_t, scl_t)
        kl2 = log_prob(x_oth, loc_t, scl_t) - log_prob(x_oth, loc_o, scl_o)

        # single lane-dense [N, 4H] = [8, 128] store
        out_ref[...] = jnp.concatenate([x_org, x_oth, kl1, kl2], axis=-1)

    return kernel


def mib_fused_call(adj_win, params, pe, attn_mask, eps):
    """adj_win: [2L, N, N] (both passes stacked) -> (x_org, x_other, kl1, kl2)."""
    n_extra = len(params["gcn_w"]) - 1
    n_blocks = len(params["blocks"])
    win_len = adj_win.shape[0] // 2

    # Hoisted, loop/pass-invariant: t_feats @ W0 (identical for every timestep).
    xw0 = jnp.dot(params["t_feats"], params["gcn_w"][0])

    inputs = [adj_win, xw0, params["gcn_b"][0]]
    for i in range(1, n_extra + 1):
        inputs += [params["gcn_w"][i], params["gcn_b"][i]]
    inputs += [params["h_0"], pe, attn_mask]
    for blk in params["blocks"]:
        inputs += [blk["ln1_g"], blk["ln1_b"], blk["wqkv"], blk["bqkv"],
                   blk["wo"], blk["bo"], blk["ln2_g"], blk["ln2_b"],
                   blk["w1"], blk["b1"], blk["w2"], blk["b2"]]
    inputs += [eps, params["loc_w"], params["loc_b"],
               params["scale_w"], params["scale_b"]]

    out = pl.pallas_call(
        _make_mib_kernel(n_extra, win_len, n_blocks),
        out_shape=jax.ShapeDtypeStruct((NODE_NUM, 4 * HIDDEN), jnp.float32),
        grid=(1,),
        in_specs=[_const_spec(a.shape) for a in inputs],
        out_specs=_const_spec((NODE_NUM, 4 * HIDDEN)),
        compiler_params=pltpu.CompilerParams(dimension_semantics=("arbitrary",)),
    )(*inputs)

    return (out[:, 0 * HIDDEN:1 * HIDDEN], out[:, 1 * HIDDEN:2 * HIDDEN],
            out[:, 2 * HIDDEN:3 * HIDDEN], out[:, 3 * HIDDEN:4 * HIDDEN])


# -----------------------------------------------------------------------------
# Plain-JAX glue
# -----------------------------------------------------------------------------
def positional_encoding(seq_len, d_model):
    pos = jnp.arange(seq_len, dtype=jnp.float32)[:, None]
    i = jnp.arange(0, d_model, 2, dtype=jnp.float32)
    div = jnp.exp(-jnp.log(10000.0) * i / d_model)
    pe = jnp.zeros((seq_len, d_model), dtype=jnp.float32)
    pe = pe.at[:, 0::2].set(jnp.sin(pos * div))
    pe = pe.at[:, 1::2].set(jnp.cos(pos * div))
    return pe


def mib_forward(params, adjs, key):
    T = adjs.shape[0]
    L = min(MAX_LEN, T)
    S = L + 1
    k_w1, k_w2, k_eps = jax.random.split(key, 3)

    # TODO(synk): `Sampler` is undefined in the reference; modeled as a fixed
    # window length L=min(max_len, T) with a uniformly random start per encoder
    # call, so the two encoder passes see (generally) different temporal windows.
    beg1 = jax.random.randint(k_w1, (), 0, T - L + 1)
    beg2 = jax.random.randint(k_w2, (), 0, T - L + 1)
    win_org = jax.lax.dynamic_slice_in_dim(adjs, beg1, L, axis=0)
    win_oth = jax.lax.dynamic_slice_in_dim(adjs, beg2, L, axis=0)
    adj_win = jnp.concatenate([win_org, win_oth], axis=0)          # [2L, N, N]

    pe = positional_encoding(S, HIDDEN)

    # Additive block-diagonal attention mask for the row layout (row = s*B + b):
    # a row attends only to rows with the same (pass, node) index b = row % B.
    B = 2 * NODE_NUM
    rows = S * B
    r = jnp.arange(rows) % B
    attn_mask = jnp.where(r[:, None] == r[None, :], 0.0, -1e30).astype(jnp.float32)

    eps = jax.random.normal(k_eps, (B, HIDDEN), jnp.float32)
    return mib_fused_call(adj_win, params, pe, attn_mask, eps)


# -----------------------------------------------------------------------------
# Deterministic parameter construction (weight plumbing pre-fused here)
# -----------------------------------------------------------------------------
def xavier_uniform(key, shape):
    fan_in, fan_out = shape
    bound = math.sqrt(6.0 / (fan_in + fan_out))
    return jax.random.uniform(key, shape, jnp.float32, -bound, bound)


def make_params(key):
    feats = list(IN_FEATURE_LIST) + [HIDDEN]     # __init__: in_feature_list.append(hidden)
    keys = jax.random.split(key, 64)
    ki = iter(range(64))

    gcn_w = [xavier_uniform(keys[next(ki)], (feats[i], feats[i + 1])) for i in range(COV_NUM)]
    gcn_b = [jnp.zeros((1, feats[i + 1]), jnp.float32) for i in range(COV_NUM)]

    blocks = []
    for _ in range(BLOCK_NUM):
        wq = xavier_uniform(keys[next(ki)], (HIDDEN, HIDDEN))
        wk = xavier_uniform(keys[next(ki)], (HIDDEN, HIDDEN))
        wv = xavier_uniform(keys[next(ki)], (HIDDEN, HIDDEN))
        blocks.append({
            # QKV fused and biases pre-shaped at construction time (not per-forward)
            "wqkv": jnp.concatenate([wq, wk, wv], axis=1),
            "bqkv": jnp.zeros((1, 3 * HIDDEN), jnp.float32),
            "wo": xavier_uniform(keys[next(ki)], (HIDDEN, HIDDEN)),
            "bo": jnp.zeros((1, HIDDEN), jnp.float32),
            "w1": xavier_uniform(keys[next(ki)], (HIDDEN, FEED_FORWARD_HIDDEN)),
            "b1": jnp.zeros((1, FEED_FORWARD_HIDDEN), jnp.float32),
            "w2": xavier_uniform(keys[next(ki)], (FEED_FORWARD_HIDDEN, HIDDEN)),
            "b2": jnp.zeros((1, HIDDEN), jnp.float32),
            "ln1_g": jnp.ones((1, HIDDEN), jnp.float32),
            "ln1_b": jnp.zeros((1, HIDDEN), jnp.float32),
            "ln2_g": jnp.ones((1, HIDDEN), jnp.float32),
            "ln2_b": jnp.zeros((1, HIDDEN), jnp.float32),
        })

    return {
        "t_feats": jnp.ones((NODE_NUM, feats[0]), jnp.float32),   # torch.ones
        "h_0": jnp.ones((1, HIDDEN), jnp.float32),                # torch.ones
        "gcn_w": gcn_w,
        "gcn_b": gcn_b,
        "blocks": blocks,
        "loc_w": xavier_uniform(keys[next(ki)], (HIDDEN, HIDDEN)),
        "loc_b": jnp.zeros((1, HIDDEN), jnp.float32),
        "scale_w": xavier_uniform(keys[next(ki)], (HIDDEN, HIDDEN)),
        "scale_b": jnp.zeros((1, HIDDEN), jnp.float32),
    }


# -----------------------------------------------------------------------------
if __name__ == "__main__":
    root = jax.random.PRNGKey(0)
    k_adj, k_param, k_eps = jax.random.split(root, 3)

    # "graphs": a sequence of NUM_GRAPHS symmetric binary adjacency matrices.
    A = (jax.random.uniform(k_adj, (NUM_GRAPHS, NODE_NUM, NODE_NUM)) < 0.4).astype(jnp.float32)
    A = jnp.maximum(A, jnp.swapaxes(A, -1, -2))
    A = A * (1.0 - jnp.eye(NODE_NUM, dtype=jnp.float32))

    params = make_params(k_param)

    fwd = jax.jit(mib_forward)
    x_org, x_other, kl_org_other, kl_other_org = fwd(params, A, k_eps)
    jax.block_until_ready((x_org, x_other, kl_org_other, kl_other_org))

    assert x_org.shape == (NODE_NUM, HIDDEN)
    assert x_other.shape == (NODE_NUM, HIDDEN)
    assert kl_org_other.shape == (NODE_NUM, HIDDEN)
    assert kl_other_org.shape == (NODE_NUM, HIDDEN)
    assert bool(jnp.all(jnp.isfinite(x_org))) and bool(jnp.all(jnp.isfinite(x_other)))
    assert bool(jnp.all(jnp.isfinite(kl_org_other))) and bool(jnp.all(jnp.isfinite(kl_other_org)))

    print("KERNEL_OK")
</pallas_src>

<mosaic_0001>
module attributes {stable_mosaic.version = 11 : i64} {
  func.func @kernel(%arg0: i32, %arg1: memref<12x8x8xf32, #tpu.memory_space<vmem>>, %arg2: memref<8x24xf32, #tpu.memory_space<vmem>>, %arg3: memref<1x24xf32, #tpu.memory_space<vmem>>, %arg4: memref<24x32xf32, #tpu.memory_space<vmem>>, %arg5: memref<1x32xf32, #tpu.memory_space<vmem>>, %arg6: memref<1x32xf32, #tpu.memory_space<vmem>>, %arg7: memref<7x32xf32, #tpu.memory_space<vmem>>, %arg8: memref<112x112xf32, #tpu.memory_space<vmem>>, %arg9: memref<1x32xf32, #tpu.memory_space<vmem>>, %arg10: memref<1x32xf32, #tpu.memory_space<vmem>>, %arg11: memref<32x96xf32, #tpu.memory_space<vmem>>, %arg12: memref<1x96xf32, #tpu.memory_space<vmem>>, %arg13: memref<32x32xf32, #tpu.memory_space<vmem>>, %arg14: memref<1x32xf32, #tpu.memory_space<vmem>>, %arg15: memref<1x32xf32, #tpu.memory_space<vmem>>, %arg16: memref<1x32xf32, #tpu.memory_space<vmem>>, %arg17: memref<32x64xf32, #tpu.memory_space<vmem>>, %arg18: memref<1x64xf32, #tpu.memory_space<vmem>>, %arg19: memref<64x32xf32, #tpu.memory_space<vmem>>, %arg20: memref<1x32xf32, #tpu.memory_space<vmem>>, %arg21: memref<16x32xf32, #tpu.memory_space<vmem>>, %arg22: memref<32x32xf32, #tpu.memory_space<vmem>>, %arg23: memref<1x32xf32, #tpu.memory_space<vmem>>, %arg24: memref<32x32xf32, #tpu.memory_space<vmem>>, %arg25: memref<1x32xf32, #tpu.memory_space<vmem>>, %arg26: memref<8x128xf32, #tpu.memory_space<vmem>>) attributes {dimension_semantics = [#tpu.dimension_semantics<arbitrary>], iteration_bounds = array<i64: 1>, scalar_prefetch = 0 : i64, scratch_operands = 0 : i64, tpu.core_type = #tpu.core_type<tc>, window_params = [{pipeline_mode = #tpu.pipeline_mode<synchronous>, transform_indices = @transform_0, window_bounds = array<i64: 12, 8, 8>}, {pipeline_mode = #tpu.pipeline_mode<synchronous>, transform_indices = @transform_1, window_bounds = array<i64: 8, 24>}, {pipeline_mode = #tpu.pipeline_mode<synchronous>, transform_indices = @transform_2, window_bounds = array<i64: 1, 24>}, {pipeline_mode = #tpu.pipeline_mode<synchronous>, transform_indices = @transform_3, window_bounds = array<i64: 24, 32>}, {pipeline_mode = #tpu.pipeline_mode<synchronous>, transform_indices = @transform_4, window_bounds = array<i64: 1, 32>}, {pipeline_mode = #tpu.pipeline_mode<synchronous>, transform_indices = @transform_5, window_bounds = array<i64: 1, 32>}, {pipeline_mode = #tpu.pipeline_mode<synchronous>, transform_indices = @transform_6, window_bounds = array<i64: 7, 32>}, {pipeline_mode = #tpu.pipeline_mode<synchronous>, transform_indices = @transform_7, window_bounds = array<i64: 112, 112>}, {pipeline_mode = #tpu.pipeline_mode<synchronous>, transform_indices = @transform_8, window_bounds = array<i64: 1, 32>}, {pipeline_mode = #tpu.pipeline_mode<synchronous>, transform_indices = @transform_9, window_bounds = array<i64: 1, 32>}, {pipeline_mode = #tpu.pipeline_mode<synchronous>, transform_indices = @transform_10, window_bounds = array<i64: 32, 96>}, {pipeline_mode = #tpu.pipeline_mode<synchronous>, transform_indices = @transform_11, window_bounds = array<i64: 1, 96>}, {pipeline_mode = #tpu.pipeline_mode<synchronous>, transform_indices = @transform_12, window_bounds = array<i64: 32, 32>}, {pipeline_mode = #tpu.pipeline_mode<synchronous>, transform_indices = @transform_13, window_bounds = array<i64: 1, 32>}, {pipeline_mode = #tpu.pipeline_mode<synchronous>, transform_indices = @transform_14, window_bounds = array<i64: 1, 32>}, {pipeline_mode = #tpu.pipeline_mode<synchronous>, transform_indices = @transform_15, window_bounds = array<i64: 1, 32>}, {pipeline_mode = #tpu.pipeline_mode<synchronous>, transform_indices = @transform_16, window_bounds = array<i64: 32, 64>}, {pipeline_mode = #tpu.pipeline_mode<synchronous>, transform_indices = @transform_17, window_bounds = array<i64: 1, 64>}, {pipeline_mode = #tpu.pipeline_mode<synchronous>, transform_indices = @transform_18, window_bounds = array<i64: 64, 32>}, {pipeline_mode = #tpu.pipeline_mode<synchronous>, transform_indices = @transform_19, window_bounds = array<i64: 1, 32>}, {pipeline_mode = #tpu.pipeline_mode<synchronous>, transform_indices = @transform_20, window_bounds = array<i64: 16, 32>}, {pipeline_mode = #tpu.pipeline_mode<synchronous>, transform_indices = @transform_21, window_bounds = array<i64: 32, 32>}, {pipeline_mode = #tpu.pipeline_mode<synchronous>, transform_indices = @transform_22, window_bounds = array<i64: 1, 32>}, {pipeline_mode = #tpu.pipeline_mode<synchronous>, transform_indices = @transform_23, window_bounds = array<i64: 32, 32>}, {pipeline_mode = #tpu.pipeline_mode<synchronous>, transform_indices = @transform_24, window_bounds = array<i64: 1, 32>}, {pipeline_mode = #tpu.pipeline_mode<synchronous>, transform_indices = @transform_25, window_bounds = array<i64: 8, 128>}]} {
    %c0 = arith.constant 0 : index
    %c0_0 = arith.constant 0 : index
    %c0_1 = arith.constant 0 : index
    %0 = vector.load %arg1[%c0, %c0_0, %c0_1] : memref<12x8x8xf32, #tpu.memory_space<vmem>>, vector<12x8x8xf32>
    %1 = tpu.iota {dimensions = array<i32: 0>} : vector<8x8xi32>
    %2 = tpu.iota {dimensions = array<i32: 1>} : vector<8x8xi32>
    %3 = arith.cmpi eq, %1, %2 : vector<8x8xi32>
    %4 = arith.extui %3 : vector<8x8xi1> to vector<8x8xi32>
    %5 = arith.sitofp %4 : vector<8x8xi32> to vector<8x8xf32>
    %6 = vector.shape_cast %5 : vector<8x8xf32> to vector<1x8x8xf32>
    %7 = vector.broadcast %6 : vector<1x8x8xf32> to vector<12x8x8xf32>
    %8 = arith.addf %0, %7 : vector<12x8x8xf32>
    %cst = arith.constant dense<0.000000e+00> : vector<12x8xf32>
    %9 = vector.multi_reduction <add>, %8, %cst [2] : vector<12x8x8xf32> to vector<12x8xf32>
    %10 = vector.shape_cast %9 : vector<12x8xf32> to vector<12x8x1xf32>
    %11 = math.rsqrt %10 : vector<12x8x1xf32>
    %c0_2 = arith.constant 0 : index
    %c0_3 = arith.constant 0 : index
    %12 = vector.load %arg2[%c0_2, %c0_3] : memref<8x24xf32, #tpu.memory_space<vmem>>, vector<8x24xf32>
    %13 = vector.shape_cast %12 : vector<8x24xf32> to vector<1x8x24xf32>
    %14 = vector.broadcast %11 : vector<12x8x1xf32> to vector<12x8x24xf32>
    %15 = vector.broadcast %13 : vector<1x8x24xf32> to vector<12x8x24xf32>
    %16 = arith.mulf %14, %15 : vector<12x8x24xf32>
    "tpu.trace_start"() <{level = 10 : i32, message = "tij,tjf->tif"}> : () -> ()
    %cst_4 = arith.constant dense<0.000000e+00> : vector<12x8x24xf32>
    %17 = tpu.matmul %8, %16, %cst_4 {dimension_numbers = #tpu.dot_dimension_numbers<[2], [1], [1], [2], [0, 0, 0, 1, 1, 2], [0], [0]>} : vector<12x8x8xf32>, vector<12x8x24xf32>, vector<12x8x24xf32> -> vector<12x8x24xf32>
    "tpu.trace_stop"() : () -> ()
    %18 = vector.broadcast %11 : vector<12x8x1xf32> to vector<12x8x24xf32>
    %19 = arith.mulf %18, %17 : vector<12x8x24xf32>
    %c0_5 = arith.constant 0 : index
    %c0_6 = arith.constant 0 : index
    %20 = vector.load %arg3[%c0_5, %c0_6] : memref<1x24xf32, #tpu.memory_space<vmem>>, vector<1x24xf32>
    %21 = vector.shape_cast %20 : vector<1x24xf32> to vector<1x1x24xf32>
    %22 = vector.broadcast %21 : vector<1x1x24xf32> to vector<12x8x24xf32>
    %23 = arith.addf %19, %22 : vector<12x8x24xf32>
    %cst_7 = arith.constant 0.000000e+00 : f32
    %24 = vector.broadcast %cst_7 : f32 to vector<12x8x24xf32>
    %25 = arith.maximumf %23, %24 : vector<12x8x24xf32>
    %c0_8 = arith.constant 0 : index
    %c0_9 = arith.constant 0 : index
    %26 = vector.load %arg4[%c0_8, %c0_9] : memref<24x32xf32, #tpu.memory_space<vmem>>, vector<24x32xf32>
    %c0_10 = arith.constant 0 : index
    %c0_11 = arith.constant 0 : index
    %27 = vector.load %arg5[%c0_10, %c0_11] : memref<1x32xf32, #tpu.memory_space<vmem>>, vector<1x32xf32>
    %28 = vector.shape_cast %25 : vector<12x8x24xf32> to vector<96x24xf32>
    %cst_12 = arith.constant dense<0.000000e+00> : vector<96x32xf32>
    %29 = tpu.matmul %28, %26, %cst_12 {dimension_numbers = #tpu.dot_dimension_numbers<[1], [0], [0], [1], [0, 0, 1, 1], [], []>} : vector<96x24xf32>, vector<24x32xf32>, vector<96x32xf32> -> vector<96x32xf32>
    %30 = vector.shape_cast %29 : vector<96x32xf32> to vector<12x8x32xf32>
    %31 = vector.broadcast %11 : vector<12x8x1xf32> to vector<12x8x32xf32>
    %32 = arith.mulf %31, %30 : vector<12x8x32xf32>
    "tpu.trace_start"() <{level = 10 : i32, message = "tij,tjf->tif"}> : () -> ()
    %cst_13 = arith.constant dense<0.000000e+00> : vector<12x8x32xf32>
    %33 = tpu.matmul %8, %32, %cst_13 {dimension_numbers = #tpu.dot_dimension_numbers<[2], [1], [1], [2], [0, 0, 0, 1, 1, 2], [0], [0]>} : vector<12x8x8xf32>, vector<12x8x32xf32>, vector<12x8x32xf32> -> vector<12x8x32xf32>
    "tpu.trace_stop"() : () -> ()
    %34 = vector.broadcast %11 : vector<12x8x1xf32> to vector<12x8x32xf32>
    %35 = arith.mulf %34, %33 : vector<12x8x32xf32>
    %36 = vector.shape_cast %27 : vector<1x32xf32> to vector<1x1x32xf32>
    %37 = vector.broadcast %36 : vector<1x1x32xf32> to vector<12x8x32xf32>
    %38 = arith.addf %35, %37 : vector<12x8x32xf32>
    %c0_14 = arith.constant 0 : index
    %c0_15 = arith.constant 0 : index
    %39 = vector.load %arg6[%c0_14, %c0_15] : memref<1x32xf32, #tpu.memory_space<vmem>>, vector<1x32xf32>
    %c0_16 = arith.constant 0 : index
    %c0_17 = arith.constant 0 : index
    %40 = vector.load %arg7[%c0_16, %c0_17] : memref<7x32xf32, #tpu.memory_space<vmem>>, vector<1x32xf32>
    %41 = arith.addf %39, %40 : vector<1x32xf32>
    %42 = vector.shape_cast %41 : vector<1x32xf32> to vector<1x32xf32>
    %43 = vector.broadcast %42 : vector<1x32xf32> to vector<16x32xf32>
    %44 = vector.extract_strided_slice %38 {offsets = [0, 0, 0], sizes = [1, 8, 32], strides = [1, 1, 1]} : vector<12x8x32xf32> to vector<1x8x32xf32>
    %45 = vector.shape_cast %44 : vector<1x8x32xf32> to vector<8x32xf32>
    %46 = vector.extract_strided_slice %38 {offsets = [6, 0, 0], sizes = [1, 8, 32], strides = [1, 1, 1]} : vector<12x8x32xf32> to vector<1x8x32xf32>
    %47 = vector.shape_cast %46 : vector<1x8x32xf32> to vector<8x32xf32>
    %48 = tpu.concatenate %45, %47 in 0 : vector<8x32xf32>, vector<8x32xf32> -> vector<16x32xf32>
    %c1 = arith.constant 1 : index
    %c0_18 = arith.constant 0 : index
    %49 = vector.load %arg7[%c1, %c0_18] : memref<7x32xf32, #tpu.memory_space<vmem>>, vector<1x32xf32>
    %50 = vector.broadcast %49 : vector<1x32xf32> to vector<16x32xf32>
    %51 = arith.addf %48, %50 : vector<16x32xf32>
    %52 = vector.extract_strided_slice %38 {offsets = [1, 0, 0], sizes = [1, 8, 32], strides = [1, 1, 1]} : vector<12x8x32xf32> to vector<1x8x32xf32>
    %53 = vector.shape_cast %52 : vector<1x8x32xf32> to vector<8x32xf32>
    %54 = vector.extract_strided_slice %38 {offsets = [7, 0, 0], sizes = [1, 8, 32], strides = [1, 1, 1]} : vector<12x8x32xf32> to vector<1x8x32xf32>
    %55 = vector.shape_cast %54 : vector<1x8x32xf32> to vector<8x32xf32>
    %56 = tpu.concatenate %53, %55 in 0 : vector<8x32xf32>, vector<8x32xf32> -> vector<16x32xf32>
    %c2 = arith.constant 2 : index
    %c0_19 = arith.constant 0 : index
    %57 = vector.load %arg7[%c2, %c0_19] : memref<7x32xf32, #tpu.memory_space<vmem>>, vector<1x32xf32>
    %58 = vector.broadcast %57 : vector<1x32xf32> to vector<16x32xf32>
    %59 = arith.addf %56, %58 : vector<16x32xf32>
    %60 = vector.extract_strided_slice %38 {offsets = [2, 0, 0], sizes = [1, 8, 32], strides = [1, 1, 1]} : vector<12x8x32xf32> to vector<1x8x32xf32>
    %61 = vector.shape_cast %60 : vector<1x8x32xf32> to vector<8x32xf32>
    %62 = vector.extract_strided_slice %38 {offsets = [8, 0, 0], sizes = [1, 8, 32], strides = [1, 1, 1]} : vector<12x8x32xf32> to vector<1x8x32xf32>
    %63 = vector.shape_cast %62 : vector<1x8x32xf32> to vector<8x32xf32>
    %64 = tpu.concatenate %61, %63 in 0 : vector<8x32xf32>, vector<8x32xf32> -> vector<16x32xf32>
    %c3 = arith.constant 3 : index
    %c0_20 = arith.constant 0 : index
    %65 = vector.load %arg7[%c3, %c0_20] : memref<7x32xf32, #tpu.memory_space<vmem>>, vector<1x32xf32>
    %66 = vector.broadcast %65 : vector<1x32xf32> to vector<16x32xf32>
    %67 = arith.addf %64, %66 : vector<16x32xf32>
    %68 = vector.extract_strided_slice %38 {offsets = [3, 0, 0], sizes = [1, 8, 32], strides = [1, 1, 1]} : vector<12x8x32xf32> to vector<1x8x32xf32>
    %69 = vector.shape_cast %68 : vector<1x8x32xf32> to vector<8x32xf32>
    %70 = vector.extract_strided_slice %38 {offsets = [9, 0, 0], sizes = [1, 8, 32], strides = [1, 1, 1]} : vector<12x8x32xf32> to vector<1x8x32xf32>
    %71 = vector.shape_cast %70 : vector<1x8x32xf32> to vector<8x32xf32>
    %72 = tpu.concatenate %69, %71 in 0 : vector<8x32xf32>, vector<8x32xf32> -> vector<16x32xf32>
    %c4 = arith.constant 4 : index
    %c0_21 = arith.constant 0 : index
    %73 = vector.load %arg7[%c4, %c0_21] : memref<7x32xf32, #tpu.memory_space<vmem>>, vector<1x32xf32>
    %74 = vector.broadcast %73 : vector<1x32xf32> to vector<16x32xf32>
    %75 = arith.addf %72, %74 : vector<16x32xf32>
    %76 = vector.extract_strided_slice %38 {offsets = [4, 0, 0], sizes = [1, 8, 32], strides = [1, 1, 1]} : vector<12x8x32xf32> to vector<1x8x32xf32>
    %77 = vector.shape_cast %76 : vector<1x8x32xf32> to vector<8x32xf32>
    %78 = vector.extract_strided_slice %38 {offsets = [10, 0, 0], sizes = [1, 8, 32], strides = [1, 1, 1]} : vector<12x8x32xf32> to vector<1x8x32xf32>
    %79 = vector.shape_cast %78 : vector<1x8x32xf32> to vector<8x32xf32>
    %80 = tpu.concatenate %77, %79 in 0 : vector<8x32xf32>, vector<8x32xf32> -> vector<16x32xf32>
    %c5 = arith.constant 5 : index
    %c0_22 = arith.constant 0 : index
    %81 = vector.load %arg7[%c5, %c0_22] : memref<7x32xf32, #tpu.memory_space<vmem>>, vector<1x32xf32>
    %82 = vector.broadcast %81 : vector<1x32xf32> to vector<16x32xf32>
    %83 = arith.addf %80, %82 : vector<16x32xf32>
    %84 = vector.extract_strided_slice %38 {offsets = [5, 0, 0], sizes = [1, 8, 32], strides = [1, 1, 1]} : vector<12x8x32xf32> to vector<1x8x32xf32>
    %85 = vector.shape_cast %84 : vector<1x8x32xf32> to vector<8x32xf32>
    %86 = vector.extract_strided_slice %38 {offsets = [11, 0, 0], sizes = [1, 8, 32], strides = [1, 1, 1]} : vector<12x8x32xf32> to vector<1x8x32xf32>
    %87 = vector.shape_cast %86 : vector<1x8x32xf32> to vector<8x32xf32>
    %88 = tpu.concatenate %85, %87 in 0 : vector<8x32xf32>, vector<8x32xf32> -> vector<16x32xf32>
    %c6 = arith.constant 6 : index
    %c0_23 = arith.constant 0 : index
    %89 = vector.load %arg7[%c6, %c0_23] : memref<7x32xf32, #tpu.memory_space<vmem>>, vector<1x32xf32>
    %90 = vector.broadcast %89 : vector<1x32xf32> to vector<16x32xf32>
    %91 = arith.addf %88, %90 : vector<16x32xf32>
    %92 = tpu.concatenate %43, %51, %59, %67, %75, %83, %91 in 0 : vector<16x32xf32>, vector<16x32xf32>, vector<16x32xf32>, vector<16x32xf32>, vector<16x32xf32>, vector<16x32xf32>, vector<16x32xf32> -> vector<112x32xf32>
    %c0_24 = arith.constant 0 : index
    %c0_25 = arith.constant 0 : index
    %93 = vector.load %arg8[%c0_24, %c0_25] : memref<112x112xf32, #tpu.memory_space<vmem>>, vector<112x112xf32>
    %c0_26 = arith.constant 0 : index
    %c0_27 = arith.constant 0 : index
    %94 = vector.load %arg9[%c0_26, %c0_27] : memref<1x32xf32, #tpu.memory_space<vmem>>, vector<1x32xf32>
    %c0_28 = arith.constant 0 : index
    %c0_29 = arith.constant 0 : index
    %95 = vector.load %arg10[%c0_28, %c0_29] : memref<1x32xf32, #tpu.memory_space<vmem>>, vector<1x32xf32>
    %cst_30 = arith.constant dense<0.000000e+00> : vector<112xf32>
    %96 = vector.multi_reduction <add>, %92, %cst_30 [1] : vector<112x32xf32> to vector<112xf32>
    %97 = vector.shape_cast %96 : vector<112xf32> to vector<112x1xf32>
    %cst_31 = arith.constant 3.200000e+01 : f32
    %98 = vector.broadcast %cst_31 : f32 to vector<112x1xf32>
    %99 = arith.divf %97, %98 : vector<112x1xf32>
    %100 = vector.broadcast %99 : vector<112x1xf32> to vector<112x32xf32>
    %101 = arith.subf %92, %100 : vector<112x32xf32>
    %102 = arith.mulf %101, %101 : vector<112x32xf32>
    %cst_32 = arith.constant dense<0.000000e+00> : vector<112xf32>
    %103 = vector.multi_reduction <add>, %102, %cst_32 [1] : vector<112x32xf32> to vector<112xf32>
    %104 = vector.shape_cast %103 : vector<112xf32> to vector<112x1xf32>
    %cst_33 = arith.constant 3.200000e+01 : f32
    %105 = vector.broadcast %cst_33 : f32 to vector<112x1xf32>
    %106 = arith.divf %104, %105 : vector<112x1xf32>
    %107 = vector.broadcast %99 : vector<112x1xf32> to vector<112x32xf32>
    %108 = arith.subf %92, %107 : vector<112x32xf32>
    %cst_34 = arith.constant 9.99999974E-6 : f32
    %109 = vector.broadcast %cst_34 : f32 to vector<112x1xf32>
    %110 = arith.addf %106, %109 : vector<112x1xf32>
    %111 = math.rsqrt %110 : vector<112x1xf32>
    %112 = vector.broadcast %111 : vector<112x1xf32> to vector<112x32xf32>
    %113 = arith.mulf %108, %112 : vector<112x32xf32>
    %114 = vector.broadcast %94 : vector<1x32xf32> to vector<112x32xf32>
    %115 = arith.mulf %113, %114 : vector<112x32xf32>
    %116 = vector.broadcast %95 : vector<1x32xf32> to vector<112x32xf32>
    %117 = arith.addf %115, %116 : vector<112x32xf32>
    %c0_35 = arith.constant 0 : index
    %c0_36 = arith.constant 0 : index
    %118 = vector.load %arg11[%c0_35, %c0_36] : memref<32x96xf32, #tpu.memory_space<vmem>>, vector<32x96xf32>
    %cst_37 = arith.constant dense<0.000000e+00> : vector<112x96xf32>
    %119 = tpu.matmul %117, %118, %cst_37 {dimension_numbers = #tpu.dot_dimension_numbers<[1], [0], [0], [1], [0, 0, 1, 1], [], []>} : vector<112x32xf32>, vector<32x96xf32>, vector<112x96xf32> -> vector<112x96xf32>
    %c0_38 = arith.constant 0 : index
    %c0_39 = arith.constant 0 : index
    %120 = vector.load %arg12[%c0_38, %c0_39] : memref<1x96xf32, #tpu.memory_space<vmem>>, vector<1x96xf32>
    %121 = vector.broadcast %120 : vector<1x96xf32> to vector<112x96xf32>
    %122 = arith.addf %119, %121 : vector<112x96xf32>
    %123 = vector.extract_strided_slice %122 {offsets = [0, 0], sizes = [112, 16], strides = [1, 1]} : vector<112x96xf32> to vector<112x16xf32>
    %124 = vector.extract_strided_slice %122 {offsets = [0, 32], sizes = [112, 16], strides = [1, 1]} : vector<112x96xf32> to vector<112x16xf32>
    %125 = vector.extract_strided_slice %122 {offsets = [0, 64], sizes = [112, 16], strides = [1, 1]} : vector<112x96xf32> to vector<112x16xf32>
    %cst_40 = arith.constant dense<0.000000e+00> : vector<112x112xf32>
    %126 = tpu.matmul %123, %124, %cst_40 {dimension_numbers = #tpu.dot_dimension_numbers<[1], [1], [0], [0], [0, 0, 1, 0], [], []>} : vector<112x16xf32>, vector<112x16xf32>, vector<112x112xf32> -> vector<112x112xf32>
    %cst_41 = arith.constant 2.500000e-01 : f32
    %127 = vector.broadcast %cst_41 : f32 to vector<112x112xf32>
    %128 = arith.mulf %126, %127 : vector<112x112xf32>
    %129 = arith.addf %128, %93 : vector<112x112xf32>
    %cst_42 = arith.constant dense<0xFF800000> : vector<112xf32>
    %130 = vector.multi_reduction <maximumf>, %129, %cst_42 [1] : vector<112x112xf32> to vector<112xf32>
    %131 = vector.shape_cast %130 : vector<112xf32> to vector<112x1xf32>
    %132 = vector.broadcast %131 : vector<112x1xf32> to vector<112x112xf32>
    %133 = arith.subf %129, %132 : vector<112x112xf32>
    %134 = math.exp %133 : vector<112x112xf32>
    %cst_43 = arith.constant dense<0.000000e+00> : vector<112xf32>
    %135 = vector.multi_reduction <add>, %134, %cst_43 [1] : vector<112x112xf32> to vector<112xf32>
    %136 = vector.shape_cast %135 : vector<112xf32> to vector<112x1xf32>
    %137 = tpu.reciprocal %136 {approx = true} : vector<112x1xf32> -> vector<112x1xf32>
    %138 = vector.broadcast %137 : vector<112x1xf32> to vector<112x112xf32>
    %139 = arith.mulf %134, %138 : vector<112x112xf32>
    %cst_44 = arith.constant dense<0.000000e+00> : vector<112x16xf32>
    %140 = tpu.matmul %139, %125, %cst_44 {dimension_numbers = #tpu.dot_dimension_numbers<[1], [0], [0], [1], [0, 0, 1, 1], [], []>} : vector<112x112xf32>, vector<112x16xf32>, vector<112x16xf32> -> vector<112x16xf32>
    %141 = vector.extract_strided_slice %122 {offsets = [0, 16], sizes = [112, 16], strides = [1, 1]} : vector<112x96xf32> to vector<112x16xf32>
    %142 = vector.extract_strided_slice %122 {offsets = [0, 48], sizes = [112, 16], strides = [1, 1]} : vector<112x96xf32> to vector<112x16xf32>
    %143 = vector.extract_strided_slice %122 {offsets = [0, 80], sizes = [112, 16], strides = [1, 1]} : vector<112x96xf32> to vector<112x16xf32>
    %cst_45 = arith.constant dense<0.000000e+00> : vector<112x112xf32>
    %144 = tpu.matmul %141, %142, %cst_45 {dimension_numbers = #tpu.dot_dimension_numbers<[1], [1], [0], [0], [0, 0, 1, 0], [], []>} : vector<112x16xf32>, vector<112x16xf32>, vector<112x112xf32> -> vector<112x112xf32>
    %cst_46 = arith.constant 2.500000e-01 : f32
    %145 = vector.broadcast %cst_46 : f32 to vector<112x112xf32>
    %146 = arith.mulf %144, %145 : vector<112x112xf32>
    %147 = arith.addf %146, %93 : vector<112x112xf32>
    %cst_47 = arith.constant dense<0xFF800000> : vector<112xf32>
    %148 = vector.multi_reduction <maximumf>, %147, %cst_47 [1] : vector<112x112xf32> to vector<112xf32>
    %149 = vector.shape_cast %148 : vector<112xf32> to vector<112x1xf32>
    %150 = vector.broadcast %149 : vector<112x1xf32> to vector<112x112xf32>
    %151 = arith.subf %147, %150 : vector<112x112xf32>
    %152 = math.exp %151 : vector<112x112xf32>
    %cst_48 = arith.constant dense<0.000000e+00> : vector<112xf32>
    %153 = vector.multi_reduction <add>, %152, %cst_48 [1] : vector<112x112xf32> to vector<112xf32>
    %154 = vector.shape_cast %153 : vector<112xf32> to vector<112x1xf32>
    %155 = tpu.reciprocal %154 {approx = true} : vector<112x1xf32> -> vector<112x1xf32>
    %156 = vector.broadcast %155 : vector<112x1xf32> to vector<112x112xf32>
    %157 = arith.mulf %152, %156 : vector<112x112xf32>
    %cst_49 = arith.constant dense<0.000000e+00> : vector<112x16xf32>
    %158 = tpu.matmul %157, %143, %cst_49 {dimension_numbers = #tpu.dot_dimension_numbers<[1], [0], [0], [1], [0, 0, 1, 1], [], []>} : vector<112x112xf32>, vector<112x16xf32>, vector<112x16xf32> -> vector<112x16xf32>
    %159 = tpu.concatenate %140, %158 in 1 : vector<112x16xf32>, vector<112x16xf32> -> vector<112x32xf32>
    %c0_50 = arith.constant 0 : index
    %c0_51 = arith.constant 0 : index
    %160 = vector.load %arg13[%c0_50, %c0_51] : memref<32x32xf32, #tpu.memory_space<vmem>>, vector<32x32xf32>
    %cst_52 = arith.constant dense<0.000000e+00> : vector<112x32xf32>
    %161 = tpu.matmul %159, %160, %cst_52 {dimension_numbers = #tpu.dot_dimension_numbers<[1], [0], [0], [1], [0, 0, 1, 1], [], []>} : vector<112x32xf32>, vector<32x32xf32>, vector<112x32xf32> -> vector<112x32xf32>
    %c0_53 = arith.constant 0 : index
    %c0_54 = arith.constant 0 : index
    %162 = vector.load %arg14[%c0_53, %c0_54] : memref<1x32xf32, #tpu.memory_space<vmem>>, vector<1x32xf32>
    %163 = vector.broadcast %162 : vector<1x32xf32> to vector<112x32xf32>
    %164 = arith.addf %161, %163 : vector<112x32xf32>
    %165 = arith.addf %92, %164 : vector<112x32xf32>
    %c0_55 = arith.constant 0 : index
    %c0_56 = arith.constant 0 : index
    %166 = vector.load %arg15[%c0_55, %c0_56] : memref<1x32xf32, #tpu.memory_space<vmem>>, vector<1x32xf32>
    %c0_57 = arith.constant 0 : index
    %c0_58 = arith.constant 0 : index
    %167 = vector.load %arg16[%c0_57, %c0_58] : memref<1x32xf32, #tpu.memory_space<vmem>>, vector<1x32xf32>
    %cst_59 = arith.constant dense<0.000000e+00> : vector<112xf32>
    %168 = vector.multi_reduction <add>, %165, %cst_59 [1] : vector<112x32xf32> to vector<112xf32>
    %169 = vector.shape_cast %168 : vector<112xf32> to vector<112x1xf32>
    %cst_60 = arith.constant 3.200000e+01 : f32
    %170 = vector.broadcast %cst_60 : f32 to vector<112x1xf32>
    %171 = arith.divf %169, %170 : vector<112x1xf32>
    %172 = vector.broadcast %171 : vector<112x1xf32> to vector<112x32xf32>
    %173 = arith.subf %165, %172 : vector<112x32xf32>
    %174 = arith.mulf %173, %173 : vector<112x32xf32>
    %cst_61 = arith.constant dense<0.000000e+00> : vector<112xf32>
    %175 = vector.multi_reduction <add>, %174, %cst_61 [1] : vector<112x32xf32> to vector<112xf32>
    %176 = vector.shape_cast %175 : vector<112xf32> to vector<112x1xf32>
    %cst_62 = arith.constant 3.200000e+01 : f32
    %177 = vector.broadcast %cst_62 : f32 to vector<112x1xf32>
    %178 = arith.divf %176, %177 : vector<112x1xf32>
    %179 = vector.broadcast %171 : vector<112x1xf32> to vector<112x32xf32>
    %180 = arith.subf %165, %179 : vector<112x32xf32>
    %cst_63 = arith.constant 9.99999974E-6 : f32
    %181 = vector.broadcast %cst_63 : f32 to vector<112x1xf32>
    %182 = arith.addf %178, %181 : vector<112x1xf32>
    %183 = math.rsqrt %182 : vector<112x1xf32>
    %184 = vector.broadcast %183 : vector<112x1xf32> to vector<112x32xf32>
    %185 = arith.mulf %180, %184 : vector<112x32xf32>
    %186 = vector.broadcast %166 : vector<1x32xf32> to vector<112x32xf32>
    %187 = arith.mulf %185, %186 : vector<112x32xf32>
    %188 = vector.broadcast %167 : vector<1x32xf32> to vector<112x32xf32>
    %189 = arith.addf %187, %188 : vector<112x32xf32>
    %c0_64 = arith.constant 0 : index
    %c0_65 = arith.constant 0 : index
    %190 = vector.load %arg17[%c0_64, %c0_65] : memref<32x64xf32, #tpu.memory_space<vmem>>, vector<32x64xf32>
    %cst_66 = arith.constant dense<0.000000e+00> : vector<112x64xf32>
    %191 = tpu.matmul %189, %190, %cst_66 {dimension_numbers = #tpu.dot_dimension_numbers<[1], [0], [0], [1], [0, 0, 1, 1], [], []>} : vector<112x32xf32>, vector<32x64xf32>, vector<112x64xf32> -> vector<112x64xf32>
    %c0_67 = arith.constant 0 : index
    %c0_68 = arith.constant 0 : index
    %192 = vector.load %arg18[%c0_67, %c0_68] : memref<1x64xf32, #tpu.memory_space<vmem>>, vector<1x64xf32>
    %193 = vector.broadcast %192 : vector<1x64xf32> to vector<112x64xf32>
    %194 = arith.addf %191, %193 : vector<112x64xf32>
    %cst_69 = arith.constant 5.000000e-01 : f32
    %195 = vector.broadcast %cst_69 : f32 to vector<112x64xf32>
    %196 = arith.mulf %195, %194 : vector<112x64xf32>
    %cst_70 = arith.constant 4.471500e-02 : f32
    %197 = vector.broadcast %cst_70 : f32 to vector<112x64xf32>
    %198 = arith.mulf %197, %194 : vector<112x64xf32>
    %199 = arith.mulf %198, %194 : vector<112x64xf32>
    %200 = arith.mulf %199, %194 : vector<112x64xf32>
    %201 = arith.addf %194, %200 : vector<112x64xf32>
    %cst_71 = arith.constant 0.797884583 : f32
    %202 = vector.broadcast %cst_71 : f32 to vector<112x64xf32>
    %203 = arith.mulf %202, %201 : vector<112x64xf32>
    %204 = math.tanh %203 : vector<112x64xf32>
    %cst_72 = arith.constant 1.000000e+00 : f32
    %205 = vector.broadcast %cst_72 : f32 to vector<112x64xf32>
    %206 = arith.addf %205, %204 : vector<112x64xf32>
    %207 = arith.mulf %196, %206 : vector<112x64xf32>
    %c0_73 = arith.constant 0 : index
    %c0_74 = arith.constant 0 : index
    %208 = vector.load %arg19[%c0_73, %c0_74] : memref<64x32xf32, #tpu.memory_space<vmem>>, vector<64x32xf32>
    %cst_75 = arith.constant dense<0.000000e+00> : vector<112x32xf32>
    %209 = tpu.matmul %207, %208, %cst_75 {dimension_numbers = #tpu.dot_dimension_numbers<[1], [0], [0], [1], [0, 0, 1, 1], [], []>} : vector<112x64xf32>, vector<64x32xf32>, vector<112x32xf32> -> vector<112x32xf32>
    %c0_76 = arith.constant 0 : index
    %c0_77 = arith.constant 0 : index
    %210 = vector.load %arg20[%c0_76, %c0_77] : memref<1x32xf32, #tpu.memory_space<vmem>>, vector<1x32xf32>
    %211 = vector.broadcast %210 : vector<1x32xf32> to vector<112x32xf32>
    %212 = arith.addf %209, %211 : vector<112x32xf32>
    %213 = arith.addf %165, %212 : vector<112x32xf32>
    %214 = vector.extract_strided_slice %213 {offsets = [0, 0], sizes = [16, 32], strides = [1, 1]} : vector<112x32xf32> to vector<16x32xf32>
    %c0_78 = arith.constant 0 : index
    %c0_79 = arith.constant 0 : index
    %215 = vector.load %arg22[%c0_78, %c0_79] : memref<32x32xf32, #tpu.memory_space<vmem>>, vector<32x32xf32>
    %cst_80 = arith.constant dense<0.000000e+00> : vector<16x32xf32>
    %216 = tpu.matmul %214, %215, %cst_80 {dimension_numbers = #tpu.dot_dimension_numbers<[1], [0], [0], [1], [0, 0, 1, 1], [], []>} : vector<16x32xf32>, vector<32x32xf32>, vector<16x32xf32> -> vector<16x32xf32>
    %c0_81 = arith.constant 0 : index
    %c0_82 = arith.constant 0 : index
    %217 = vector.load %arg23[%c0_81, %c0_82] : memref<1x32xf32, #tpu.memory_space<vmem>>, vector<1x32xf32>
    %218 = vector.broadcast %217 : vector<1x32xf32> to vector<16x32xf32>
    %219 = arith.addf %216, %218 : vector<16x32xf32>
    %c0_83 = arith.constant 0 : index
    %c0_84 = arith.constant 0 : index
    %220 = vector.load %arg24[%c0_83, %c0_84] : memref<32x32xf32, #tpu.memory_space<vmem>>, vector<32x32xf32>
    %cst_85 = arith.constant dense<0.000000e+00> : vector<16x32xf32>
    %221 = tpu.matmul %214, %220, %cst_85 {dimension_numbers = #tpu.dot_dimension_numbers<[1], [0], [0], [1], [0, 0, 1, 1], [], []>} : vector<16x32xf32>, vector<32x32xf32>, vector<16x32xf32> -> vector<16x32xf32>
    %c0_86 = arith.constant 0 : index
    %c0_87 = arith.constant 0 : index
    %222 = vector.load %arg25[%c0_86, %c0_87] : memref<1x32xf32, #tpu.memory_space<vmem>>, vector<1x32xf32>
    %223 = vector.broadcast %222 : vector<1x32xf32> to vector<16x32xf32>
    %224 = arith.addf %221, %223 : vector<16x32xf32>
    %cst_88 = arith.constant 0.000000e+00 : f32
    %225 = vector.broadcast %cst_88 : f32 to vector<16x32xf32>
    %226 = arith.maximumf %224, %225 : vector<16x32xf32>
    %227 = math.absf %224 : vector<16x32xf32>
    %cst_89 = arith.constant 0.000000e+00 : f32
    %228 = vector.broadcast %cst_89 : f32 to vector<16x32xf32>
    %229 = arith.subf %228, %227 : vector<16x32xf32>
    %230 = math.exp %229 : vector<16x32xf32>
    %cst_90 = arith.constant 1.000000e+00 : f32
    %231 = vector.broadcast %cst_90 : f32 to vector<16x32xf32>
    %232 = arith.addf %231, %230 : vector<16x32xf32>
    %233 = math.log %232 : vector<16x32xf32>
    %234 = arith.addf %226, %233 : vector<16x32xf32>
    %cst_91 = arith.constant 9.99999997E-7 : f32
    %235 = vector.broadcast %cst_91 : f32 to vector<16x32xf32>
    %236 = arith.addf %234, %235 : vector<16x32xf32>
    %c0_92 = arith.constant 0 : index
    %c0_93 = arith.constant 0 : index
    %237 = vector.load %arg21[%c0_92, %c0_93] : memref<16x32xf32, #tpu.memory_space<vmem>>, vector<16x32xf32>
    %238 = arith.mulf %236, %237 : vector<16x32xf32>
    %239 = arith.addf %219, %238 : vector<16x32xf32>
    %240 = vector.extract_strided_slice %219 {offsets = [0, 0], sizes = [8, 32], strides = [1, 1]} : vector<16x32xf32> to vector<8x32xf32>
    %241 = vector.extract_strided_slice %219 {offsets = [8, 0], sizes = [8, 32], strides = [1, 1]} : vector<16x32xf32> to vector<8x32xf32>
    %242 = vector.extract_strided_slice %236 {offsets = [0, 0], sizes = [8, 32], strides = [1, 1]} : vector<16x32xf32> to vector<8x32xf32>
    %243 = vector.extract_strided_slice %236 {offsets = [8, 0], sizes = [8, 32], strides = [1, 1]} : vector<16x32xf32> to vector<8x32xf32>
    %244 = vector.extract_strided_slice %239 {offsets = [0, 0], sizes = [8, 32], strides = [1, 1]} : vector<16x32xf32> to vector<8x32xf32>
    %245 = vector.extract_strided_slice %239 {offsets = [8, 0], sizes = [8, 32], strides = [1, 1]} : vector<16x32xf32> to vector<8x32xf32>
    %246 = arith.subf %244, %240 : vector<8x32xf32>
    %247 = arith.mulf %246, %246 : vector<8x32xf32>
    %cst_94 = arith.constant 0.000000e+00 : f32
    %248 = vector.broadcast %cst_94 : f32 to vector<8x32xf32>
    %249 = arith.subf %248, %247 : vector<8x32xf32>
    %cst_95 = arith.constant 2.000000e+00 : f32
    %250 = vector.broadcast %cst_95 : f32 to vector<8x32xf32>
    %251 = arith.mulf %250, %242 : vector<8x32xf32>
    %252 = arith.mulf %251, %242 : vector<8x32xf32>
    %253 = arith.divf %249, %252 : vector<8x32xf32>
    %254 = math.log %242 : vector<8x32xf32>
    %255 = arith.subf %253, %254 : vector<8x32xf32>
    %cst_96 = arith.constant 0.918938517 : f32
    %256 = vector.broadcast %cst_96 : f32 to vector<8x32xf32>
    %257 = arith.subf %255, %256 : vector<8x32xf32>
    %258 = arith.subf %244, %241 : vector<8x32xf32>
    %259 = arith.mulf %258, %258 : vector<8x32xf32>
    %cst_97 = arith.constant 0.000000e+00 : f32
    %260 = vector.broadcast %cst_97 : f32 to vector<8x32xf32>
    %261 = arith.subf %260, %259 : vector<8x32xf32>
    %cst_98 = arith.constant 2.000000e+00 : f32
    %262 = vector.broadcast %cst_98 : f32 to vector<8x32xf32>
    %263 = arith.mulf %262, %243 : vector<8x32xf32>
    %264 = arith.mulf %263, %243 : vector<8x32xf32>
    %265 = arith.divf %261, %264 : vector<8x32xf32>
    %266 = math.log %243 : vector<8x32xf32>
    %267 = arith.subf %265, %266 : vector<8x32xf32>
    %cst_99 = arith.constant 0.918938517 : f32
    %268 = vector.broadcast %cst_99 : f32 to vector<8x32xf32>
    %269 = arith.subf %267, %268 : vector<8x32xf32>
    %270 = arith.subf %257, %269 : vector<8x32xf32>
    %271 = arith.subf %245, %241 : vector<8x32xf32>
    %272 = arith.mulf %271, %271 : vector<8x32xf32>
    %cst_100 = arith.constant 0.000000e+00 : f32
    %273 = vector.broadcast %cst_100 : f32 to vector<8x32xf32>
    %274 = arith.subf %273, %272 : vector<8x32xf32>
    %cst_101 = arith.constant 2.000000e+00 : f32
    %275 = vector.broadcast %cst_101 : f32 to vector<8x32xf32>
    %276 = arith.mulf %275, %243 : vector<8x32xf32>
    %277 = arith.mulf %276, %243 : vector<8x32xf32>
    %278 = arith.divf %274, %277 : vector<8x32xf32>
    %279 = math.log %243 : vector<8x32xf32>
    %280 = arith.subf %278, %279 : vector<8x32xf32>
    %cst_102 = arith.constant 0.918938517 : f32
    %281 = vector.broadcast %cst_102 : f32 to vector<8x32xf32>
    %282 = arith.subf %280, %281 : vector<8x32xf32>
    %283 = arith.subf %245, %240 : vector<8x32xf32>
    %284 = arith.mulf %283, %283 : vector<8x32xf32>
    %cst_103 = arith.constant 0.000000e+00 : f32
    %285 = vector.broadcast %cst_103 : f32 to vector<8x32xf32>
    %286 = arith.subf %285, %284 : vector<8x32xf32>
    %cst_104 = arith.constant 2.000000e+00 : f32
    %287 = vector.broadcast %cst_104 : f32 to vector<8x32xf32>
    %288 = arith.mulf %287, %242 : vector<8x32xf32>
    %289 = arith.mulf %288, %242 : vector<8x32xf32>
    %290 = arith.divf %286, %289 : vector<8x32xf32>
    %291 = math.log %242 : vector<8x32xf32>
    %292 = arith.subf %290, %291 : vector<8x32xf32>
    %cst_105 = arith.constant 0.918938517 : f32
    %293 = vector.broadcast %cst_105 : f32 to vector<8x32xf32>
    %294 = arith.subf %292, %293 : vector<8x32xf32>
    %295 = arith.subf %282, %294 : vector<8x32xf32>
    %296 = tpu.concatenate %244, %245, %270, %295 in 1 : vector<8x32xf32>, vector<8x32xf32>, vector<8x32xf32>, vector<8x32xf32> -> vector<8x128xf32>
    %c0_106 = arith.constant 0 : index
    %c0_107 = arith.constant 0 : index
    %297 = vector.load %arg26[%c0_106, %c0_107] : memref<8x128xf32, #tpu.memory_space<vmem>>, vector<8x128xf32>
    tpu.vector_store %arg26[%c0_106, %c0_107], %296 {strides = array<i32>} : memref<8x128xf32, #tpu.memory_space<vmem>>, vector<8x128xf32>,
    return
  }
  func.func @transform_0(%arg0: i32) -> (i32, i32, i32) {
    %c0_i32 = arith.constant 0 : i32
    %c0_i32_0 = arith.constant 0 : i32
    %c0_i32_1 = arith.constant 0 : i32
    %c0_i32_2 = arith.constant 0 : i32
    return %c0_i32, %c0_i32_0, %c0_i32_1 : i32, i32, i32
  }
  func.func @transform_1(%arg0: i32) -> (i32, i32) {
    %c0_i32 = arith.constant 0 : i32
    %c0_i32_0 = arith.constant 0 : i32
    %c0_i32_1 = arith.constant 0 : i32
    return %c0_i32, %c0_i32_0 : i32, i32
  }
  func.func @transform_2(%arg0: i32) -> (i32, i32) {
    %c0_i32 = arith.constant 0 : i32
    %c0_i32_0 = arith.constant 0 : i32
    %c0_i32_1 = arith.constant 0 : i32
    return %c0_i32, %c0_i32_0 : i32, i32
  }
  func.func @transform_3(%arg0: i32) -> (i32, i32) {
    %c0_i32 = arith.constant 0 : i32
    %c0_i32_0 = arith.constant 0 : i32
    %c0_i32_1 = arith.constant 0 : i32
    return %c0_i32, %c0_i32_0 : i32, i32
  }
  func.func @transform_4(%arg0: i32) -> (i32, i32) {
    %c0_i32 = arith.constant 0 : i32
    %c0_i32_0 = arith.constant 0 : i32
    %c0_i32_1 = arith.constant 0 : i32
    return %c0_i32, %c0_i32_0 : i32, i32
  }
  func.func @transform_5(%arg0: i32) -> (i32, i32) {
    %c0_i32 = arith.constant 0 : i32
    %c0_i32_0 = arith.constant 0 : i32
    %c0_i32_1 = arith.constant 0 : i32
    return %c0_i32, %c0_i32_0 : i32, i32
  }
  func.func @transform_6(%arg0: i32) -> (i32, i32) {
    %c0_i32 = arith.constant 0 : i32
    %c0_i32_0 = arith.constant 0 : i32
    %c0_i32_1 = arith.constant 0 : i32
    return %c0_i32, %c0_i32_0 : i32, i32
  }
  func.func @transform_7(%arg0: i32) -> (i32, i32) {
    %c0_i32 = arith.constant 0 : i32
    %c0_i32_0 = arith.constant 0 : i32
    %c0_i32_1 = arith.constant 0 : i32
    return %c0_i32, %c0_i32_0 : i32, i32
  }
  func.func @transform_8(%arg0: i32) -> (i32, i32) {
    %c0_i32 = arith.constant 0 : i32
    %c0_i32_0 = arith.constant 0 : i32
    %c0_i32_1 = arith.constant 0 : i32
    return %c0_i32, %c0_i32_0 : i32, i32
  }
  func.func @transform_9(%arg0: i32) -> (i32, i32) {
    %c0_i32 = arith.constant 0 : i32
    %c0_i32_0 = arith.constant 0 : i32
    %c0_i32_1 = arith.constant 0 : i32
    return %c0_i32, %c0_i32_0 : i32, i32
  }
  func.func @transform_10(%arg0: i32) -> (i32, i32) {
    %c0_i32 = arith.constant 0 : i32
    %c0_i32_0 = arith.constant 0 : i32
    %c0_i32_1 = arith.constant 0 : i32
    return %c0_i32, %c0_i32_0 : i32, i32
  }
  func.func @transform_11(%arg0: i32) -> (i32, i32) {
    %c0_i32 = arith.constant 0 : i32
    %c0_i32_0 = arith.constant 0 : i32
    %c0_i32_1 = arith.constant 0 : i32
    return %c0_i32, %c0_i32_0 : i32, i32
  }
  func.func @transform_12(%arg0: i32) -> (i32, i32) {
    %c0_i32 = arith.constant 0 : i32
    %c0_i32_0 = arith.constant 0 : i32
    %c0_i32_1 = arith.constant 0 : i32
    return %c0_i32, %c0_i32_0 : i32, i32
  }
  func.func @transform_13(%arg0: i32) -> (i32, i32) {
    %c0_i32 = arith.constant 0 : i32
    %c0_i32_0 = arith.constant 0 : i32
    %c0_i32_1 = arith.constant 0 : i32
    return %c0_i32, %c0_i32_0 : i32, i32
  }
  func.func @transform_14(%arg0: i32) -> (i32, i32) {
    %c0_i32 = arith.constant 0 : i32
    %c0_i32_0 = arith.constant 0 : i32
    %c0_i32_1 = arith.constant 0 : i32
    return %c0_i32, %c0_i32_0 : i32, i32
  }
  func.func @transform_15(%arg0: i32) -> (i32, i32) {
    %c0_i32 = arith.constant 0 : i32
    %c0_i32_0 = arith.constant 0 : i32
    %c0_i32_1 = arith.constant 0 : i32
    return %c0_i32, %c0_i32_0 : i32, i32
  }
  func.func @transform_16(%arg0: i32) -> (i32, i32) {
    %c0_i32 = arith.constant 0 : i32
    %c0_i32_0 = arith.constant 0 : i32
    %c0_i32_1 = arith.constant 0 : i32
    return %c0_i32, %c0_i32_0 : i32, i32
  }
  func.func @transform_17(%arg0: i32) -> (i32, i32) {
    %c0_i32 = arith.constant 0 : i32
    %c0_i32_0 = arith.constant 0 : i32
    %c0_i32_1 = arith.constant 0 : i32
    return %c0_i32, %c0_i32_0 : i32, i32
  }
  func.func @transform_18(%arg0: i32) -> (i32, i32) {
    %c0_i32 = arith.constant 0 : i32
    %c0_i32_0 = arith.constant 0 : i32
    %c0_i32_1 = arith.constant 0 : i32
    return %c0_i32, %c0_i32_0 : i32, i32
  }
  func.func @transform_19(%arg0: i32) -> (i32, i32) {
    %c0_i32 = arith.constant 0 : i32
    %c0_i32_0 = arith.constant 0 : i32
    %c0_i32_1 = arith.constant 0 : i32
    return %c0_i32, %c0_i32_0 : i32, i32
  }
  func.func @transform_20(%arg0: i32) -> (i32, i32) {
    %c0_i32 = arith.constant 0 : i32
    %c0_i32_0 = arith.constant 0 : i32
    %c0_i32_1 = arith.constant 0 : i32
    return %c0_i32, %c0_i32_0 : i32, i32
  }
  func.func @transform_21(%arg0: i32) -> (i32, i32) {
    %c0_i32 = arith.constant 0 : i32
    %c0_i32_0 = arith.constant 0 : i32
    %c0_i32_1 = arith.constant 0 : i32
    return %c0_i32, %c0_i32_0 : i32, i32
  }
  func.func @transform_22(%arg0: i32) -> (i32, i32) {
    %c0_i32 = arith.constant 0 : i32
    %c0_i32_0 = arith.constant 0 : i32
    %c0_i32_1 = arith.constant 0 : i32
    return %c0_i32, %c0_i32_0 : i32, i32
  }
  func.func @transform_23(%arg0: i32) -> (i32, i32) {
    %c0_i32 = arith.constant 0 : i32
    %c0_i32_0 = arith.constant 0 : i32
    %c0_i32_1 = arith.constant 0 : i32
    return %c0_i32, %c0_i32_0 : i32, i32
  }
  func.func @transform_24(%arg0: i32) -> (i32, i32) {
    %c0_i32 = arith.constant 0 : i32
    %c0_i32_0 = arith.constant 0 : i32
    %c0_i32_1 = arith.constant 0 : i32
    return %c0_i32, %c0_i32_0 : i32, i32
  }
  func.func @transform_25(%arg0: i32) -> (i32, i32) {
    %c0_i32 = arith.constant 0 : i32
    %c0_i32_0 = arith.constant 0 : i32
    %c0_i32_1 = arith.constant 0 : i32
    return %c0_i32, %c0_i32_0 : i32, i32
  }
}

</mosaic_0001>

<llo_original>
// kernel: mib_forward.3
$region0: #{mib_forward.3}
  #allocation0 [shape = 'u32[]', space=smem, size = 0x4, offset = 0x4, fixed_abs, tag = 'smem constant byte address 0x4 - core index']
  #allocation1 [shape = 'u32[144,128]{1,0:T(1,128)}', space=vmem, size = 0x12000, scoped, tag = 'internal scratch']
  %s0 = inlined_call_operand.vmem [shape: f32[12,8,8], index: 0, kind: input, shape index: {}]
  %s1 = inlined_call_operand.vmem [shape: f32[8,24], index: 1, kind: input, shape index: {}]
  %s2 = inlined_call_operand.vmem [shape: f32[1,24], index: 2, kind: input, shape index: {}]
  %s3 = inlined_call_operand.vmem [shape: f32[24,32], index: 3, kind: input, shape index: {}]
  %s4 = inlined_call_operand.vmem [shape: f32[1,32], index: 4, kind: input, shape index: {}]
  %s5 = inlined_call_operand.vmem [shape: f32[1,32], index: 5, kind: input, shape index: {}]
  %s6 = inlined_call_operand.vmem [shape: f32[7,32], index: 6, kind: input, shape index: {}]
  %s7 = inlined_call_operand.vmem [shape: f32[112,112], index: 7, kind: input, shape index: {}]
  %s8 = inlined_call_operand.vmem [shape: f32[1,32], index: 8, kind: input, shape index: {}]
  %s9 = inlined_call_operand.vmem [shape: f32[1,32], index: 9, kind: input, shape index: {}]
  %s10 = inlined_call_operand.vmem [shape: f32[32,96], index: 10, kind: input, shape index: {}]
  %s11 = inlined_call_operand.vmem [shape: f32[1,96], index: 11, kind: input, shape index: {}]
  %s12 = inlined_call_operand.vmem [shape: f32[32,32], index: 12, kind: input, shape index: {}]
  %s13 = inlined_call_operand.vmem [shape: f32[1,32], index: 13, kind: input, shape index: {}]
  %s14 = inlined_call_operand.vmem [shape: f32[1,32], index: 14, kind: input, shape index: {}]
  %s15 = inlined_call_operand.vmem [shape: f32[1,32], index: 15, kind: input, shape index: {}]
  %s16 = inlined_call_operand.vmem [shape: f32[32,64], index: 16, kind: input, shape index: {}]
  %s17 = inlined_call_operand.vmem [shape: f32[1,64], index: 17, kind: input, shape index: {}]
  %s18 = inlined_call_operand.vmem [shape: f32[64,32], index: 18, kind: input, shape index: {}]
  %s19 = inlined_call_operand.vmem [shape: f32[1,32], index: 19, kind: input, shape index: {}]
  %s20 = inlined_call_operand.vmem [shape: f32[16,32], index: 20, kind: input, shape index: {}]
  %s21 = inlined_call_operand.vmem [shape: f32[32,32], index: 21, kind: input, shape index: {}]
  %s22 = inlined_call_operand.vmem [shape: f32[1,32], index: 22, kind: input, shape index: {}]
  %s23 = inlined_call_operand.vmem [shape: f32[32,32], index: 23, kind: input, shape index: {}]
  %s24 = inlined_call_operand.vmem [shape: f32[1,32], index: 24, kind: input, shape index: {}]
  %s25 = inlined_call_operand.vmem [shape: f32[8,128], index: 25, kind: output, shape index: {}]
  %s26 = sld [smem:[#allocation0]]
  $region110: #{mib_forward.3} parent=0
    _
  %s28 = ssub.s32 1, %s26
  %s29 = scalar_select 0, %s28, %s26
  // Predicated region
  $region2: #{mib_forward.3} parent=0 // pred_check
    _
  $region3: #{mib_forward.3} parent=0 // pred_check_branch
    %31 = sbr.rel (0) target = $region5
  $region4: #{mib_forward.3} parent=0 // pred_region
    _
  $region5: #{mib_forward.3} parent=0 // pred_fallthru
    _
  // Predicated region
  $region6: #{mib_forward.3} parent=0 // pred_check
    _
  $region7: #{mib_forward.3} parent=0 // pred_check_branch
    %33 = sbr.rel (0) target = $region9
  $region8: #{mib_forward.3} parent=0 // pred_region
    _
  $region9: #{mib_forward.3} parent=0 // pred_fallthru
    _
  // Predicated region
  $region10: #{mib_forward.3} parent=0 // pred_check
    _
  $region11: #{mib_forward.3} parent=0 // pred_check_branch
    %35 = sbr.rel (0) target = $region13
  $region12: #{mib_forward.3} parent=0 // pred_region
    _
  $region13: #{mib_forward.3} parent=0 // pred_fallthru
    _
  // Predicated region
  $region14: #{mib_forward.3} parent=0 // pred_check
    _
  $region15: #{mib_forward.3} parent=0 // pred_check_branch
    %37 = sbr.rel (0) target = $region17
  $region16: #{mib_forward.3} parent=0 // pred_region
    _
  $region17: #{mib_forward.3} parent=0 // pred_fallthru
    _
  // Predicated region
  $region18: #{mib_forward.3} parent=0 // pred_check
    _
  $region19: #{mib_forward.3} parent=0 // pred_check_branch
    %39 = sbr.rel (0) target = $region21
  $region20: #{mib_forward.3} parent=0 // pred_region
    _
  $region21: #{mib_forward.3} parent=0 // pred_fallthru
    _
  // Predicated region
  $region22: #{mib_forward.3} parent=0 // pred_check
    _
  $region23: #{mib_forward.3} parent=0 // pred_check_branch
    %41 = sbr.rel (0) target = $region25
  $region24: #{mib_forward.3} parent=0 // pred_region
    _
  $region25: #{mib_forward.3} parent=0 // pred_fallthru
    _
  // Predicated region
  $region26: #{mib_forward.3} parent=0 // pred_check
    _
  $region27: #{mib_forward.3} parent=0 // pred_check_branch
    %43 = sbr.rel (0) target = $region29
  $region28: #{mib_forward.3} parent=0 // pred_region
    _
  $region29: #{mib_forward.3} parent=0 // pred_fallthru
    _
  // Predicated region
  $region30: #{mib_forward.3} parent=0 // pred_check
    _
  $region31: #{mib_forward.3} parent=0 // pred_check_branch
    %45 = sbr.rel (0) target = $region33
  $region32: #{mib_forward.3} parent=0 // pred_region
    _
  $region33: #{mib_forward.3} parent=0 // pred_fallthru
    _
  // Predicated region
  $region34: #{mib_forward.3} parent=0 // pred_check
    _
  $region35: #{mib_forward.3} parent=0 // pred_check_branch
    %47 = sbr.rel (0) target = $region37
  $region36: #{mib_forward.3} parent=0 // pred_region
    _
  $region37: #{mib_forward.3} parent=0 // pred_fallthru
    _
  // Predicated region
  $region38: #{mib_forward.3} parent=0 // pred_check
    _
  $region39: #{mib_forward.3} parent=0 // pred_check_branch
    %49 = sbr.rel (0) target = $region41
  $region40: #{mib_forward.3} parent=0 // pred_region
    _
  $region41: #{mib_forward.3} parent=0 // pred_fallthru
    _
  // Predicated region
  $region42: #{mib_forward.3} parent=0 // pred_check
    _
  $region43: #{mib_forward.3} parent=0 // pred_check_branch
    %51 = sbr.rel (0) target = $region45
  $region44: #{mib_forward.3} parent=0 // pred_region
    _
  $region45: #{mib_forward.3} parent=0 // pred_fallthru
    _
  // Predicated region
  $region46: #{mib_forward.3} parent=0 // pred_check
    _
  $region47: #{mib_forward.3} parent=0 // pred_check_branch
    %53 = sbr.rel (0) target = $region49
  $region48: #{mib_forward.3} parent=0 // pred_region
    _
  $region49: #{mib_forward.3} parent=0 // pred_fallthru
    _
  // Predicated region
  $region50: #{mib_forward.3} parent=0 // pred_check
    _
  $region51: #{mib_forward.3} parent=0 // pred_check_branch
    %55 = sbr.rel (0) target = $region53
  $region52: #{mib_forward.3} parent=0 // pred_region
    _
  $region53: #{mib_forward.3} parent=0 // pred_fallthru
    _
  // Predicated region
  $region54: #{mib_forward.3} parent=0 // pred_check
    _
  $region55: #{mib_forward.3} parent=0 // pred_check_branch
    %57 = sbr.rel (0) target = $region57
  $region56: #{mib_forward.3} parent=0 // pred_region
    _
  $region57: #{mib_forward.3} parent=0 // pred_fallthru
    _
  // Predicated region
  $region58: #{mib_forward.3} parent=0 // pred_check
    _
  $region59: #{mib_forward.3} parent=0 // pred_check_branch
    %59 = sbr.rel (0) target = $region61
  $region60: #{mib_forward.3} parent=0 // pred_region
    _
  $region61: #{mib_forward.3} parent=0 // pred_fallthru
    _
  // Predicated region
  $region62: #{mib_forward.3} parent=0 // pred_check
    _
  $region63: #{mib_forward.3} parent=0 // pred_check_branch
    %61 = sbr.rel (0) target = $region65
  $region64: #{mib_forward.3} parent=0 // pred_region
    _
  $region65: #{mib_forward.3} parent=0 // pred_fallthru
    _
  // Predicated region
  $region66: #{mib_forward.3} parent=0 // pred_check
    _
  $region67: #{mib_forward.3} parent=0 // pred_check_branch
    %63 = sbr.rel (0) target = $region69
  $region68: #{mib_forward.3} parent=0 // pred_region
    _
  $region69: #{mib_forward.3} parent=0 // pred_fallthru
    _
  // Predicated region
  $region70: #{mib_forward.3} parent=0 // pred_check
    _
  $region71: #{mib_forward.3} parent=0 // pred_check_branch
    %65 = sbr.rel (0) target = $region73
  $region72: #{mib_forward.3} parent=0 // pred_region
    _
  $region73: #{mib_forward.3} parent=0 // pred_fallthru
    _
  // Predicated region
  $region74: #{mib_forward.3} parent=0 // pred_check
    _
  $region75: #{mib_forward.3} parent=0 // pred_check_branch
    %67 = sbr.rel (0) target = $region77
  $region76: #{mib_forward.3} parent=0 // pred_region
    _
  $region77: #{mib_forward.3} parent=0 // pred_fallthru
    _
  // Predicated region
  $region78: #{mib_forward.3} parent=0 // pred_check
    _
  $region79: #{mib_forward.3} parent=0 // pred_check_branch
    %69 = sbr.rel (0) target = $region81
  $region80: #{mib_forward.3} parent=0 // pred_region
    _
  $region81: #{mib_forward.3} parent=0 // pred_fallthru
    _
  // Predicated region
  $region82: #{mib_forward.3} parent=0 // pred_check
    _
  $region83: #{mib_forward.3} parent=0 // pred_check_branch
    %71 = sbr.rel (0) target = $region85
  $region84: #{mib_forward.3} parent=0 // pred_region
    _
  $region85: #{mib_forward.3} parent=0 // pred_fallthru
    _
  // Predicated region
  $region86: #{mib_forward.3} parent=0 // pred_check
    _
  $region87: #{mib_forward.3} parent=0 // pred_check_branch
    %73 = sbr.rel (0) target = $region89
  $region88: #{mib_forward.3} parent=0 // pred_region
    _
  $region89: #{mib_forward.3} parent=0 // pred_fallthru
    _
  // Predicated region
  $region90: #{mib_forward.3} parent=0 // pred_check
    _
  $region91: #{mib_forward.3} parent=0 // pred_check_branch
    %75 = sbr.rel (0) target = $region93
  $region92: #{mib_forward.3} parent=0 // pred_region
    _
  $region93: #{mib_forward.3} parent=0 // pred_fallthru
    _
  // Predicated region
  $region94: #{mib_forward.3} parent=0 // pred_check
    _
  $region95: #{mib_forward.3} parent=0 // pred_check_branch
    %77 = sbr.rel (0) target = $region97
  $region96: #{mib_forward.3} parent=0 // pred_region
    _
  $region97: #{mib_forward.3} parent=0 // pred_fallthru
    _
  // Predicated region
  $region98: #{mib_forward.3} parent=0 // pred_check
    _
  $region99: #{mib_forward.3} parent=0 // pred_check_branch
    %79 = sbr.rel (0) target = $region101
  $region100: #{mib_forward.3} parent=0 // pred_region
    _
  $region101: #{mib_forward.3} parent=0 // pred_fallthru
    _
  %v80 = vld [vmem:[%s0] sm:$0xff]
  %v81 = vld [vmem:[%s0 + $0x8] sm:$0xff]
  %v82 = vld [vmem:[%s0 + $0x10] sm:$0xff]
  %v83 = vld [vmem:[%s0 + $0x18] sm:$0xff]
  %v84 = vld [vmem:[%s0 + $0x20] sm:$0xff]
  %v85 = vld [vmem:[%s0 + $0x28] sm:$0xff]
  %v86 = vld [vmem:[%s0 + $0x30] sm:$0xff]
  %v87 = vld [vmem:[%s0 + $0x38] sm:$0xff]
  %v88 = vld [vmem:[%s0 + $0x40] sm:$0xff]
  %v89 = vld [vmem:[%s0 + $0x48] sm:$0xff]
  %v90 = vld [vmem:[%s0 + $0x50] sm:$0xff]
  %v91 = vld [vmem:[%s0 + $0x58] sm:$0xff]
  %v92 = vlaneseq
  %v93 = vshrl.u32 %v92, 7
  %v94 = vlaneseq
  %v95 = vand.u32 %v94, 127
  %vm96 = vcmp.eq.s32.totalorder %v93, %v95
  %v97 = vsel %vm96, 1, 0
  %v98 = vcvt.s32.f32 %v97
  %v99 = vadd.f32 %v80, %v98
  %v100 = vadd.f32 %v81, %v98
  %v101 = vadd.f32 %v82, %v98
  %v102 = vadd.f32 %v83, %v98
  %v103 = vadd.f32 %v84, %v98
  %v104 = vadd.f32 %v85, %v98
  %v105 = vadd.f32 %v86, %v98
  %v106 = vadd.f32 %v87, %v98
  %v107 = vadd.f32 %v88, %v98
  %v108 = vadd.f32 %v89, %v98
  %v109 = vadd.f32 %v90, %v98
  %v110 = vadd.f32 %v91, %v98
  %vm111 = vcmask 64512
  %v112 = vsel %vm111, %v99, 0.0
  %113 = vadd.xlane.f32.xlu0 %v112
  %v114 = vpop.xlane.xlu0 %113
  %v115 = vsel %vm111, %v100, 0.0
  %116 = vadd.xlane.f32.xlu0 %v115
  %v117 = vpop.xlane.xlu0 %116
  %v118 = vsel %vm111, %v101, 0.0
  %119 = vadd.xlane.f32.xlu0 %v118
  %v120 = vpop.xlane.xlu0 %119
  %v121 = vsel %vm111, %v102, 0.0
  %122 = vadd.xlane.f32.xlu0 %v121
  %v123 = vpop.xlane.xlu0 %122
  %v124 = vsel %vm111, %v103, 0.0
  %125 = vadd.xlane.f32.xlu0 %v124
  %v126 = vpop.xlane.xlu0 %125
  %v127 = vsel %vm111, %v104, 0.0
  %128 = vadd.xlane.f32.xlu0 %v127
  %v129 = vpop.xlane.xlu0 %128
  %v130 = vsel %vm111, %v105, 0.0
  %131 = vadd.xlane.f32.xlu0 %v130
  %v132 = vpop.xlane.xlu0 %131
  %v133 = vsel %vm111, %v106, 0.0
  %134 = vadd.xlane.f32.xlu0 %v133
  %v135 = vpop.xlane.xlu0 %134
  %v136 = vsel %vm111, %v107, 0.0
  %137 = vadd.xlane.f32.xlu0 %v136
  %v138 = vpop.xlane.xlu0 %137
  %v139 = vsel %vm111, %v108, 0.0
  %140 = vadd.xlane.f32.xlu0 %v139
  %v141 = vpop.xlane.xlu0 %140
  %v142 = vsel %vm111, %v109, 0.0
  %143 = vadd.xlane.f32.xlu0 %v142
  %v144 = vpop.xlane.xlu0 %143
  %v145 = vsel %vm111, %v110, 0.0
  %146 = vadd.xlane.f32.xlu0 %v145
  %v147 = vpop.xlane.xlu0 %146
  %v148 = vrsqrt.pop %v114
  %v149 = vrsqrt.pop %v117
  %v150 = vrsqrt.pop %v120
  %v151 = vrsqrt.pop %v123
  %v152 = vrsqrt.pop %v126
  %v153 = vrsqrt.pop %v129
  %v154 = vrsqrt.pop %v132
  %v155 = vrsqrt.pop %v135
  %v156 = vrsqrt.pop %v138
  %v157 = vrsqrt.pop %v141
  %v158 = vrsqrt.pop %v144
  %v159 = vrsqrt.pop %v147
  %v160 = vld [vmem:[%s1] sm:$0xff]
  %v161 = vmul.f32 %v148, %v160
  %v162 = vmul.f32 %v149, %v160
  %v163 = vmul.f32 %v150, %v160
  %v164 = vmul.f32 %v151, %v160
  %v165 = vmul.f32 %v152, %v160
  %v166 = vmul.f32 %v153, %v160
  %v167 = vmul.f32 %v154, %v160
  %v168 = vmul.f32 %v155, %v160
  %v169 = vmul.f32 %v156, %v160
  %v170 = vmul.f32 %v157, %v160
  %v171 = vmul.f32 %v158, %v160
  %v172 = vmul.f32 %v159, %v160
  %v174 = vsel %vm111, %v99, 0
  %176 = vmatprep.subr.mxu0 0.0
  %177 = vmatpush1.msra.mxu0 %v161
  %178 = vmatprep.subr.mxu0 0.0
  %179 = vmatpush1.msra.mxu0 0.0
  %180 = vmatprep.subr.mxu0 0.0
  %181 = vmatpush1.msra.mxu0 0.0
  %182 = vmatprep.subr.mxu0 0.0
  %183 = vmatpush1.msra.mxu0 0.0
  %184 = vmatprep.subr.mxu0 0.0
  %185 = vmatpush1.msra.mxu0 0.0
  %186 = vmatprep.subr.mxu0 0.0
  %187 = vmatpush1.msra.mxu0 0.0
  %188 = vmatprep.subr.mxu0 0.0
  %189 = vmatpush1.msra.mxu0 0.0
  %190 = vmatprep.subr.mxu0 0.0
  %191 = vmatpush1.msra.mxu0 0.0
  %192 = vmatprep.subr.mxu0 0.0
  %193 = vmatpush1.msra.mxu0 0.0
  %194 = vmatprep.subr.mxu0 0.0
  %195 = vmatpush1.msra.mxu0 0.0
  %196 = vmatprep.subr.mxu0 0.0
  %197 = vmatpush1.msra.mxu0 0.0
  %198 = vmatprep.subr.mxu0 0.0
  %199 = vmatpush1.msra.mxu0 0.0
  %200 = vmatprep.subr.mxu0 0.0
  %201 = vmatpush1.msra.mxu0 0.0
  %202 = vmatprep.subr.mxu0 0.0
  %203 = vmatpush1.msra.mxu0 0.0
  %204 = vmatprep.subr.mxu0 0.0
  %205 = vmatpush1.msra.mxu0 0.0
  %206 = vmatprep.subr.mxu0 0.0
  %207 = vmatpush1.msra.mxu0 0.0
  %208 = vmatprep.subr.mxu0 0.0
  %209 = vmatpush1.msra.mxu0 0.0
  %210 = vmatprep.subr.mxu0 0.0
  %211 = vmatpush1.msra.mxu0 0.0
  %212 = vmatprep.subr.mxu0 0.0
  %213 = vmatpush1.msra.mxu0 0.0
  %214 = vmatprep.subr.mxu0 0.0
  %215 = vmatpush1.msra.mxu0 0.0
  %216 = vmatprep.subr.mxu0 0.0
  %217 = vmatpush1.msra.mxu0 0.0
  %218 = vmatprep.subr.mxu0 0.0
  %219 = vmatpush1.msra.mxu0 0.0
  %220 = vmatprep.subr.mxu0 0.0
  %221 = vmatpush1.msra.mxu0 0.0
  %222 = vmatprep.subr.mxu0 0.0
  %223 = vmatpush1.msra.mxu0 0.0
  %224 = vmatprep.subr.mxu0 0.0
  %225 = vmatpush1.msra.mxu0 0.0
  %226 = vmatprep.subr.mxu0 0.0
  %227 = vmatpush1.msra.mxu0 0.0
  %228 = vmatprep.subr.mxu0 0.0
  %229 = vmatpush1.msra.mxu0 0.0
  %230 = vmatprep.subr.mxu0 0.0
  %231 = vmatpush1.msra.mxu0 0.0
  %232 = vmatprep.subr.mxu0 0.0
  %233 = vmatpush1.msra.mxu0 0.0
  %234 = vmatprep.subr.mxu0 0.0
  %235 = vmatpush1.msra.mxu0 0.0
  %236 = vmatprep.subr.mxu0 0.0
  %237 = vmatpush1.msra.mxu0 0.0
  %238 = vmatprep.subr.mxu0 0.0
  %239 = vmatpush1.msra.mxu0 0.0
  %240 = vmatprep.mubr.f32.mxu0 0.0
  %241 = vmatmul.mubr.f32.gmra.mrb[0].mxu0 %v174
  %v242 = vpop.f32.mrb[0].mxu0
  %v243 = vadd.f32 0.0, %v242
  %v244 = vpop.f32.mrb[0].mxu0
  %245 = vdwg.mxu0
  %v247 = vsel %vm111, %v100, 0
  %249 = vmatprep.subr.mxu0 0.0
  %250 = vmatpush1.msra.mxu0 %v162
  %251 = vmatprep.subr.mxu0 0.0
  %252 = vmatpush1.msra.mxu0 0.0
  %253 = vmatprep.subr.mxu0 0.0
  %254 = vmatpush1.msra.mxu0 0.0
  %255 = vmatprep.subr.mxu0 0.0
  %256 = vmatpush1.msra.mxu0 0.0
  %257 = vmatprep.subr.mxu0 0.0
  %258 = vmatpush1.msra.mxu0 0.0
  %259 = vmatprep.subr.mxu0 0.0
  %260 = vmatpush1.msra.mxu0 0.0
  %261 = vmatprep.subr.mxu0 0.0
  %262 = vmatpush1.msra.mxu0 0.0
  %263 = vmatprep.subr.mxu0 0.0
  %264 = vmatpush1.msra.mxu0 0.0
  %265 = vmatprep.subr.mxu0 0.0
  %266 = vmatpush1.msra.mxu0 0.0
  %267 = vmatprep.subr.mxu0 0.0
  %268 = vmatpush1.msra.mxu0 0.0
  %269 = vmatprep.subr.mxu0 0.0
  %270 = vmatpush1.msra.mxu0 0.0
  %271 = vmatprep.subr.mxu0 0.0
  %272 = vmatpush1.msra.mxu0 0.0
  %273 = vmatprep.subr.mxu0 0.0
  %274 = vmatpush1.msra.mxu0 0.0
  %275 = vmatprep.subr.mxu0 0.0
  %276 = vmatpush1.msra.mxu0 0.0
  %277 = vmatprep.subr.mxu0 0.0
  %278 = vmatpush1.msra.mxu0 0.0
  %279 = vmatprep.subr.mxu0 0.0
  %280 = vmatpush1.msra.mxu0 0.0
  %281 = vmatprep.subr.mxu0 0.0
  %282 = vmatpush1.msra.mxu0 0.0
  %283 = vmatprep.subr.mxu0 0.0
  %284 = vmatpush1.msra.mxu0 0.0
  %285 = vmatprep.subr.mxu0 0.0
  %286 = vmatpush1.msra.mxu0 0.0
  %287 = vmatprep.subr.mxu0 0.0
  %288 = vmatpush1.msra.mxu0 0.0
  %289 = vmatprep.subr.mxu0 0.0
  %290 = vmatpush1.msra.mxu0 0.0
  %291 = vmatprep.subr.mxu0 0.0
  %292 = vmatpush1.msra.mxu0 0.0
  %293 = vmatprep.subr.mxu0 0.0
  %294 = vmatpush1.msra.mxu0 0.0
  %295 = vmatprep.subr.mxu0 0.0
  %296 = vmatpush1.msra.mxu0 0.0
  %297 = vmatprep.subr.mxu0 0.0
  %298 = vmatpush1.msra.mxu0 0.0
  %299 = vmatprep.subr.mxu0 0.0
  %300 = vmatpush1.msra.mxu0 0.0
  %301 = vmatprep.subr.mxu0 0.0
  %302 = vmatpush1.msra.mxu0 0.0
  %303 = vmatprep.subr.mxu0 0.0
  %304 = vmatpush1.msra.mxu0 0.0
  %305 = vmatprep.subr.mxu0 0.0
  %306 = vmatpush1.msra.mxu0 0.0
  %307 = vmatprep.subr.mxu0 0.0
  %308 = vmatpush1.msra.mxu0 0.0
  %309 = vmatprep.subr.mxu0 0.0
  %310 = vmatpush1.msra.mxu0 0.0
  %311 = vmatprep.subr.mxu0 0.0
  %312 = vmatpush1.msra.mxu0 0.0
  %313 = vmatprep.mubr.f32.mxu0 0.0
  %314 = vmatmul.mubr.f32.gmra.mrb[0].mxu0 %v247
  %v315 = vpop.f32.mrb[0].mxu0
  %v316 = vadd.f32 0.0, %v315
  %v317 = vpop.f32.mrb[0].mxu0
  %318 = vdwg.mxu0
  %v320 = vsel %vm111, %v101, 0
  %322 = vmatprep.subr.mxu0 0.0
  %323 = vmatpush1.msra.mxu0 %v163
  %324 = vmatprep.subr.mxu0 0.0
  %325 = vmatpush1.msra.mxu0 0.0
  %326 = vmatprep.subr.mxu0 0.0
  %327 = vmatpush1.msra.mxu0 0.0
  %328 = vmatprep.subr.mxu0 0.0
  %329 = vmatpush1.msra.mxu0 0.0
  %330 = vmatprep.subr.mxu0 0.0
  %331 = vmatpush1.msra.mxu0 0.0
  %332 = vmatprep.subr.mxu0 0.0
  %333 = vmatpush1.msra.mxu0 0.0
  %334 = vmatprep.subr.mxu0 0.0
  %335 = vmatpush1.msra.mxu0 0.0
  %336 = vmatprep.subr.mxu0 0.0
  %337 = vmatpush1.msra.mxu0 0.0
  %338 = vmatprep.subr.mxu0 0.0
  %339 = vmatpush1.msra.mxu0 0.0
  %340 = vmatprep.subr.mxu0 0.0
  %341 = vmatpush1.msra.mxu0 0.0
  %342 = vmatprep.subr.mxu0 0.0
  %343 = vmatpush1.msra.mxu0 0.0
  %344 = vmatprep.subr.mxu0 0.0
  %345 = vmatpush1.msra.mxu0 0.0
  %346 = vmatprep.subr.mxu0 0.0
  %347 = vmatpush1.msra.mxu0 0.0
  %348 = vmatprep.subr.mxu0 0.0
  %349 = vmatpush1.msra.mxu0 0.0
  %350 = vmatprep.subr.mxu0 0.0
  %351 = vmatpush1.msra.mxu0 0.0
  %352 = vmatprep.subr.mxu0 0.0
  %353 = vmatpush1.msra.mxu0 0.0
  %354 = vmatprep.subr.mxu0 0.0
  %355 = vmatpush1.msra.mxu0 0.0
  %356 = vmatprep.subr.mxu0 0.0
  %357 = vmatpush1.msra.mxu0 0.0
  %358 = vmatprep.subr.mxu0 0.0
  %359 = vmatpush1.msra.mxu0 0.0
  %360 = vmatprep.subr.mxu0 0.0
  %361 = vmatpush1.msra.mxu0 0.0
  %362 = vmatprep.subr.mxu0 0.0
  %363 = vmatpush1.msra.mxu0 0.0
  %364 = vmatprep.subr.mxu0 0.0
  %365 = vmatpush1.msra.mxu0 0.0
  %366 = vmatprep.subr.mxu0 0.0
  %367 = vmatpush1.msra.mxu0 0.0
  %368 = vmatprep.subr.mxu0 0.0
  %369 = vmatpush1.msra.mxu0 0.0
  %370 = vmatprep.subr.mxu0 0.0
  %371 = vmatpush1.msra.mxu0 0.0
  %372 = vmatprep.subr.mxu0 0.0
  %373 = vmatpush1.msra.mxu0 0.0
  %374 = vmatprep.subr.mxu0 0.0
  %375 = vmatpush1.msra.mxu0 0.0
  %376 = vmatprep.subr.mxu0 0.0
  %377 = vmatpush1.msra.mxu0 0.0
  %378 = vmatprep.subr.mxu0 0.0
  %379 = vmatpush1.msra.mxu0 0.0
  %380 = vmatprep.subr.mxu0 0.0
  %381 = vmatpush1.msra.mxu0 0.0
  %382 = vmatprep.subr.mxu0 0.0
  %383 = vmatpush1.msra.mxu0 0.0
  %384 = vmatprep.subr.mxu0 0.0
  %385 = vmatpush1.msra.mxu0 0.0
  %386 = vmatprep.mubr.f32.mxu0 0.0
  %387 = vmatmul.mubr.f32.gmra.mrb[0].mxu0 %v320
  %v388 = vpop.f32.mrb[0].mxu0
  %v389 = vadd.f32 0.0, %v388
  %v390 = vpop.f32.mrb[0].mxu0
  %391 = vdwg.mxu0
  %v393 = vsel %vm111, %v102, 0
  %395 = vmatprep.subr.mxu0 0.0
  %396 = vmatpush1.msra.mxu0 %v164
  %397 = vmatprep.subr.mxu0 0.0
  %398 = vmatpush1.msra.mxu0 0.0
  %399 = vmatprep.subr.mxu0 0.0
  %400 = vmatpush1.msra.mxu0 0.0
  %401 = vmatprep.subr.mxu0 0.0
  %402 = vmatpush1.msra.mxu0 0.0
  %403 = vmatprep.subr.mxu0 0.0
  %404 = vmatpush1.msra.mxu0 0.0
  %405 = vmatprep.subr.mxu0 0.0
  %406 = vmatpush1.msra.mxu0 0.0
  %407 = vmatprep.subr.mxu0 0.0
  %408 = vmatpush1.msra.mxu0 0.0
  %409 = vmatprep.subr.mxu0 0.0
  %410 = vmatpush1.msra.mxu0 0.0
  %411 = vmatprep.subr.mxu0 0.0
  %412 = vmatpush1.msra.mxu0 0.0
  %413 = vmatprep.subr.mxu0 0.0
  %414 = vmatpush1.msra.mxu0 0.0
  %415 = vmatprep.subr.mxu0 0.0
  %416 = vmatpush1.msra.mxu0 0.0
  %417 = vmatprep.subr.mxu0 0.0
  %418 = vmatpush1.msra.mxu0 0.0
  %419 = vmatprep.subr.mxu0 0.0
  %420 = vmatpush1.msra.mxu0 0.0
  %421 = vmatprep.subr.mxu0 0.0
  %422 = vmatpush1.msra.mxu0 0.0
  %423 = vmatprep.subr.mxu0 0.0
  %424 = vmatpush1.msra.mxu0 0.0
  %425 = vmatprep.subr.mxu0 0.0
  %426 = vmatpush1.msra.mxu0 0.0
  %427 = vmatprep.subr.mxu0 0.0
  %428 = vmatpush1.msra.mxu0 0.0
  %429 = vmatprep.subr.mxu0 0.0
  %430 = vmatpush1.msra.mxu0 0.0
  %431 = vmatprep.subr.mxu0 0.0
  %432 = vmatpush1.msra.mxu0 0.0
  %433 = vmatprep.subr.mxu0 0.0
  %434 = vmatpush1.msra.mxu0 0.0
  %435 = vmatprep.subr.mxu0 0.0
  %436 = vmatpush1.msra.mxu0 0.0
  %437 = vmatprep.subr.mxu0 0.0
  %438 = vmatpush1.msra.mxu0 0.0
  %439 = vmatprep.subr.mxu0 0.0
  %440 = vmatpush1.msra.mxu0 0.0
  %441 = vmatprep.subr.mxu0 0.0
  %442 = vmatpush1.msra.mxu0 0.0
  %443 = vmatprep.subr.mxu0 0.0
  %444 = vmatpush1.msra.mxu0 0.0
  %445 = vmatprep.subr.mxu0 0.0
  %446 = vmatpush1.msra.mxu0 0.0
  %447 = vmatprep.subr.mxu0 0.0
  %448 = vmatpush1.msra.mxu0 0.0
  %449 = vmatprep.subr.mxu0 0.0
  %450 = vmatpush1.msra.mxu0 0.0
  %451 = vmatprep.subr.mxu0 0.0
  %452 = vmatpush1.msra.mxu0 0.0
  %453 = vmatprep.subr.mxu0 0.0
  %454 = vmatpush1.msra.mxu0 0.0
  %455 = vmatprep.subr.mxu0 0.0
  %456 = vmatpush1.msra.mxu0 0.0
  %457 = vmatprep.subr.mxu0 0.0
  %458 = vmatpush1.msra.mxu0 0.0
  %459 = vmatprep.mubr.f32.mxu0 0.0
  %460 = vmatmul.mubr.f32.gmra.mrb[0].mxu0 %v393
  %v461 = vpop.f32.mrb[0].mxu0
  %v462 = vadd.f32 0.0, %v461
  %v463 = vpop.f32.mrb[0].mxu0
  %464 = vdwg.mxu0
  %v466 = vsel %vm111, %v103, 0
  %468 = vmatprep.subr.mxu0 0.0
  %469 = vmatpush1.msra.mxu0 %v165
  %470 = vmatprep.subr.mxu0 0.0
  %471 = vmatpush1.msra.mxu0 0.0
  %472 = vmatprep.subr.mxu0 0.0
  %473 = vmatpush1.msra.mxu0 0.0
  %474 = vmatprep.subr.mxu0 0.0
  %475 = vmatpush1.msra.mxu0 0.0
  %476 = vmatprep.subr.mxu0 0.0
  %477 = vmatpush1.msra.mxu0 0.0
  %478 = vmatprep.subr.mxu0 0.0
  %479 = vmatpush1.msra.mxu0 0.0
  %480 = vmatprep.subr.mxu0 0.0
  %481 = vmatpush1.msra.mxu0 0.0
  %482 = vmatprep.subr.mxu0 0.0
  %483 = vmatpush1.msra.mxu0 0.0
  %484 = vmatprep.subr.mxu0 0.0
  %485 = vmatpush1.msra.mxu0 0.0
  %486 = vmatprep.subr.mxu0 0.0
  %487 = vmatpush1.msra.mxu0 0.0
  %488 = vmatprep.subr.mxu0 0.0
  %489 = vmatpush1.msra.mxu0 0.0
  %490 = vmatprep.subr.mxu0 0.0
  %491 = vmatpush1.msra.mxu0 0.0
  %492 = vmatprep.subr.mxu0 0.0
  %493 = vmatpush1.msra.mxu0 0.0
  %494 = vmatprep.subr.mxu0 0.0
  %495 = vmatpush1.msra.mxu0 0.0
  %496 = vmatprep.subr.mxu0 0.0
  %497 = vmatpush1.msra.mxu0 0.0
  %498 = vmatprep.subr.mxu0 0.0
  %499 = vmatpush1.msra.mxu0 0.0
  %500 = vmatprep.subr.mxu0 0.0
  %501 = vmatpush1.msra.mxu0 0.0
  %502 = vmatprep.subr.mxu0 0.0
  %503 = vmatpush1.msra.mxu0 0.0
  %504 = vmatprep.subr.mxu0 0.0
  %505 = vmatpush1.msra.mxu0 0.0
  %506 = vmatprep.subr.mxu0 0.0
  %507 = vmatpush1.msra.mxu0 0.0
  %508 = vmatprep.subr.mxu0 0.0
  %509 = vmatpush1.msra.mxu0 0.0
  %510 = vmatprep.subr.mxu0 0.0
  %511 = vmatpush1.msra.mxu0 0.0
  %512 = vmatprep.subr.mxu0 0.0
  %513 = vmatpush1.msra.mxu0 0.0
  %514 = vmatprep.subr.mxu0 0.0
  %515 = vmatpush1.msra.mxu0 0.0
  %516 = vmatprep.subr.mxu0 0.0
  %517 = vmatpush1.msra.mxu0 0.0
  %518 = vmatprep.subr.mxu0 0.0
  %519 = vmatpush1.msra.mxu0 0.0
  %520 = vmatprep.subr.mxu0 0.0
  %521 = vmatpush1.msra.mxu0 0.0
  %522 = vmatprep.subr.mxu0 0.0
  %523 = vmatpush1.msra.mxu0 0.0
  %524 = vmatprep.subr.mxu0 0.0
  %525 = vmatpush1.msra.mxu0 0.0
  %526 = vmatprep.subr.mxu0 0.0
  %527 = vmatpush1.msra.mxu0 0.0
  %528 = vmatprep.subr.mxu0 0.0
  %529 = vmatpush1.msra.mxu0 0.0
  %530 = vmatprep.subr.mxu0 0.0
  %531 = vmatpush1.msra.mxu0 0.0
  %532 = vmatprep.mubr.f32.mxu0 0.0
  %533 = vmatmul.mubr.f32.gmra.mrb[0].mxu0 %v466
  %v534 = vpop.f32.mrb[0].mxu0
  %v535 = vadd.f32 0.0, %v534
  %v536 = vpop.f32.mrb[0].mxu0
  %537 = vdwg.mxu0
  %v539 = vsel %vm111, %v104, 0
  %541 = vmatprep.subr.mxu0 0.0
  %542 = vmatpush1.msra.mxu0 %v166
  %543 = vmatprep.subr.mxu0 0.0
  %544 = vmatpush1.msra.mxu0 0.0
  %545 = vmatprep.subr.mxu0 0.0
  %546 = vmatpush1.msra.mxu0 0.0
  %547 = vmatprep.subr.mxu0 0.0
  %548 = vmatpush1.msra.mxu0 0.0
  %549 = vmatprep.subr.mxu0 0.0
  %550 = vmatpush1.msra.mxu0 0.0
  %551 = vmatprep.subr.mxu0 0.0
  %552 = vmatpush1.msra.mxu0 0.0
  %553 = vmatprep.subr.mxu0 0.0
  %554 = vmatpush1.msra.mxu0 0.0
  %555 = vmatprep.subr.mxu0 0.0
  %556 = vmatpush1.msra.mxu0 0.0
  %557 = vmatprep.subr.mxu0 0.0
  %558 = vmatpush1.msra.mxu0 0.0
  %559 = vmatprep.subr.mxu0 0.0
  %560 = vmatpush1.msra.mxu0 0.0
  %561 = vmatprep.subr.mxu0 0.0
  %562 = vmatpush1.msra.mxu0 0.0
  %563 = vmatprep.subr.mxu0 0.0
  %564 = vmatpush1.msra.mxu0 0.0
  %565 = vmatprep.subr.mxu0 0.0
  %566 = vmatpush1.msra.mxu0 0.0
  %567 = vmatprep.subr.mxu0 0.0
  %568 = vmatpush1.msra.mxu0 0.0
  %569 = vmatprep.subr.mxu0 0.0
  %570 = vmatpush1.msra.mxu0 0.0
  %571 = vmatprep.subr.mxu0 0.0
  %572 = vmatpush1.msra.mxu0 0.0
  %573 = vmatprep.subr.mxu0 0.0
  %574 = vmatpush1.msra.mxu0 0.0
  %575 = vmatprep.subr.mxu0 0.0
  %576 = vmatpush1.msra.mxu0 0.0
  %577 = vmatprep.subr.mxu0 0.0
  %578 = vmatpush1.msra.mxu0 0.0
  %579 = vmatprep.subr.mxu0 0.0
  %580 = vmatpush1.msra.mxu0 0.0
  %581 = vmatprep.subr.mxu0 0.0
  %582 = vmatpush1.msra.mxu0 0.0
  %583 = vmatprep.subr.mxu0 0.0
  %584 = vmatpush1.msra.mxu0 0.0
  %585 = vmatprep.subr.mxu0 0.0
  %586 = vmatpush1.msra.mxu0 0.0
  %587 = vmatprep.subr.mxu0 0.0
  %588 = vmatpush1.msra.mxu0 0.0
  %589 = vmatprep.subr.mxu0 0.0
  %590 = vmatpush1.msra.mxu0 0.0
  %591 = vmatprep.subr.mxu0 0.0
  %592 = vmatpush1.msra.mxu0 0.0
  %593 = vmatprep.subr.mxu0 0.0
  %594 = vmatpush1.msra.mxu0 0.0
  %595 = vmatprep.subr.mxu0 0.0
  %596 = vmatpush1.msra.mxu0 0.0
  %597 = vmatprep.subr.mxu0 0.0
  %598 = vmatpush1.msra.mxu0 0.0
  %599 = vmatprep.subr.mxu0 0.0
  %600 = vmatpush1.msra.mxu0 0.0
  %601 = vmatprep.subr.mxu0 0.0
  %602 = vmatpush1.msra.mxu0 0.0
  %603 = vmatprep.subr.mxu0 0.0
  %604 = vmatpush1.msra.mxu0 0.0
  %605 = vmatprep.mubr.f32.mxu0 0.0
  %606 = vmatmul.mubr.f32.gmra.mrb[0].mxu0 %v539
  %v607 = vpop.f32.mrb[0].mxu0
  %v608 = vadd.f32 0.0, %v607
  %v609 = vpop.f32.mrb[0].mxu0
  %610 = vdwg.mxu0
  %v612 = vsel %vm111, %v105, 0
  %614 = vmatprep.subr.mxu0 0.0
  %615 = vmatpush1.msra.mxu0 %v167
  %616 = vmatprep.subr.mxu0 0.0
  %617 = vmatpush1.msra.mxu0 0.0
  %618 = vmatprep.subr.mxu0 0.0
  %619 = vmatpush1.msra.mxu0 0.0
  %620 = vmatprep.subr.mxu0 0.0
  %621 = vmatpush1.msra.mxu0 0.0
  %622 = vmatprep.subr.mxu0 0.0
  %623 = vmatpush1.msra.mxu0 0.0
  %624 = vmatprep.subr.mxu0 0.0
  %625 = vmatpush1.msra.mxu0 0.0
  %626 = vmatprep.subr.mxu0 0.0
  %627 = vmatpush1.msra.mxu0 0.0
  %628 = vmatprep.subr.mxu0 0.0
  %629 = vmatpush1.msra.mxu0 0.0
  %630 = vmatprep.subr.mxu0 0.0
  %631 = vmatpush1.msra.mxu0 0.0
  %632 = vmatprep.subr.mxu0 0.0
  %633 = vmatpush1.msra.mxu0 0.0
  %634 = vmatprep.subr.mxu0 0.0
  %635 = vmatpush1.msra.mxu0 0.0
  %636 = vmatprep.subr.mxu0 0.0
  %637 = vmatpush1.msra.mxu0 0.0
  %638 = vmatprep.subr.mxu0 0.0
  %639 = vmatpush1.msra.mxu0 0.0
  %640 = vmatprep.subr.mxu0 0.0
  %641 = vmatpush1.msra.mxu0 0.0
  %642 = vmatprep.subr.mxu0 0.0
  %643 = vmatpush1.msra.mxu0 0.0
  %644 = vmatprep.subr.mxu0 0.0
  %645 = vmatpush1.msra.mxu0 0.0
  %646 = vmatprep.subr.mxu0 0.0
  %647 = vmatpush1.msra.mxu0 0.0
  %648 = vmatprep.subr.mxu0 0.0
  %649 = vmatpush1.msra.mxu0 0.0
  %650 = vmatprep.subr.mxu0 0.0
  %651 = vmatpush1.msra.mxu0 0.0
  %652 = vmatprep.subr.mxu0 0.0
  %653 = vmatpush1.msra.mxu0 0.0
  %654 = vmatprep.subr.mxu0 0.0
  %655 = vmatpush1.msra.mxu0 0.0
  %656 = vmatprep.subr.mxu0 0.0
  %657 = vmatpush1.msra.mxu0 0.0
  %658 = vmatprep.subr.mxu0 0.0
  %659 = vmatpush1.msra.mxu0 0.0
  %660 = vmatprep.subr.mxu0 0.0
  %661 = vmatpush1.msra.mxu0 0.0
  %662 = vmatprep.subr.mxu0 0.0
  %663 = vmatpush1.msra.mxu0 0.0
  %664 = vmatprep.subr.mxu0 0.0
  %665 = vmatpush1.msra.mxu0 0.0
  %666 = vmatprep.subr.mxu0 0.0
  %667 = vmatpush1.msra.mxu0 0.0
  %668 = vmatprep.subr.mxu0 0.0
  %669 = vmatpush1.msra.mxu0 0.0
  %670 = vmatprep.subr.mxu0 0.0
  %671 = vmatpush1.msra.mxu0 0.0
  %672 = vmatprep.subr.mxu0 0.0
  %673 = vmatpush1.msra.mxu0 0.0
  %674 = vmatprep.subr.mxu0 0.0
  %675 = vmatpush1.msra.mxu0 0.0
  %676 = vmatprep.subr.mxu0 0.0
  %677 = vmatpush1.msra.mxu0 0.0
  %678 = vmatprep.mubr.f32.mxu0 0.0
  %679 = vmatmul.mubr.f32.gmra.mrb[0].mxu0 %v612
  %v680 = vpop.f32.mrb[0].mxu0
  %v681 = vadd.f32 0.0, %v680
  %v682 = vpop.f32.mrb[0].mxu0
  %683 = vdwg.mxu0
  %v685 = vsel %vm111, %v106, 0
  %687 = vmatprep.subr.mxu0 0.0
  %688 = vmatpush1.msra.mxu0 %v168
  %689 = vmatprep.subr.mxu0 0.0
  %690 = vmatpush1.msra.mxu0 0.0
  %691 = vmatprep.subr.mxu0 0.0
  %692 = vmatpush1.msra.mxu0 0.0
  %693 = vmatprep.subr.mxu0 0.0
  %694 = vmatpush1.msra.mxu0 0.0
  %695 = vmatprep.subr.mxu0 0.0
  %696 = vmatpush1.msra.mxu0 0.0
  %697 = vmatprep.subr.mxu0 0.0
  %698 = vmatpush1.msra.mxu0 0.0
  %699 = vmatprep.subr.mxu0 0.0
  %700 = vmatpush1.msra.mxu0 0.0
  %701 = vmatprep.subr.mxu0 0.0
  %702 = vmatpush1.msra.mxu0 0.0
  %703 = vmatprep.subr.mxu0 0.0
  %704 = vmatpush1.msra.mxu0 0.0
  %705 = vmatprep.subr.mxu0 0.0
  %706 = vmatpush1.msra.mxu0 0.0
  %707 = vmatprep.subr.mxu0 0.0
  %708 = vmatpush1.msra.mxu0 0.0
  %709 = vmatprep.subr.mxu0 0.0
  %710 = vmatpush1.msra.mxu0 0.0
  %711 = vmatprep.subr.mxu0 0.0
  %712 = vmatpush1.msra.mxu0 0.0
  %713 = vmatprep.subr.mxu0 0.0
  %714 = vmatpush1.msra.mxu0 0.0
  %715 = vmatprep.subr.mxu0 0.0
  %716 = vmatpush1.msra.mxu0 0.0
  %717 = vmatprep.subr.mxu0 0.0
  %718 = vmatpush1.msra.mxu0 0.0
  %719 = vmatprep.subr.mxu0 0.0
  %720 = vmatpush1.msra.mxu0 0.0
  %721 = vmatprep.subr.mxu0 0.0
  %722 = vmatpush1.msra.mxu0 0.0
  %723 = vmatprep.subr.mxu0 0.0
  %724 = vmatpush1.msra.mxu0 0.0
  %725 = vmatprep.subr.mxu0 0.0
  %726 = vmatpush1.msra.mxu0 0.0
  %727 = vmatprep.subr.mxu0 0.0
  %728 = vmatpush1.msra.mxu0 0.0
  %729 = vmatprep.subr.mxu0 0.0
  %730 = vmatpush1.msra.mxu0 0.0
  %731 = vmatprep.subr.mxu0 0.0
  %732 = vmatpush1.msra.mxu0 0.0
  %733 = vmatprep.subr.mxu0 0.0
  %734 = vmatpush1.msra.mxu0 0.0
  %735 = vmatprep.subr.mxu0 0.0
  %736 = vmatpush1.msra.mxu0 0.0
  %737 = vmatprep.subr.mxu0 0.0
  %738 = vmatpush1.msra.mxu0 0.0
  %739 = vmatprep.subr.mxu0 0.0
  %740 = vmatpush1.msra.mxu0 0.0
  %741 = vmatprep.subr.mxu0 0.0
  %742 = vmatpush1.msra.mxu0 0.0
  %743 = vmatprep.subr.mxu0 0.0
  %744 = vmatpush1.msra.mxu0 0.0
  %745 = vmatprep.subr.mxu0 0.0
  %746 = vmatpush1.msra.mxu0 0.0
  %747 = vmatprep.subr.mxu0 0.0
  %748 = vmatpush1.msra.mxu0 0.0
  %749 = vmatprep.subr.mxu0 0.0
  %750 = vmatpush1.msra.mxu0 0.0
  %751 = vmatprep.mubr.f32.mxu0 0.0
  %752 = vmatmul.mubr.f32.gmra.mrb[0].mxu0 %v685
  %v753 = vpop.f32.mrb[0].mxu0
  %v754 = vadd.f32 0.0, %v753
  %v755 = vpop.f32.mrb[0].mxu0
  %756 = vdwg.mxu0
  %v758 = vsel %vm111, %v107, 0
  %760 = vmatprep.subr.mxu0 0.0
  %761 = vmatpush1.msra.mxu0 %v169
  %762 = vmatprep.subr.mxu0 0.0
  %763 = vmatpush1.msra.mxu0 0.0
  %764 = vmatprep.subr.mxu0 0.0
  %765 = vmatpush1.msra.mxu0 0.0
  %766 = vmatprep.subr.mxu0 0.0
  %767 = vmatpush1.msra.mxu0 0.0
  %768 = vmatprep.subr.mxu0 0.0
  %769 = vmatpush1.msra.mxu0 0.0
  %770 = vmatprep.subr.mxu0 0.0
  %771 = vmatpush1.msra.mxu0 0.0
  %772 = vmatprep.subr.mxu0 0.0
  %773 = vmatpush1.msra.mxu0 0.0
  %774 = vmatprep.subr.mxu0 0.0
  %775 = vmatpush1.msra.mxu0 0.0
  %776 = vmatprep.subr.mxu0 0.0
  %777 = vmatpush1.msra.mxu0 0.0
  %778 = vmatprep.subr.mxu0 0.0
  %779 = vmatpush1.msra.mxu0 0.0
  %780 = vmatprep.subr.mxu0 0.0
  %781 = vmatpush1.msra.mxu0 0.0
  %782 = vmatprep.subr.mxu0 0.0
  %783 = vmatpush1.msra.mxu0 0.0
  %784 = vmatprep.subr.mxu0 0.0
  %785 = vmatpush1.msra.mxu0 0.0
  %786 = vmatprep.subr.mxu0 0.0
  %787 = vmatpush1.msra.mxu0 0.0
  %788 = vmatprep.subr.mxu0 0.0
  %789 = vmatpush1.msra.mxu0 0.0
  %790 = vmatprep.subr.mxu0 0.0
  %791 = vmatpush1.msra.mxu0 0.0
  %792 = vmatprep.subr.mxu0 0.0
  %793 = vmatpush1.msra.mxu0 0.0
  %794 = vmatprep.subr.mxu0 0.0
  %795 = vmatpush1.msra.mxu0 0.0
  %796 = vmatprep.subr.mxu0 0.0
  %797 = vmatpush1.msra.mxu0 0.0
  %798 = vmatprep.subr.mxu0 0.0
  %799 = vmatpush1.msra.mxu0 0.0
  %800 = vmatprep.subr.mxu0 0.0
  %801 = vmatpush1.msra.mxu0 0.0
  %802 = vmatprep.subr.mxu0 0.0
  %803 = vmatpush1.msra.mxu0 0.0
  %804 = vmatprep.subr.mxu0 0.0
  %805 = vmatpush1.msra.mxu0 0.0
  %806 = vmatprep.subr.mxu0 0.0
  %807 = vmatpush1.msra.mxu0 0.0
  %808 = vmatprep.subr.mxu0 0.0
  %809 = vmatpush1.msra.mxu0 0.0
  %810 = vmatprep.subr.mxu0 0.0
  %811 = vmatpush1.msra.mxu0 0.0
  %812 = vmatprep.subr.mxu0 0.0
  %813 = vmatpush1.msra.mxu0 0.0
  %814 = vmatprep.subr.mxu0 0.0
  %815 = vmatpush1.msra.mxu0 0.0
  %816 = vmatprep.subr.mxu0 0.0
  %817 = vmatpush1.msra.mxu0 0.0
  %818 = vmatprep.subr.mxu0 0.0
  %819 = vmatpush1.msra.mxu0 0.0
  %820 = vmatprep.subr.mxu0 0.0
  %821 = vmatpush1.msra.mxu0 0.0
  %822 = vmatprep.subr.mxu0 0.0
  %823 = vmatpush1.msra.mxu0 0.0
  %824 = vmatprep.mubr.f32.mxu0 0.0
  %825 = vmatmul.mubr.f32.gmra.mrb[0].mxu0 %v758
  %v826 = vpop.f32.mrb[0].mxu0
  %v827 = vadd.f32 0.0, %v826
  %v828 = vpop.f32.mrb[0].mxu0
  %829 = vdwg.mxu0
  %v831 = vsel %vm111, %v108, 0
  %833 = vmatprep.subr.mxu0 0.0
  %834 = vmatpush1.msra.mxu0 %v170
  %835 = vmatprep.subr.mxu0 0.0
  %836 = vmatpush1.msra.mxu0 0.0
  %837 = vmatprep.subr.mxu0 0.0
  %838 = vmatpush1.msra.mxu0 0.0
  %839 = vmatprep.subr.mxu0 0.0
  %840 = vmatpush1.msra.mxu0 0.0
  %841 = vmatprep.subr.mxu0 0.0
  %842 = vmatpush1.msra.mxu0 0.0
  %843 = vmatprep.subr.mxu0 0.0
  %844 = vmatpush1.msra.mxu0 0.0
  %845 = vmatprep.subr.mxu0 0.0
  %846 = vmatpush1.msra.mxu0 0.0
  %847 = vmatprep.subr.mxu0 0.0
  %848 = vmatpush1.msra.mxu0 0.0
  %849 = vmatprep.subr.mxu0 0.0
  %850 = vmatpush1.msra.mxu0 0.0
  %851 = vmatprep.subr.mxu0 0.0
  %852 = vmatpush1.msra.mxu0 0.0
  %853 = vmatprep.subr.mxu0 0.0
  %854 = vmatpush1.msra.mxu0 0.0
  %855 = vmatprep.subr.mxu0 0.0
  %856 = vmatpush1.msra.mxu0 0.0
  %857 = vmatprep.subr.mxu0 0.0
  %858 = vmatpush1.msra.mxu0 0.0
  %859 = vmatprep.subr.mxu0 0.0
  %860 = vmatpush1.msra.mxu0 0.0
  %861 = vmatprep.subr.mxu0 0.0
  %862 = vmatpush1.msra.mxu0 0.0
  %863 = vmatprep.subr.mxu0 0.0
  %864 = vmatpush1.msra.mxu0 0.0
  %865 = vmatprep.subr.mxu0 0.0
  %866 = vmatpush1.msra.mxu0 0.0
  %867 = vmatprep.subr.mxu0 0.0
  %868 = vmatpush1.msra.mxu0 0.0
  %869 = vmatprep.subr.mxu0 0.0
  %870 = vmatpush1.msra.mxu0 0.0
  %871 = vmatprep.subr.mxu0 0.0
  %872 = vmatpush1.msra.mxu0 0.0
  %873 = vmatprep.subr.mxu0 0.0
  %874 = vmatpush1.msra.mxu0 0.0
  %875 = vmatprep.subr.mxu0 0.0
  %876 = vmatpush1.msra.mxu0 0.0
  %877 = vmatprep.subr.mxu0 0.0
  %878 = vmatpush1.msra.mxu0 0.0
  %879 = vmatprep.subr.mxu0 0.0
  %880 = vmatpush1.msra.mxu0 0.0
  %881 = vmatprep.subr.mxu0 0.0
  %882 = vmatpush1.msra.mxu0 0.0
  %883 = vmatprep.subr.mxu0 0.0
  %884 = vmatpush1.msra.mxu0 0.0
  %885 = vmatprep.subr.mxu0 0.0
  %886 = vmatpush1.msra.mxu0 0.0
  %887 = vmatprep.subr.mxu0 0.0
  %888 = vmatpush1.msra.mxu0 0.0
  %889 = vmatprep.subr.mxu0 0.0
  %890 = vmatpush1.msra.mxu0 0.0
  %891 = vmatprep.subr.mxu0 0.0
  %892 = vmatpush1.msra.mxu0 0.0
  %893 = vmatprep.subr.mxu0 0.0
  %894 = vmatpush1.msra.mxu0 0.0
  %895 = vmatprep.subr.mxu0 0.0
  %896 = vmatpush1.msra.mxu0 0.0
  %897 = vmatprep.mubr.f32.mxu0 0.0
  %898 = vmatmul.mubr.f32.gmra.mrb[0].mxu0 %v831
  %v899 = vpop.f32.mrb[0].mxu0
  %v900 = vadd.f32 0.0, %v899
  %v901 = vpop.f32.mrb[0].mxu0
  %902 = vdwg.mxu0
  %v904 = vsel %vm111, %v109, 0
  %906 = vmatprep.subr.mxu0 0.0
  %907 = vmatpush1.msra.mxu0 %v171
  %908 = vmatprep.subr.mxu0 0.0
  %909 = vmatpush1.msra.mxu0 0.0
  %910 = vmatprep.subr.mxu0 0.0
  %911 = vmatpush1.msra.mxu0 0.0
  %912 = vmatprep.subr.mxu0 0.0
  %913 = vmatpush1.msra.mxu0 0.0
  %914 = vmatprep.subr.mxu0 0.0
  %915 = vmatpush1.msra.mxu0 0.0
  %916 = vmatprep.subr.mxu0 0.0
  %917 = vmatpush1.msra.mxu0 0.0
  %918 = vmatprep.subr.mxu0 0.0
  %919 = vmatpush1.msra.mxu0 0.0
  %920 = vmatprep.subr.mxu0 0.0
  %921 = vmatpush1.msra.mxu0 0.0
  %922 = vmatprep.subr.mxu0 0.0
  %923 = vmatpush1.msra.mxu0 0.0
  %924 = vmatprep.subr.mxu0 0.0
  %925 = vmatpush1.msra.mxu0 0.0
  %926 = vmatprep.subr.mxu0 0.0
  %927 = vmatpush1.msra.mxu0 0.0
  %928 = vmatprep.subr.mxu0 0.0
  %929 = vmatpush1.msra.mxu0 0.0
  %930 = vmatprep.subr.mxu0 0.0
  %931 = vmatpush1.msra.mxu0 0.0
  %932 = vmatprep.subr.mxu0 0.0
  %933 = vmatpush1.msra.mxu0 0.0
  %934 = vmatprep.subr.mxu0 0.0
  %935 = vmatpush1.msra.mxu0 0.0
  %936 = vmatprep.subr.mxu0 0.0
  %937 = vmatpush1.msra.mxu0 0.0
  %938 = vmatprep.subr.mxu0 0.0
  %939 = vmatpush1.msra.mxu0 0.0
  %940 = vmatprep.subr.mxu0 0.0
  %941 = vmatpush1.msra.mxu0 0.0
  %942 = vmatprep.subr.mxu0 0.0
  %943 = vmatpush1.msra.mxu0 0.0
  %944 = vmatprep.subr.mxu0 0.0
  %945 = vmatpush1.msra.mxu0 0.0
  %946 = vmatprep.subr.mxu0 0.0
  %947 = vmatpush1.msra.mxu0 0.0
  %948 = vmatprep.subr.mxu0 0.0
  %949 = vmatpush1.msra.mxu0 0.0
  %950 = vmatprep.subr.mxu0 0.0
  %951 = vmatpush1.msra.mxu0 0.0
  %952 = vmatprep.subr.mxu0 0.0
  %953 = vmatpush1.msra.mxu0 0.0
  %954 = vmatprep.subr.mxu0 0.0
  %955 = vmatpush1.msra.mxu0 0.0
  %956 = vmatprep.subr.mxu0 0.0
  %957 = vmatpush1.msra.mxu0 0.0
  %958 = vmatprep.subr.mxu0 0.0
  %959 = vmatpush1.msra.mxu0 0.0
  %960 = vmatprep.subr.mxu0 0.0
  %961 = vmatpush1.msra.mxu0 0.0
  %962 = vmatprep.subr.mxu0 0.0
  %963 = vmatpush1.msra.mxu0 0.0
  %964 = vmatprep.subr.mxu0 0.0
  %965 = vmatpush1.msra.mxu0 0.0
  %966 = vmatprep.subr.mxu0 0.0
  %967 = vmatpush1.msra.mxu0 0.0
  %968 = vmatprep.subr.mxu0 0.0
  %969 = vmatpush1.msra.mxu0 0.0
  %970 = vmatprep.mubr.f32.mxu0 0.0
  %971 = vmatmul.mubr.f32.gmra.mrb[0].mxu0 %v904
  %v972 = vpop.f32.mrb[0].mxu0
  %v973 = vadd.f32 0.0, %v972
  %v974 = vpop.f32.mrb[0].mxu0
  %975 = vdwg.mxu0
  %v977 = vsel %vm111, %v110, 0
  %979 = vmatprep.subr.mxu0 0.0
  %980 = vmatpush1.msra.mxu0 %v172
  %981 = vmatprep.subr.mxu0 0.0
  %982 = vmatpush1.msra.mxu0 0.0
  %983 = vmatprep.subr.mxu0 0.0
  %984 = vmatpush1.msra.mxu0 0.0
  %985 = vmatprep.subr.mxu0 0.0
  %986 = vmatpush1.msra.mxu0 0.0
  %987 = vmatprep.subr.mxu0 0.0
  %988 = vmatpush1.msra.mxu0 0.0
  %989 = vmatprep.subr.mxu0 0.0
  %990 = vmatpush1.msra.mxu0 0.0
  %991 = vmatprep.subr.mxu0 0.0
  %992 = vmatpush1.msra.mxu0 0.0
  %993 = vmatprep.subr.mxu0 0.0
  %994 = vmatpush1.msra.mxu0 0.0
  %995 = vmatprep.subr.mxu0 0.0
  %996 = vmatpush1.msra.mxu0 0.0
  %997 = vmatprep.subr.mxu0 0.0
  %998 = vmatpush1.msra.mxu0 0.0
  %999 = vmatprep.subr.mxu0 0.0
  %1000 = vmatpush1.msra.mxu0 0.0
  %1001 = vmatprep.subr.mxu0 0.0
  %1002 = vmatpush1.msra.mxu0 0.0
  %1003 = vmatprep.subr.mxu0 0.0
  %1004 = vmatpush1.msra.mxu0 0.0
  %1005 = vmatprep.subr.mxu0 0.0
  %1006 = vmatpush1.msra.mxu0 0.0
  %1007 = vmatprep.subr.mxu0 0.0
  %1008 = vmatpush1.msra.mxu0 0.0
  %1009 = vmatprep.subr.mxu0 0.0
  %1010 = vmatpush1.msra.mxu0 0.0
  %1011 = vmatprep.subr.mxu0 0.0
  %1012 = vmatpush1.msra.mxu0 0.0
  %1013 = vmatprep.subr.mxu0 0.0
  %1014 = vmatpush1.msra.mxu0 0.0
  %1015 = vmatprep.subr.mxu0 0.0
  %1016 = vmatpush1.msra.mxu0 0.0
  %1017 = vmatprep.subr.mxu0 0.0
  %1018 = vmatpush1.msra.mxu0 0.0
  %1019 = vmatprep.subr.mxu0 0.0
  %1020 = vmatpush1.msra.mxu0 0.0
  %1021 = vmatprep.subr.mxu0 0.0
  %1022 = vmatpush1.msra.mxu0 0.0
  %1023 = vmatprep.subr.mxu0 0.0
  %1024 = vmatpush1.msra.mxu0 0.0
  %1025 = vmatprep.subr.mxu0 0.0
  %1026 = vmatpush1.msra.mxu0 0.0
  %1027 = vmatprep.subr.mxu0 0.0
  %1028 = vmatpush1.msra.mxu0 0.0
  %1029 = vmatprep.subr.mxu0 0.0
  %1030 = vmatpush1.msra.mxu0 0.0
  %1031 = vmatprep.subr.mxu0 0.0
  %1032 = vmatpush1.msra.mxu0 0.0
  %1033 = vmatprep.subr.mxu0 0.0
  %1034 = vmatpush1.msra.mxu0 0.0
  %1035 = vmatprep.subr.mxu0 0.0
  %1036 = vmatpush1.msra.mxu0 0.0
  %1037 = vmatprep.subr.mxu0 0.0
  %1038 = vmatpush1.msra.mxu0 0.0
  %1039 = vmatprep.subr.mxu0 0.0
  %1040 = vmatpush1.msra.mxu0 0.0
  %1041 = vmatprep.subr.mxu0 0.0
  %1042 = vmatpush1.msra.mxu0 0.0
  %1043 = vmatprep.mubr.f32.mxu0 0.0
  %1044 = vmatmul.mubr.f32.gmra.mrb[0].mxu0 %v977
  %v1045 = vpop.f32.mrb[0].mxu0
  %v1046 = vadd.f32 0.0, %v1045
  %v1047 = vpop.f32.mrb[0].mxu0
  %1048 = vdwg.mxu0
  %v1049 = vmul.f32 %v148, %v243
  %v1050 = vmul.f32 %v149, %v316
  %v1051 = vmul.f32 %v150, %v389
  %v1052 = vmul.f32 %v151, %v462
  %v1053 = vmul.f32 %v152, %v535
  %v1054 = vmul.f32 %v153, %v608
  %v1055 = vmul.f32 %v154, %v681
  %v1056 = vmul.f32 %v155, %v754
  %v1057 = vmul.f32 %v156, %v827
  %v1058 = vmul.f32 %v157, %v900
  %v1059 = vmul.f32 %v158, %v973
  %v1060 = vmul.f32 %v159, %v1046
  %v1061 = vld [vmem:[%s2] sm:$0x1]
  %v1063 = vlaneseq
  %v1064 = vshrl.u32 %v1063, 7
  %v1065 = vsub.s32 0, %v1064
  %v1066 = vrot.slane %v1061, %v1065
  %v1068 = vadd.f32 %v1049, %v1066
  %v1069 = vadd.f32 %v1050, %v1066
  %v1070 = vadd.f32 %v1051, %v1066
  %v1071 = vadd.f32 %v1052, %v1066
  %v1072 = vadd.f32 %v1053, %v1066
  %v1073 = vadd.f32 %v1054, %v1066
  %v1074 = vadd.f32 %v1055, %v1066
  %v1075 = vadd.f32 %v1056, %v1066
  %v1076 = vadd.f32 %v1057, %v1066
  %v1077 = vadd.f32 %v1058, %v1066
  %v1078 = vadd.f32 %v1059, %v1066
  %v1079 = vadd.f32 %v1060, %v1066
  %v1080 = vmax.f32 %v1068, 0.0
  %v1081 = vmax.f32 %v1069, 0.0
  %v1082 = vmax.f32 %v1070, 0.0
  %v1083 = vmax.f32 %v1071, 0.0
  %v1084 = vmax.f32 %v1072, 0.0
  %v1085 = vmax.f32 %v1073, 0.0
  %v1086 = vmax.f32 %v1074, 0.0
  %v1087 = vmax.f32 %v1075, 0.0
  %v1088 = vmax.f32 %v1076, 0.0
  %v1089 = vmax.f32 %v1077, 0.0
  %v1090 = vmax.f32 %v1078, 0.0
  %v1091 = vmax.f32 %v1079, 0.0
  %v1092 = vld [vmem:[%s3] sm:$0xff]
  %v1093 = vld [vmem:[%s3 + $0x8] sm:$0xff]
  %v1094 = vld [vmem:[%s3 + $0x10] sm:$0xff]
  %v1095 = vld [vmem:[%s4] sm:$0x1]
  %vm1096 = vcmask 195584
  %v1098 = vsel %vm1096, %v1080, 0
  %v1101 = vsel %vm1096, %v1081, 0
  %v1104 = vsel %vm1096, %v1082, 0
  %v1107 = vsel %vm1096, %v1083, 0
  %v1110 = vsel %vm1096, %v1084, 0
  %v1113 = vsel %vm1096, %v1085, 0
  %v1116 = vsel %vm1096, %v1086, 0
  %v1119 = vsel %vm1096, %v1087, 0
  %v1122 = vsel %vm1096, %v1088, 0
  %v1125 = vsel %vm1096, %v1089, 0
  %v1128 = vsel %vm1096, %v1090, 0
  %v1131 = vsel %vm1096, %v1091, 0
  %1133 = vmatprep.subr.mxu0 0.0
  %1134 = vmatpush1.msra.mxu0 %v1092
  %1135 = vmatprep.subr.mxu0 0.0
  %1136 = vmatpush1.msra.mxu0 %v1093
  %1137 = vmatprep.subr.mxu0 0.0
  %1138 = vmatpush1.msra.mxu0 %v1094
  %1139 = vmatprep.subr.mxu0 0.0
  %1140 = vmatpush1.msra.mxu0 0.0
  %1141 = vmatprep.subr.mxu0 0.0
  %1142 = vmatpush1.msra.mxu0 0.0
  %1143 = vmatprep.subr.mxu0 0.0
  %1144 = vmatpush1.msra.mxu0 0.0
  %1145 = vmatprep.subr.mxu0 0.0
  %1146 = vmatpush1.msra.mxu0 0.0
  %1147 = vmatprep.subr.mxu0 0.0
  %1148 = vmatpush1.msra.mxu0 0.0
  %1149 = vmatprep.subr.mxu0 0.0
  %1150 = vmatpush1.msra.mxu0 0.0
  %1151 = vmatprep.subr.mxu0 0.0
  %1152 = vmatpush1.msra.mxu0 0.0
  %1153 = vmatprep.subr.mxu0 0.0
  %1154 = vmatpush1.msra.mxu0 0.0
  %1155 = vmatprep.subr.mxu0 0.0
  %1156 = vmatpush1.msra.mxu0 0.0
  %1157 = vmatprep.subr.mxu0 0.0
  %1158 = vmatpush1.msra.mxu0 0.0
  %1159 = vmatprep.subr.mxu0 0.0
  %1160 = vmatpush1.msra.mxu0 0.0
  %1161 = vmatprep.subr.mxu0 0.0
  %1162 = vmatpush1.msra.mxu0 0.0
  %1163 = vmatprep.subr.mxu0 0.0
  %1164 = vmatpush1.msra.mxu0 0.0
  %1165 = vmatprep.subr.mxu0 0.0
  %1166 = vmatpush1.msra.mxu0 0.0
  %1167 = vmatprep.subr.mxu0 0.0
  %1168 = vmatpush1.msra.mxu0 0.0
  %1169 = vmatprep.subr.mxu0 0.0
  %1170 = vmatpush1.msra.mxu0 0.0
  %1171 = vmatprep.subr.mxu0 0.0
  %1172 = vmatpush1.msra.mxu0 0.0
  %1173 = vmatprep.subr.mxu0 0.0
  %1174 = vmatpush1.msra.mxu0 0.0
  %1175 = vmatprep.subr.mxu0 0.0
  %1176 = vmatpush1.msra.mxu0 0.0
  %1177 = vmatprep.subr.mxu0 0.0
  %1178 = vmatpush1.msra.mxu0 0.0
  %1179 = vmatprep.subr.mxu0 0.0
  %1180 = vmatpush1.msra.mxu0 0.0
  %1181 = vmatprep.subr.mxu0 0.0
  %1182 = vmatpush1.msra.mxu0 0.0
  %1183 = vmatprep.subr.mxu0 0.0
  %1184 = vmatpush1.msra.mxu0 0.0
  %1185 = vmatprep.subr.mxu0 0.0
  %1186 = vmatpush1.msra.mxu0 0.0
  %1187 = vmatprep.subr.mxu0 0.0
  %1188 = vmatpush1.msra.mxu0 0.0
  %1189 = vmatprep.subr.mxu0 0.0
  %1190 = vmatpush1.msra.mxu0 0.0
  %1191 = vmatprep.subr.mxu0 0.0
  %1192 = vmatpush1.msra.mxu0 0.0
  %1193 = vmatprep.subr.mxu0 0.0
  %1194 = vmatpush1.msra.mxu0 0.0
  %1195 = vmatprep.subr.mxu0 0.0
  %1196 = vmatpush1.msra.mxu0 0.0
  %1197 = vmatprep.mubr.f32.mxu0 0.0
  %1198 = vmatmul.mubr.f32.gmra.mrb[0].mxu0 %v1098
  %v1199 = vpop.f32.mrb[0].mxu0
  %v1200 = vadd.f32 0.0, %v1199
  %v1201 = vpop.f32.mrb[0].mxu0
  %1202 = vmatprep.mubr.f32.mxu0 0.0
  %1203 = vmatmul.mubr.f32.gmra.mrb[0].mxu0 %v1101
  %v1204 = vpop.f32.mrb[0].mxu0
  %v1205 = vadd.f32 0.0, %v1204
  %v1206 = vpop.f32.mrb[0].mxu0
  %1207 = vmatprep.mubr.f32.mxu0 0.0
  %1208 = vmatmul.mubr.f32.gmra.mrb[0].mxu0 %v1104
  %v1209 = vpop.f32.mrb[0].mxu0
  %v1210 = vadd.f32 0.0, %v1209
  %v1211 = vpop.f32.mrb[0].mxu0
  %1212 = vmatprep.mubr.f32.mxu0 0.0
  %1213 = vmatmul.mubr.f32.gmra.mrb[0].mxu0 %v1107
  %v1214 = vpop.f32.mrb[0].mxu0
  %v1215 = vadd.f32 0.0, %v1214
  %v1216 = vpop.f32.mrb[0].mxu0
  %1217 = vmatprep.mubr.f32.mxu0 0.0
  %1218 = vmatmul.mubr.f32.gmra.mrb[0].mxu0 %v1110
  %v1219 = vpop.f32.mrb[0].mxu0
  %v1220 = vadd.f32 0.0, %v1219
  %v1221 = vpop.f32.mrb[0].mxu0
  %1222 = vmatprep.mubr.f32.mxu0 0.0
  %1223 = vmatmul.mubr.f32.gmra.mrb[0].mxu0 %v1113
  %v1224 = vpop.f32.mrb[0].mxu0
  %v1225 = vadd.f32 0.0, %v1224
  %v1226 = vpop.f32.mrb[0].mxu0
  %1227 = vmatprep.mubr.f32.mxu0 0.0
  %1228 = vmatmul.mubr.f32.gmra.mrb[0].mxu0 %v1116
  %v1229 = vpop.f32.mrb[0].mxu0
  %v1230 = vadd.f32 0.0, %v1229
  %v1231 = vpop.f32.mrb[0].mxu0
  %1232 = vmatprep.mubr.f32.mxu0 0.0
  %1233 = vmatmul.mubr.f32.gmra.mrb[0].mxu0 %v1119
  %v1234 = vpop.f32.mrb[0].mxu0
  %v1235 = vadd.f32 0.0, %v1234
  %v1236 = vpop.f32.mrb[0].mxu0
  %1237 = vmatprep.mubr.f32.mxu0 0.0
  %1238 = vmatmul.mubr.f32.gmra.mrb[0].mxu0 %v1122
  %v1239 = vpop.f32.mrb[0].mxu0
  %v1240 = vadd.f32 0.0, %v1239
  %v1241 = vpop.f32.mrb[0].mxu0
  %1242 = vmatprep.mubr.f32.mxu0 0.0
  %1243 = vmatmul.mubr.f32.gmra.mrb[0].mxu0 %v1125
  %v1244 = vpop.f32.mrb[0].mxu0
  %v1245 = vadd.f32 0.0, %v1244
  %v1246 = vpop.f32.mrb[0].mxu0
  %1247 = vmatprep.mubr.f32.mxu0 0.0
  %1248 = vmatmul.mubr.f32.gmra.mrb[0].mxu0 %v1128
  %v1249 = vpop.f32.mrb[0].mxu0
  %v1250 = vadd.f32 0.0, %v1249
  %v1251 = vpop.f32.mrb[0].mxu0
  %1252 = vmatprep.mubr.f32.mxu0 0.0
  %1253 = vmatmul.mubr.f32.gmra.mrb[0].mxu0 %v1131
  %v1254 = vpop.f32.mrb[0].mxu0
  %v1255 = vadd.f32 0.0, %v1254
  %v1256 = vpop.f32.mrb[0].mxu0
  %1257 = vdwg.mxu0
  %v1258 = vmul.f32 %v148, %v1200
  %v1259 = vmul.f32 %v149, %v1205
  %v1260 = vmul.f32 %v150, %v1210
  %v1261 = vmul.f32 %v151, %v1215
  %v1262 = vmul.f32 %v152, %v1220
  %v1263 = vmul.f32 %v153, %v1225
  %v1264 = vmul.f32 %v154, %v1230
  %v1265 = vmul.f32 %v155, %v1235
  %v1266 = vmul.f32 %v156, %v1240
  %v1267 = vmul.f32 %v157, %v1245
  %v1268 = vmul.f32 %v158, %v1250
  %v1269 = vmul.f32 %v159, %v1255
  %1270 = vmatprep.subr.mxu0 0.0
  %1271 = vmatpush1.msra.mxu0 %v1258
  %1272 = vmatprep.subr.mxu0 0.0
  %1273 = vmatpush1.msra.mxu0 0.0
  %1274 = vmatprep.subr.mxu0 0.0
  %1275 = vmatpush1.msra.mxu0 0.0
  %1276 = vmatprep.subr.mxu0 0.0
  %1277 = vmatpush1.msra.mxu0 0.0
  %1278 = vmatprep.subr.mxu0 0.0
  %1279 = vmatpush1.msra.mxu0 0.0
  %1280 = vmatprep.subr.mxu0 0.0
  %1281 = vmatpush1.msra.mxu0 0.0
  %1282 = vmatprep.subr.mxu0 0.0
  %1283 = vmatpush1.msra.mxu0 0.0
  %1284 = vmatprep.subr.mxu0 0.0
  %1285 = vmatpush1.msra.mxu0 0.0
  %1286 = vmatprep.subr.mxu0 0.0
  %1287 = vmatpush1.msra.mxu0 0.0
  %1288 = vmatprep.subr.mxu0 0.0
  %1289 = vmatpush1.msra.mxu0 0.0
  %1290 = vmatprep.subr.mxu0 0.0
  %1291 = vmatpush1.msra.mxu0 0.0
  %1292 = vmatprep.subr.mxu0 0.0
  %1293 = vmatpush1.msra.mxu0 0.0
  %1294 = vmatprep.subr.mxu0 0.0
  %1295 = vmatpush1.msra.mxu0 0.0
  %1296 = vmatprep.subr.mxu0 0.0
  %1297 = vmatpush1.msra.mxu0 0.0
  %1298 = vmatprep.subr.mxu0 0.0
  %1299 = vmatpush1.msra.mxu0 0.0
  %1300 = vmatprep.subr.mxu0 0.0
  %1301 = vmatpush1.msra.mxu0 0.0
  %1302 = vmatprep.subr.mxu0 0.0
  %1303 = vmatpush1.msra.mxu0 0.0
  %1304 = vmatprep.subr.mxu0 0.0
  %1305 = vmatpush1.msra.mxu0 0.0
  %1306 = vmatprep.subr.mxu0 0.0
  %1307 = vmatpush1.msra.mxu0 0.0
  %1308 = vmatprep.subr.mxu0 0.0
  %1309 = vmatpush1.msra.mxu0 0.0
  %1310 = vmatprep.subr.mxu0 0.0
  %1311 = vmatpush1.msra.mxu0 0.0
  %1312 = vmatprep.subr.mxu0 0.0
  %1313 = vmatpush1.msra.mxu0 0.0
  %1314 = vmatprep.subr.mxu0 0.0
  %1315 = vmatpush1.msra.mxu0 0.0
  %1316 = vmatprep.subr.mxu0 0.0
  %1317 = vmatpush1.msra.mxu0 0.0
  %1318 = vmatprep.subr.mxu0 0.0
  %1319 = vmatpush1.msra.mxu0 0.0
  %1320 = vmatprep.subr.mxu0 0.0
  %1321 = vmatpush1.msra.mxu0 0.0
  %1322 = vmatprep.subr.mxu0 0.0
  %1323 = vmatpush1.msra.mxu0 0.0
  %1324 = vmatprep.subr.mxu0 0.0
  %1325 = vmatpush1.msra.mxu0 0.0
  %1326 = vmatprep.subr.mxu0 0.0
  %1327 = vmatpush1.msra.mxu0 0.0
  %1328 = vmatprep.subr.mxu0 0.0
  %1329 = vmatpush1.msra.mxu0 0.0
  %1330 = vmatprep.subr.mxu0 0.0
  %1331 = vmatpush1.msra.mxu0 0.0
  %1332 = vmatprep.subr.mxu0 0.0
  %1333 = vmatpush1.msra.mxu0 0.0
  %1334 = vmatprep.mubr.f32.mxu0 0.0
  %1335 = vmatmul.mubr.f32.gmra.mrb[0].mxu0 %v174
  %v1336 = vpop.f32.mrb[0].mxu0
  %v1337 = vadd.f32 0.0, %v1336
  %v1338 = vpop.f32.mrb[0].mxu0
  %1339 = vdwg.mxu0
  %1340 = vmatprep.subr.mxu0 0.0
  %1341 = vmatpush1.msra.mxu0 %v1259
  %1342 = vmatprep.subr.mxu0 0.0
  %1343 = vmatpush1.msra.mxu0 0.0
  %1344 = vmatprep.subr.mxu0 0.0
  %1345 = vmatpush1.msra.mxu0 0.0
  %1346 = vmatprep.subr.mxu0 0.0
  %1347 = vmatpush1.msra.mxu0 0.0
  %1348 = vmatprep.subr.mxu0 0.0
  %1349 = vmatpush1.msra.mxu0 0.0
  %1350 = vmatprep.subr.mxu0 0.0
  %1351 = vmatpush1.msra.mxu0 0.0
  %1352 = vmatprep.subr.mxu0 0.0
  %1353 = vmatpush1.msra.mxu0 0.0
  %1354 = vmatprep.subr.mxu0 0.0
  %1355 = vmatpush1.msra.mxu0 0.0
  %1356 = vmatprep.subr.mxu0 0.0
  %1357 = vmatpush1.msra.mxu0 0.0
  %1358 = vmatprep.subr.mxu0 0.0
  %1359 = vmatpush1.msra.mxu0 0.0
  %1360 = vmatprep.subr.mxu0 0.0
  %1361 = vmatpush1.msra.mxu0 0.0
  %1362 = vmatprep.subr.mxu0 0.0
  %1363 = vmatpush1.msra.mxu0 0.0
  %1364 = vmatprep.subr.mxu0 0.0
  %1365 = vmatpush1.msra.mxu0 0.0
  %1366 = vmatprep.subr.mxu0 0.0
  %1367 = vmatpush1.msra.mxu0 0.0
  %1368 = vmatprep.subr.mxu0 0.0
  %1369 = vmatpush1.msra.mxu0 0.0
  %1370 = vmatprep.subr.mxu0 0.0
  %1371 = vmatpush1.msra.mxu0 0.0
  %1372 = vmatprep.subr.mxu0 0.0
  %1373 = vmatpush1.msra.mxu0 0.0
  %1374 = vmatprep.subr.mxu0 0.0
  %1375 = vmatpush1.msra.mxu0 0.0
  %1376 = vmatprep.subr.mxu0 0.0
  %1377 = vmatpush1.msra.mxu0 0.0
  %1378 = vmatprep.subr.mxu0 0.0
  %1379 = vmatpush1.msra.mxu0 0.0
  %1380 = vmatprep.subr.mxu0 0.0
  %1381 = vmatpush1.msra.mxu0 0.0
  %1382 = vmatprep.subr.mxu0 0.0
  %1383 = vmatpush1.msra.mxu0 0.0
  %1384 = vmatprep.subr.mxu0 0.0
  %1385 = vmatpush1.msra.mxu0 0.0
  %1386 = vmatprep.subr.mxu0 0.0
  %1387 = vmatpush1.msra.mxu0 0.0
  %1388 = vmatprep.subr.mxu0 0.0
  %1389 = vmatpush1.msra.mxu0 0.0
  %1390 = vmatprep.subr.mxu0 0.0
  %1391 = vmatpush1.msra.mxu0 0.0
  %1392 = vmatprep.subr.mxu0 0.0
  %1393 = vmatpush1.msra.mxu0 0.0
  %1394 = vmatprep.subr.mxu0 0.0
  %1395 = vmatpush1.msra.mxu0 0.0
  %1396 = vmatprep.subr.mxu0 0.0
  %1397 = vmatpush1.msra.mxu0 0.0
  %1398 = vmatprep.subr.mxu0 0.0
  %1399 = vmatpush1.msra.mxu0 0.0
  %1400 = vmatprep.subr.mxu0 0.0
  %1401 = vmatpush1.msra.mxu0 0.0
  %1402 = vmatprep.subr.mxu0 0.0
  %1403 = vmatpush1.msra.mxu0 0.0
  %1404 = vmatprep.mubr.f32.mxu0 0.0
  %1405 = vmatmul.mubr.f32.gmra.mrb[0].mxu0 %v247
  %v1406 = vpop.f32.mrb[0].mxu0
  %v1407 = vadd.f32 0.0, %v1406
  %v1408 = vpop.f32.mrb[0].mxu0
  %1409 = vdwg.mxu0
  %1410 = vmatprep.subr.mxu0 0.0
  %1411 = vmatpush1.msra.mxu0 %v1260
  %1412 = vmatprep.subr.mxu0 0.0
  %1413 = vmatpush1.msra.mxu0 0.0
  %1414 = vmatprep.subr.mxu0 0.0
  %1415 = vmatpush1.msra.mxu0 0.0
  %1416 = vmatprep.subr.mxu0 0.0
  %1417 = vmatpush1.msra.mxu0 0.0
  %1418 = vmatprep.subr.mxu0 0.0
  %1419 = vmatpush1.msra.mxu0 0.0
  %1420 = vmatprep.subr.mxu0 0.0
  %1421 = vmatpush1.msra.mxu0 0.0
  %1422 = vmatprep.subr.mxu0 0.0
  %1423 = vmatpush1.msra.mxu0 0.0
  %1424 = vmatprep.subr.mxu0 0.0
  %1425 = vmatpush1.msra.mxu0 0.0
  %1426 = vmatprep.subr.mxu0 0.0
  %1427 = vmatpush1.msra.mxu0 0.0
  %1428 = vmatprep.subr.mxu0 0.0
  %1429 = vmatpush1.msra.mxu0 0.0
  %1430 = vmatprep.subr.mxu0 0.0
  %1431 = vmatpush1.msra.mxu0 0.0
  %1432 = vmatprep.subr.mxu0 0.0
  %1433 = vmatpush1.msra.mxu0 0.0
  %1434 = vmatprep.subr.mxu0 0.0
  %1435 = vmatpush1.msra.mxu0 0.0
  %1436 = vmatprep.subr.mxu0 0.0
  %1437 = vmatpush1.msra.mxu0 0.0
  %1438 = vmatprep.subr.mxu0 0.0
  %1439 = vmatpush1.msra.mxu0 0.0
  %1440 = vmatprep.subr.mxu0 0.0
  %1441 = vmatpush1.msra.mxu0 0.0
  %1442 = vmatprep.subr.mxu0 0.0
  %1443 = vmatpush1.msra.mxu0 0.0
  %1444 = vmatprep.subr.mxu0 0.0
  %1445 = vmatpush1.msra.mxu0 0.0
  %1446 = vmatprep.subr.mxu0 0.0
  %1447 = vmatpush1.msra.mxu0 0.0
  %1448 = vmatprep.subr.mxu0 0.0
  %1449 = vmatpush1.msra.mxu0 0.0
  %1450 = vmatprep.subr.mxu0 0.0
  %1451 = vmatpush1.msra.mxu0 0.0
  %1452 = vmatprep.subr.mxu0 0.0
  %1453 = vmatpush1.msra.mxu0 0.0
  %1454 = vmatprep.subr.mxu0 0.0
  %1455 = vmatpush1.msra.mxu0 0.0
  %1456 = vmatprep.subr.mxu0 0.0
  %1457 = vmatpush1.msra.mxu0 0.0
  %1458 = vmatprep.subr.mxu0 0.0
  %1459 = vmatpush1.msra.mxu0 0.0
  %1460 = vmatprep.subr.mxu0 0.0
  %1461 = vmatpush1.msra.mxu0 0.0
  %1462 = vmatprep.subr.mxu0 0.0
  %1463 = vmatpush1.msra.mxu0 0.0
  %1464 = vmatprep.subr.mxu0 0.0
  %1465 = vmatpush1.msra.mxu0 0.0
  %1466 = vmatprep.subr.mxu0 0.0
  %1467 = vmatpush1.msra.mxu0 0.0
  %1468 = vmatprep.subr.mxu0 0.0
  %1469 = vmatpush1.msra.mxu0 0.0
  %1470 = vmatprep.subr.mxu0 0.0
  %1471 = vmatpush1.msra.mxu0 0.0
  %1472 = vmatprep.subr.mxu0 0.0
  %1473 = vmatpush1.msra.mxu0 0.0
  %1474 = vmatprep.mubr.f32.mxu0 0.0
  %1475 = vmatmul.mubr.f32.gmra.mrb[0].mxu0 %v320
  %v1476 = vpop.f32.mrb[0].mxu0
  %v1477 = vadd.f32 0.0, %v1476
  %v1478 = vpop.f32.mrb[0].mxu0
  %1479 = vdwg.mxu0
  %1480 = vmatprep.subr.mxu0 0.0
  %1481 = vmatpush1.msra.mxu0 %v1261
  %1482 = vmatprep.subr.mxu0 0.0
  %1483 = vmatpush1.msra.mxu0 0.0
  %1484 = vmatprep.subr.mxu0 0.0
  %1485 = vmatpush1.msra.mxu0 0.0
  %1486 = vmatprep.subr.mxu0 0.0
  %1487 = vmatpush1.msra.mxu0 0.0
  %1488 = vmatprep.subr.mxu0 0.0
  %1489 = vmatpush1.msra.mxu0 0.0
  %1490 = vmatprep.subr.mxu0 0.0
  %1491 = vmatpush1.msra.mxu0 0.0
  %1492 = vmatprep.subr.mxu0 0.0
  %1493 = vmatpush1.msra.mxu0 0.0
  %1494 = vmatprep.subr.mxu0 0.0
  %1495 = vmatpush1.msra.mxu0 0.0
  %1496 = vmatprep.subr.mxu0 0.0
  %1497 = vmatpush1.msra.mxu0 0.0
  %1498 = vmatprep.subr.mxu0 0.0
  %1499 = vmatpush1.msra.mxu0 0.0
  %1500 = vmatprep.subr.mxu0 0.0
  %1501 = vmatpush1.msra.mxu0 0.0
  %1502 = vmatprep.subr.mxu0 0.0
  %1503 = vmatpush1.msra.mxu0 0.0
  %1504 = vmatprep.subr.mxu0 0.0
  %1505 = vmatpush1.msra.mxu0 0.0
  %1506 = vmatprep.subr.mxu0 0.0
  %1507 = vmatpush1.msra.mxu0 0.0
  %1508 = vmatprep.subr.mxu0 0.0
  %1509 = vmatpush1.msra.mxu0 0.0
  %1510 = vmatprep.subr.mxu0 0.0
  %1511 = vmatpush1.msra.mxu0 0.0
  %1512 = vmatprep.subr.mxu0 0.0
  %1513 = vmatpush1.msra.mxu0 0.0
  %1514 = vmatprep.subr.mxu0 0.0
  %1515 = vmatpush1.msra.mxu0 0.0
  %1516 = vmatprep.subr.mxu0 0.0
  %1517 = vmatpush1.msra.mxu0 0.0
  %1518 = vmatprep.subr.mxu0 0.0
  %1519 = vmatpush1.msra.mxu0 0.0
  %1520 = vmatprep.subr.mxu0 0.0
  %1521 = vmatpush1.msra.mxu0 0.0
  %1522 = vmatprep.subr.mxu0 0.0
  %1523 = vmatpush1.msra.mxu0 0.0
  %1524 = vmatprep.subr.mxu0 0.0
  %1525 = vmatpush1.msra.mxu0 0.0
  %1526 = vmatprep.subr.mxu0 0.0
  %1527 = vmatpush1.msra.mxu0 0.0
  %1528 = vmatprep.subr.mxu0 0.0
  %1529 = vmatpush1.msra.mxu0 0.0
  %1530 = vmatprep.subr.mxu0 0.0
  %1531 = vmatpush1.msra.mxu0 0.0
  %1532 = vmatprep.subr.mxu0 0.0
  %1533 = vmatpush1.msra.mxu0 0.0
  %1534 = vmatprep.subr.mxu0 0.0
  %1535 = vmatpush1.msra.mxu0 0.0
  %1536 = vmatprep.subr.mxu0 0.0
  %1537 = vmatpush1.msra.mxu0 0.0
  %1538 = vmatprep.subr.mxu0 0.0
  %1539 = vmatpush1.msra.mxu0 0.0
  %1540 = vmatprep.subr.mxu0 0.0
  %1541 = vmatpush1.msra.mxu0 0.0
  %1542 = vmatprep.subr.mxu0 0.0
  %1543 = vmatpush1.msra.mxu0 0.0
  %1544 = vmatprep.mubr.f32.mxu0 0.0
  %1545 = vmatmul.mubr.f32.gmra.mrb[0].mxu0 %v393
  %v1546 = vpop.f32.mrb[0].mxu0
  %v1547 = vadd.f32 0.0, %v1546
  %v1548 = vpop.f32.mrb[0].mxu0
  %1549 = vdwg.mxu0
  %1550 = vmatprep.subr.mxu0 0.0
  %1551 = vmatpush1.msra.mxu0 %v1262
  %1552 = vmatprep.subr.mxu0 0.0
  %1553 = vmatpush1.msra.mxu0 0.0
  %1554 = vmatprep.subr.mxu0 0.0
  %1555 = vmatpush1.msra.mxu0 0.0
  %1556 = vmatprep.subr.mxu0 0.0
  %1557 = vmatpush1.msra.mxu0 0.0
  %1558 = vmatprep.subr.mxu0 0.0
  %1559 = vmatpush1.msra.mxu0 0.0
  %1560 = vmatprep.subr.mxu0 0.0
  %1561 = vmatpush1.msra.mxu0 0.0
  %1562 = vmatprep.subr.mxu0 0.0
  %1563 = vmatpush1.msra.mxu0 0.0
  %1564 = vmatprep.subr.mxu0 0.0
  %1565 = vmatpush1.msra.mxu0 0.0
  %1566 = vmatprep.subr.mxu0 0.0
  %1567 = vmatpush1.msra.mxu0 0.0
  %1568 = vmatprep.subr.mxu0 0.0
  %1569 = vmatpush1.msra.mxu0 0.0
  %1570 = vmatprep.subr.mxu0 0.0
  %1571 = vmatpush1.msra.mxu0 0.0
  %1572 = vmatprep.subr.mxu0 0.0
  %1573 = vmatpush1.msra.mxu0 0.0
  %1574 = vmatprep.subr.mxu0 0.0
  %1575 = vmatpush1.msra.mxu0 0.0
  %1576 = vmatprep.subr.mxu0 0.0
  %1577 = vmatpush1.msra.mxu0 0.0
  %1578 = vmatprep.subr.mxu0 0.0
  %1579 = vmatpush1.msra.mxu0 0.0
  %1580 = vmatprep.subr.mxu0 0.0
  %1581 = vmatpush1.msra.mxu0 0.0
  %1582 = vmatprep.subr.mxu0 0.0
  %1583 = vmatpush1.msra.mxu0 0.0
  %1584 = vmatprep.subr.mxu0 0.0
  %1585 = vmatpush1.msra.mxu0 0.0
  %1586 = vmatprep.subr.mxu0 0.0
  %1587 = vmatpush1.msra.mxu0 0.0
  %1588 = vmatprep.subr.mxu0 0.0
  %1589 = vmatpush1.msra.mxu0 0.0
  %1590 = vmatprep.subr.mxu0 0.0
  %1591 = vmatpush1.msra.mxu0 0.0
  %1592 = vmatprep.subr.mxu0 0.0
  %1593 = vmatpush1.msra.mxu0 0.0
  %1594 = vmatprep.subr.mxu0 0.0
  %1595 = vmatpush1.msra.mxu0 0.0
  %1596 = vmatprep.subr.mxu0 0.0
  %1597 = vmatpush1.msra.mxu0 0.0
  %1598 = vmatprep.subr.mxu0 0.0
  %1599 = vmatpush1.msra.mxu0 0.0
  %1600 = vmatprep.subr.mxu0 0.0
  %1601 = vmatpush1.msra.mxu0 0.0
  %1602 = vmatprep.subr.mxu0 0.0
  %1603 = vmatpush1.msra.mxu0 0.0
  %1604 = vmatprep.subr.mxu0 0.0
  %1605 = vmatpush1.msra.mxu0 0.0
  %1606 = vmatprep.subr.mxu0 0.0
  %1607 = vmatpush1.msra.mxu0 0.0
  %1608 = vmatprep.subr.mxu0 0.0
  %1609 = vmatpush1.msra.mxu0 0.0
  %1610 = vmatprep.subr.mxu0 0.0
  %1611 = vmatpush1.msra.mxu0 0.0
  %1612 = vmatprep.subr.mxu0 0.0
  %1613 = vmatpush1.msra.mxu0 0.0
  %1614 = vmatprep.mubr.f32.mxu0 0.0
  %1615 = vmatmul.mubr.f32.gmra.mrb[0].mxu0 %v466
  %v1616 = vpop.f32.mrb[0].mxu0
  %v1617 = vadd.f32 0.0, %v1616
  %v1618 = vpop.f32.mrb[0].mxu0
  %1619 = vdwg.mxu0
  %1620 = vmatprep.subr.mxu0 0.0
  %1621 = vmatpush1.msra.mxu0 %v1263
  %1622 = vmatprep.subr.mxu0 0.0
  %1623 = vmatpush1.msra.mxu0 0.0
  %1624 = vmatprep.subr.mxu0 0.0
  %1625 = vmatpush1.msra.mxu0 0.0
  %1626 = vmatprep.subr.mxu0 0.0
  %1627 = vmatpush1.msra.mxu0 0.0
  %1628 = vmatprep.subr.mxu0 0.0
  %1629 = vmatpush1.msra.mxu0 0.0
  %1630 = vmatprep.subr.mxu0 0.0
  %1631 = vmatpush1.msra.mxu0 0.0
  %1632 = vmatprep.subr.mxu0 0.0
  %1633 = vmatpush1.msra.mxu0 0.0
  %1634 = vmatprep.subr.mxu0 0.0
  %1635 = vmatpush1.msra.mxu0 0.0
  %1636 = vmatprep.subr.mxu0 0.0
  %1637 = vmatpush1.msra.mxu0 0.0
  %1638 = vmatprep.subr.mxu0 0.0
  %1639 = vmatpush1.msra.mxu0 0.0
  %1640 = vmatprep.subr.mxu0 0.0
  %1641 = vmatpush1.msra.mxu0 0.0
  %1642 = vmatprep.subr.mxu0 0.0
  %1643 = vmatpush1.msra.mxu0 0.0
  %1644 = vmatprep.subr.mxu0 0.0
  %1645 = vmatpush1.msra.mxu0 0.0
  %1646 = vmatprep.subr.mxu0 0.0
  %1647 = vmatpush1.msra.mxu0 0.0
  %1648 = vmatprep.subr.mxu0 0.0
  %1649 = vmatpush1.msra.mxu0 0.0
  %1650 = vmatprep.subr.mxu0 0.0
  %1651 = vmatpush1.msra.mxu0 0.0
  %1652 = vmatprep.subr.mxu0 0.0
  %1653 = vmatpush1.msra.mxu0 0.0
  %1654 = vmatprep.subr.mxu0 0.0
  %1655 = vmatpush1.msra.mxu0 0.0
  %1656 = vmatprep.subr.mxu0 0.0
  %1657 = vmatpush1.msra.mxu0 0.0
  %1658 = vmatprep.subr.mxu0 0.0
  %1659 = vmatpush1.msra.mxu0 0.0
  %1660 = vmatprep.subr.mxu0 0.0
  %1661 = vmatpush1.msra.mxu0 0.0
  %1662 = vmatprep.subr.mxu0 0.0
  %1663 = vmatpush1.msra.mxu0 0.0
  %1664 = vmatprep.subr.mxu0 0.0
  %1665 = vmatpush1.msra.mxu0 0.0
  %1666 = vmatprep.subr.mxu0 0.0
  %1667 = vmatpush1.msra.mxu0 0.0
  %1668 = vmatprep.subr.mxu0 0.0
  %1669 = vmatpush1.msra.mxu0 0.0
  %1670 = vmatprep.subr.mxu0 0.0
  %1671 = vmatpush1.msra.mxu0 0.0
  %1672 = vmatprep.subr.mxu0 0.0
  %1673 = vmatpush1.msra.mxu0 0.0
  %1674 = vmatprep.subr.mxu0 0.0
  %1675 = vmatpush1.msra.mxu0 0.0
  %1676 = vmatprep.subr.mxu0 0.0
  %1677 = vmatpush1.msra.mxu0 0.0
  %1678 = vmatprep.subr.mxu0 0.0
  %1679 = vmatpush1.msra.mxu0 0.0
  %1680 = vmatprep.subr.mxu0 0.0
  %1681 = vmatpush1.msra.mxu0 0.0
  %1682 = vmatprep.subr.mxu0 0.0
  %1683 = vmatpush1.msra.mxu0 0.0
  %1684 = vmatprep.mubr.f32.mxu0 0.0
  %1685 = vmatmul.mubr.f32.gmra.mrb[0].mxu0 %v539
  %v1686 = vpop.f32.mrb[0].mxu0
  %v1687 = vadd.f32 0.0, %v1686
  %v1688 = vpop.f32.mrb[0].mxu0
  %1689 = vdwg.mxu0
  %1690 = vmatprep.subr.mxu0 0.0
  %1691 = vmatpush1.msra.mxu0 %v1264
  %1692 = vmatprep.subr.mxu0 0.0
  %1693 = vmatpush1.msra.mxu0 0.0
  %1694 = vmatprep.subr.mxu0 0.0
  %1695 = vmatpush1.msra.mxu0 0.0
  %1696 = vmatprep.subr.mxu0 0.0
  %1697 = vmatpush1.msra.mxu0 0.0
  %1698 = vmatprep.subr.mxu0 0.0
  %1699 = vmatpush1.msra.mxu0 0.0
  %1700 = vmatprep.subr.mxu0 0.0
  %1701 = vmatpush1.msra.mxu0 0.0
  %1702 = vmatprep.subr.mxu0 0.0
  %1703 = vmatpush1.msra.mxu0 0.0
  %1704 = vmatprep.subr.mxu0 0.0
  %1705 = vmatpush1.msra.mxu0 0.0
  %1706 = vmatprep.subr.mxu0 0.0
  %1707 = vmatpush1.msra.mxu0 0.0
  %1708 = vmatprep.subr.mxu0 0.0
  %1709 = vmatpush1.msra.mxu0 0.0
  %1710 = vmatprep.subr.mxu0 0.0
  %1711 = vmatpush1.msra.mxu0 0.0
  %1712 = vmatprep.subr.mxu0 0.0
  %1713 = vmatpush1.msra.mxu0 0.0
  %1714 = vmatprep.subr.mxu0 0.0
  %1715 = vmatpush1.msra.mxu0 0.0
  %1716 = vmatprep.subr.mxu0 0.0
  %1717 = vmatpush1.msra.mxu0 0.0
  %1718 = vmatprep.subr.mxu0 0.0
  %1719 = vmatpush1.msra.mxu0 0.0
  %1720 = vmatprep.subr.mxu0 0.0
  %1721 = vmatpush1.msra.mxu0 0.0
  %1722 = vmatprep.subr.mxu0 0.0
  %1723 = vmatpush1.msra.mxu0 0.0
  %1724 = vmatprep.subr.mxu0 0.0
  %1725 = vmatpush1.msra.mxu0 0.0
  %1726 = vmatprep.subr.mxu0 0.0
  %1727 = vmatpush1.msra.mxu0 0.0
  %1728 = vmatprep.subr.mxu0 0.0
  %1729 = vmatpush1.msra.mxu0 0.0
  %1730 = vmatprep.subr.mxu0 0.0
  %1731 = vmatpush1.msra.mxu0 0.0
  %1732 = vmatprep.subr.mxu0 0.0
  %1733 = vmatpush1.msra.mxu0 0.0
  %1734 = vmatprep.subr.mxu0 0.0
  %1735 = vmatpush1.msra.mxu0 0.0
  %1736 = vmatprep.subr.mxu0 0.0
  %1737 = vmatpush1.msra.mxu0 0.0
  %1738 = vmatprep.subr.mxu0 0.0
  %1739 = vmatpush1.msra.mxu0 0.0
  %1740 = vmatprep.subr.mxu0 0.0
  %1741 = vmatpush1.msra.mxu0 0.0
  %1742 = vmatprep.subr.mxu0 0.0
  %1743 = vmatpush1.msra.mxu0 0.0
  %1744 = vmatprep.subr.mxu0 0.0
  %1745 = vmatpush1.msra.mxu0 0.0
  %1746 = vmatprep.subr.mxu0 0.0
  %1747 = vmatpush1.msra.mxu0 0.0
  %1748 = vmatprep.subr.mxu0 0.0
  %1749 = vmatpush1.msra.mxu0 0.0
  %1750 = vmatprep.subr.mxu0 0.0
  %1751 = vmatpush1.msra.mxu0 0.0
  %1752 = vmatprep.subr.mxu0 0.0
  %1753 = vmatpush1.msra.mxu0 0.0
  %1754 = vmatprep.mubr.f32.mxu0 0.0
  %1755 = vmatmul.mubr.f32.gmra.mrb[0].mxu0 %v612
  %v1756 = vpop.f32.mrb[0].mxu0
  %v1757 = vadd.f32 0.0, %v1756
  %v1758 = vpop.f32.mrb[0].mxu0
  %1759 = vdwg.mxu0
  %1760 = vmatprep.subr.mxu0 0.0
  %1761 = vmatpush1.msra.mxu0 %v1265
  %1762 = vmatprep.subr.mxu0 0.0
  %1763 = vmatpush1.msra.mxu0 0.0
  %1764 = vmatprep.subr.mxu0 0.0
  %1765 = vmatpush1.msra.mxu0 0.0
  %1766 = vmatprep.subr.mxu0 0.0
  %1767 = vmatpush1.msra.mxu0 0.0
  %1768 = vmatprep.subr.mxu0 0.0
  %1769 = vmatpush1.msra.mxu0 0.0
  %1770 = vmatprep.subr.mxu0 0.0
  %1771 = vmatpush1.msra.mxu0 0.0
  %1772 = vmatprep.subr.mxu0 0.0
  %1773 = vmatpush1.msra.mxu0 0.0
  %1774 = vmatprep.subr.mxu0 0.0
  %1775 = vmatpush1.msra.mxu0 0.0
  %1776 = vmatprep.subr.mxu0 0.0
  %1777 = vmatpush1.msra.mxu0 0.0
  %1778 = vmatprep.subr.mxu0 0.0
  %1779 = vmatpush1.msra.mxu0 0.0
  %1780 = vmatprep.subr.mxu0 0.0
  %1781 = vmatpush1.msra.mxu0 0.0
  %1782 = vmatprep.subr.mxu0 0.0
  %1783 = vmatpush1.msra.mxu0 0.0
  %1784 = vmatprep.subr.mxu0 0.0
  %1785 = vmatpush1.msra.mxu0 0.0
  %1786 = vmatprep.subr.mxu0 0.0
  %1787 = vmatpush1.msra.mxu0 0.0
  %1788 = vmatprep.subr.mxu0 0.0
  %1789 = vmatpush1.msra.mxu0 0.0
  %1790 = vmatprep.subr.mxu0 0.0
  %1791 = vmatpush1.msra.mxu0 0.0
  %1792 = vmatprep.subr.mxu0 0.0
  %1793 = vmatpush1.msra.mxu0 0.0
  %1794 = vmatprep.subr.mxu0 0.0
  %1795 = vmatpush1.msra.mxu0 0.0
  %1796 = vmatprep.subr.mxu0 0.0
  %1797 = vmatpush1.msra.mxu0 0.0
  %1798 = vmatprep.subr.mxu0 0.0
  %1799 = vmatpush1.msra.mxu0 0.0
  %1800 = vmatprep.subr.mxu0 0.0
  %1801 = vmatpush1.msra.mxu0 0.0
  %1802 = vmatprep.subr.mxu0 0.0
  %1803 = vmatpush1.msra.mxu0 0.0
  %1804 = vmatprep.subr.mxu0 0.0
  %1805 = vmatpush1.msra.mxu0 0.0
  %1806 = vmatprep.subr.mxu0 0.0
  %1807 = vmatpush1.msra.mxu0 0.0
  %1808 = vmatprep.subr.mxu0 0.0
  %1809 = vmatpush1.msra.mxu0 0.0
  %1810 = vmatprep.subr.mxu0 0.0
  %1811 = vmatpush1.msra.mxu0 0.0
  %1812 = vmatprep.subr.mxu0 0.0
  %1813 = vmatpush1.msra.mxu0 0.0
  %1814 = vmatprep.subr.mxu0 0.0
  %1815 = vmatpush1.msra.mxu0 0.0
  %1816 = vmatprep.subr.mxu0 0.0
  %1817 = vmatpush1.msra.mxu0 0.0
  %1818 = vmatprep.subr.mxu0 0.0
  %1819 = vmatpush1.msra.mxu0 0.0
  %1820 = vmatprep.subr.mxu0 0.0
  %1821 = vmatpush1.msra.mxu0 0.0
  %1822 = vmatprep.subr.mxu0 0.0
  %1823 = vmatpush1.msra.mxu0 0.0
  %1824 = vmatprep.mubr.f32.mxu0 0.0
  %1825 = vmatmul.mubr.f32.gmra.mrb[0].mxu0 %v685
  %v1826 = vpop.f32.mrb[0].mxu0
  %v1827 = vadd.f32 0.0, %v1826
  %v1828 = vpop.f32.mrb[0].mxu0
  %1829 = vdwg.mxu0
  %1830 = vmatprep.subr.mxu0 0.0
  %1831 = vmatpush1.msra.mxu0 %v1266
  %1832 = vmatprep.subr.mxu0 0.0
  %1833 = vmatpush1.msra.mxu0 0.0
  %1834 = vmatprep.subr.mxu0 0.0
  %1835 = vmatpush1.msra.mxu0 0.0
  %1836 = vmatprep.subr.mxu0 0.0
  %1837 = vmatpush1.msra.mxu0 0.0
  %1838 = vmatprep.subr.mxu0 0.0
  %1839 = vmatpush1.msra.mxu0 0.0
  %1840 = vmatprep.subr.mxu0 0.0
  %1841 = vmatpush1.msra.mxu0 0.0
  %1842 = vmatprep.subr.mxu0 0.0
  %1843 = vmatpush1.msra.mxu0 0.0
  %1844 = vmatprep.subr.mxu0 0.0
  %1845 = vmatpush1.msra.mxu0 0.0
  %1846 = vmatprep.subr.mxu0 0.0
  %1847 = vmatpush1.msra.mxu0 0.0
  %1848 = vmatprep.subr.mxu0 0.0
  %1849 = vmatpush1.msra.mxu0 0.0
  %1850 = vmatprep.subr.mxu0 0.0
  %1851 = vmatpush1.msra.mxu0 0.0
  %1852 = vmatprep.subr.mxu0 0.0
  %1853 = vmatpush1.msra.mxu0 0.0
  %1854 = vmatprep.subr.mxu0 0.0
  %1855 = vmatpush1.msra.mxu0 0.0
  %1856 = vmatprep.subr.mxu0 0.0
  %1857 = vmatpush1.msra.mxu0 0.0
  %1858 = vmatprep.subr.mxu0 0.0
  %1859 = vmatpush1.msra.mxu0 0.0
  %1860 = vmatprep.subr.mxu0 0.0
  %1861 = vmatpush1.msra.mxu0 0.0
  %1862 = vmatprep.subr.mxu0 0.0
  %1863 = vmatpush1.msra.mxu0 0.0
  %1864 = vmatprep.subr.mxu0 0.0
  %1865 = vmatpush1.msra.mxu0 0.0
  %1866 = vmatprep.subr.mxu0 0.0
  %1867 = vmatpush1.msra.mxu0 0.0
  %1868 = vmatprep.subr.mxu0 0.0
  %1869 = vmatpush1.msra.mxu0 0.0
  %1870 = vmatprep.subr.mxu0 0.0
  %1871 = vmatpush1.msra.mxu0 0.0
  %1872 = vmatprep.subr.mxu0 0.0
  %1873 = vmatpush1.msra.mxu0 0.0
  %1874 = vmatprep.subr.mxu0 0.0
  %1875 = vmatpush1.msra.mxu0 0.0
  %1876 = vmatprep.subr.mxu0 0.0
  %1877 = vmatpush1.msra.mxu0 0.0
  %1878 = vmatprep.subr.mxu0 0.0
  %1879 = vmatpush1.msra.mxu0 0.0
  %1880 = vmatprep.subr.mxu0 0.0
  %1881 = vmatpush1.msra.mxu0 0.0
  %1882 = vmatprep.subr.mxu0 0.0
  %1883 = vmatpush1.msra.mxu0 0.0
  %1884 = vmatprep.subr.mxu0 0.0
  %1885 = vmatpush1.msra.mxu0 0.0
  %1886 = vmatprep.subr.mxu0 0.0
  %1887 = vmatpush1.msra.mxu0 0.0
  %1888 = vmatprep.subr.mxu0 0.0
  %1889 = vmatpush1.msra.mxu0 0.0
  %1890 = vmatprep.subr.mxu0 0.0
  %1891 = vmatpush1.msra.mxu0 0.0
  %1892 = vmatprep.subr.mxu0 0.0
  %1893 = vmatpush1.msra.mxu0 0.0
  %1894 = vmatprep.mubr.f32.mxu0 0.0
  %1895 = vmatmul.mubr.f32.gmra.mrb[0].mxu0 %v758
  %v1896 = vpop.f32.mrb[0].mxu0
  %v1897 = vadd.f32 0.0, %v1896
  %v1898 = vpop.f32.mrb[0].mxu0
  %1899 = vdwg.mxu0
  %1900 = vmatprep.subr.mxu0 0.0
  %1901 = vmatpush1.msra.mxu0 %v1267
  %1902 = vmatprep.subr.mxu0 0.0
  %1903 = vmatpush1.msra.mxu0 0.0
  %1904 = vmatprep.subr.mxu0 0.0
  %1905 = vmatpush1.msra.mxu0 0.0
  %1906 = vmatprep.subr.mxu0 0.0
  %1907 = vmatpush1.msra.mxu0 0.0
  %1908 = vmatprep.subr.mxu0 0.0
  %1909 = vmatpush1.msra.mxu0 0.0
  %1910 = vmatprep.subr.mxu0 0.0
  %1911 = vmatpush1.msra.mxu0 0.0
  %1912 = vmatprep.subr.mxu0 0.0
  %1913 = vmatpush1.msra.mxu0 0.0
  %1914 = vmatprep.subr.mxu0 0.0
  %1915 = vmatpush1.msra.mxu0 0.0
  %1916 = vmatprep.subr.mxu0 0.0
  %1917 = vmatpush1.msra.mxu0 0.0
  %1918 = vmatprep.subr.mxu0 0.0
  %1919 = vmatpush1.msra.mxu0 0.0
  %1920 = vmatprep.subr.mxu0 0.0
  %1921 = vmatpush1.msra.mxu0 0.0
  %1922 = vmatprep.subr.mxu0 0.0
  %1923 = vmatpush1.msra.mxu0 0.0
  %1924 = vmatprep.subr.mxu0 0.0
  %1925 = vmatpush1.msra.mxu0 0.0
  %1926 = vmatprep.subr.mxu0 0.0
  %1927 = vmatpush1.msra.mxu0 0.0
  %1928 = vmatprep.subr.mxu0 0.0
  %1929 = vmatpush1.msra.mxu0 0.0
  %1930 = vmatprep.subr.mxu0 0.0
  %1931 = vmatpush1.msra.mxu0 0.0
  %1932 = vmatprep.subr.mxu0 0.0
  %1933 = vmatpush1.msra.mxu0 0.0
  %1934 = vmatprep.subr.mxu0 0.0
  %1935 = vmatpush1.msra.mxu0 0.0
  %1936 = vmatprep.subr.mxu0 0.0
  %1937 = vmatpush1.msra.mxu0 0.0
  %1938 = vmatprep.subr.mxu0 0.0
  %1939 = vmatpush1.msra.mxu0 0.0
  %1940 = vmatprep.subr.mxu0 0.0
  %1941 = vmatpush1.msra.mxu0 0.0
  %1942 = vmatprep.subr.mxu0 0.0
  %1943 = vmatpush1.msra.mxu0 0.0
  %1944 = vmatprep.subr.mxu0 0.0
  %1945 = vmatpush1.msra.mxu0 0.0
  %1946 = vmatprep.subr.mxu0 0.0
  %1947 = vmatpush1.msra.mxu0 0.0
  %1948 = vmatprep.subr.mxu0 0.0
  %1949 = vmatpush1.msra.mxu0 0.0
  %1950 = vmatprep.subr.mxu0 0.0
  %1951 = vmatpush1.msra.mxu0 0.0
  %1952 = vmatprep.subr.mxu0 0.0
  %1953 = vmatpush1.msra.mxu0 0.0
  %1954 = vmatprep.subr.mxu0 0.0
  %1955 = vmatpush1.msra.mxu0 0.0
  %1956 = vmatprep.subr.mxu0 0.0
  %1957 = vmatpush1.msra.mxu0 0.0
  %1958 = vmatprep.subr.mxu0 0.0
  %1959 = vmatpush1.msra.mxu0 0.0
  %1960 = vmatprep.subr.mxu0 0.0
  %1961 = vmatpush1.msra.mxu0 0.0
  %1962 = vmatprep.subr.mxu0 0.0
  %1963 = vmatpush1.msra.mxu0 0.0
  %1964 = vmatprep.mubr.f32.mxu0 0.0
  %1965 = vmatmul.mubr.f32.gmra.mrb[0].mxu0 %v831
  %v1966 = vpop.f32.mrb[0].mxu0
  %v1967 = vadd.f32 0.0, %v1966
  %v1968 = vpop.f32.mrb[0].mxu0
  %1969 = vdwg.mxu0
  %1970 = vmatprep.subr.mxu0 0.0
  %1971 = vmatpush1.msra.mxu0 %v1268
  %1972 = vmatprep.subr.mxu0 0.0
  %1973 = vmatpush1.msra.mxu0 0.0
  %1974 = vmatprep.subr.mxu0 0.0
  %1975 = vmatpush1.msra.mxu0 0.0
  %1976 = vmatprep.subr.mxu0 0.0
  %1977 = vmatpush1.msra.mxu0 0.0
  %1978 = vmatprep.subr.mxu0 0.0
  %1979 = vmatpush1.msra.mxu0 0.0
  %1980 = vmatprep.subr.mxu0 0.0
  %1981 = vmatpush1.msra.mxu0 0.0
  %1982 = vmatprep.subr.mxu0 0.0
  %1983 = vmatpush1.msra.mxu0 0.0
  %1984 = vmatprep.subr.mxu0 0.0
  %1985 = vmatpush1.msra.mxu0 0.0
  %1986 = vmatprep.subr.mxu0 0.0
  %1987 = vmatpush1.msra.mxu0 0.0
  %1988 = vmatprep.subr.mxu0 0.0
  %1989 = vmatpush1.msra.mxu0 0.0
  %1990 = vmatprep.subr.mxu0 0.0
  %1991 = vmatpush1.msra.mxu0 0.0
  %1992 = vmatprep.subr.mxu0 0.0
  %1993 = vmatpush1.msra.mxu0 0.0
  %1994 = vmatprep.subr.mxu0 0.0
  %1995 = vmatpush1.msra.mxu0 0.0
  %1996 = vmatprep.subr.mxu0 0.0
  %1997 = vmatpush1.msra.mxu0 0.0
  %1998 = vmatprep.subr.mxu0 0.0
  %1999 = vmatpush1.msra.mxu0 0.0
  %2000 = vmatprep.subr.mxu0 0.0
  %2001 = vmatpush1.msra.mxu0 0.0
  %2002 = vmatprep.subr.mxu0 0.0
  %2003 = vmatpush1.msra.mxu0 0.0
  %2004 = vmatprep.subr.mxu0 0.0
  %2005 = vmatpush1.msra.mxu0 0.0
  %2006 = vmatprep.subr.mxu0 0.0
  %2007 = vmatpush1.msra.mxu0 0.0
  %2008 = vmatprep.subr.mxu0 0.0
  %2009 = vmatpush1.msra.mxu0 0.0
  %2010 = vmatprep.subr.mxu0 0.0
  %2011 = vmatpush1.msra.mxu0 0.0
  %2012 = vmatprep.subr.mxu0 0.0
  %2013 = vmatpush1.msra.mxu0 0.0
  %2014 = vmatprep.subr.mxu0 0.0
  %2015 = vmatpush1.msra.mxu0 0.0
  %2016 = vmatprep.subr.mxu0 0.0
  %2017 = vmatpush1.msra.mxu0 0.0
  %2018 = vmatprep.subr.mxu0 0.0
  %2019 = vmatpush1.msra.mxu0 0.0
  %2020 = vmatprep.subr.mxu0 0.0
  %2021 = vmatpush1.msra.mxu0 0.0
  %2022 = vmatprep.subr.mxu0 0.0
  %2023 = vmatpush1.msra.mxu0 0.0
  %2024 = vmatprep.subr.mxu0 0.0
  %2025 = vmatpush1.msra.mxu0 0.0
  %2026 = vmatprep.subr.mxu0 0.0
  %2027 = vmatpush1.msra.mxu0 0.0
  %2028 = vmatprep.subr.mxu0 0.0
  %2029 = vmatpush1.msra.mxu0 0.0
  %2030 = vmatprep.subr.mxu0 0.0
  %2031 = vmatpush1.msra.mxu0 0.0
  %2032 = vmatprep.subr.mxu0 0.0
  %2033 = vmatpush1.msra.mxu0 0.0
  %2034 = vmatprep.mubr.f32.mxu0 0.0
  %2035 = vmatmul.mubr.f32.gmra.mrb[0].mxu0 %v904
  %v2036 = vpop.f32.mrb[0].mxu0
  %v2037 = vadd.f32 0.0, %v2036
  %v2038 = vpop.f32.mrb[0].mxu0
  %2039 = vdwg.mxu0
  %2040 = vmatprep.subr.mxu0 0.0
  %2041 = vmatpush1.msra.mxu0 %v1269
  %2042 = vmatprep.subr.mxu0 0.0
  %2043 = vmatpush1.msra.mxu0 0.0
  %2044 = vmatprep.subr.mxu0 0.0
  %2045 = vmatpush1.msra.mxu0 0.0
  %2046 = vmatprep.subr.mxu0 0.0
  %2047 = vmatpush1.msra.mxu0 0.0
  %2048 = vmatprep.subr.mxu0 0.0
  %2049 = vmatpush1.msra.mxu0 0.0
  %2050 = vmatprep.subr.mxu0 0.0
  %2051 = vmatpush1.msra.mxu0 0.0
  %2052 = vmatprep.subr.mxu0 0.0
  %2053 = vmatpush1.msra.mxu0 0.0
  %2054 = vmatprep.subr.mxu0 0.0
  %2055 = vmatpush1.msra.mxu0 0.0
  %2056 = vmatprep.subr.mxu0 0.0
  %2057 = vmatpush1.msra.mxu0 0.0
  %2058 = vmatprep.subr.mxu0 0.0
  %2059 = vmatpush1.msra.mxu0 0.0
  %2060 = vmatprep.subr.mxu0 0.0
  %2061 = vmatpush1.msra.mxu0 0.0
  %2062 = vmatprep.subr.mxu0 0.0
  %2063 = vmatpush1.msra.mxu0 0.0
  %2064 = vmatprep.subr.mxu0 0.0
  %2065 = vmatpush1.msra.mxu0 0.0
  %2066 = vmatprep.subr.mxu0 0.0
  %2067 = vmatpush1.msra.mxu0 0.0
  %2068 = vmatprep.subr.mxu0 0.0
  %2069 = vmatpush1.msra.mxu0 0.0
  %2070 = vmatprep.subr.mxu0 0.0
  %2071 = vmatpush1.msra.mxu0 0.0
  %2072 = vmatprep.subr.mxu0 0.0
  %2073 = vmatpush1.msra.mxu0 0.0
  %2074 = vmatprep.subr.mxu0 0.0
  %2075 = vmatpush1.msra.mxu0 0.0
  %2076 = vmatprep.subr.mxu0 0.0
  %2077 = vmatpush1.msra.mxu0 0.0
  %2078 = vmatprep.subr.mxu0 0.0
  %2079 = vmatpush1.msra.mxu0 0.0
  %2080 = vmatprep.subr.mxu0 0.0
  %2081 = vmatpush1.msra.mxu0 0.0
  %2082 = vmatprep.subr.mxu0 0.0
  %2083 = vmatpush1.msra.mxu0 0.0
  %2084 = vmatprep.subr.mxu0 0.0
  %2085 = vmatpush1.msra.mxu0 0.0
  %2086 = vmatprep.subr.mxu0 0.0
  %2087 = vmatpush1.msra.mxu0 0.0
  %2088 = vmatprep.subr.mxu0 0.0
  %2089 = vmatpush1.msra.mxu0 0.0
  %2090 = vmatprep.subr.mxu0 0.0
  %2091 = vmatpush1.msra.mxu0 0.0
  %2092 = vmatprep.subr.mxu0 0.0
  %2093 = vmatpush1.msra.mxu0 0.0
  %2094 = vmatprep.subr.mxu0 0.0
  %2095 = vmatpush1.msra.mxu0 0.0
  %2096 = vmatprep.subr.mxu0 0.0
  %2097 = vmatpush1.msra.mxu0 0.0
  %2098 = vmatprep.subr.mxu0 0.0
  %2099 = vmatpush1.msra.mxu0 0.0
  %2100 = vmatprep.subr.mxu0 0.0
  %2101 = vmatpush1.msra.mxu0 0.0
  %2102 = vmatprep.subr.mxu0 0.0
  %2103 = vmatpush1.msra.mxu0 0.0
  %2104 = vmatprep.mubr.f32.mxu0 0.0
  %2105 = vmatmul.mubr.f32.gmra.mrb[0].mxu0 %v977
  %v2106 = vpop.f32.mrb[0].mxu0
  %v2107 = vadd.f32 0.0, %v2106
  %v2108 = vpop.f32.mrb[0].mxu0
  %2109 = vdwg.mxu0
  %v2110 = vmul.f32 %v148, %v1337
  %v2111 = vmul.f32 %v149, %v1407
  %v2112 = vmul.f32 %v150, %v1477
  %v2113 = vmul.f32 %v151, %v1547
  %v2114 = vmul.f32 %v152, %v1617
  %v2115 = vmul.f32 %v153, %v1687
  %v2116 = vmul.f32 %v154, %v1757
  %v2117 = vmul.f32 %v155, %v1827
  %v2118 = vmul.f32 %v156, %v1897
  %v2119 = vmul.f32 %v157, %v1967
  %v2120 = vmul.f32 %v158, %v2037
  %v2121 = vmul.f32 %v159, %v2107
  %v2123 = vlaneseq
  %v2124 = vshrl.u32 %v2123, 7
  %v2125 = vsub.s32 0, %v2124
  %v2126 = vrot.slane %v1095, %v2125
  %v2128 = vadd.f32 %v2110, %v2126
  %v2129 = vadd.f32 %v2111, %v2126
  %v2130 = vadd.f32 %v2112, %v2126
  %v2131 = vadd.f32 %v2113, %v2126
  %v2132 = vadd.f32 %v2114, %v2126
  %v2133 = vadd.f32 %v2115, %v2126
  %v2134 = vadd.f32 %v2116, %v2126
  %v2135 = vadd.f32 %v2117, %v2126
  %v2136 = vadd.f32 %v2118, %v2126
  %v2137 = vadd.f32 %v2119, %v2126
  %v2138 = vadd.f32 %v2120, %v2126
  %v2139 = vadd.f32 %v2121, %v2126
  %v2140 = vld [vmem:[%s5] sm:$0x1]
  %v2141 = vld [vmem:[%s6] sm:$0x1]
  %v2142 = vadd.f32 %v2140, %v2141
  %v2144 = vlaneseq
  %v2145 = vshrl.u32 %v2144, 7
  %v2146 = vsub.s32 0, %v2145
  %v2147 = vrot.slane %v2142, %v2146
  %v2149 = vld [vmem:[%s6 + $0x1] sm:$0x1]
  %v2150 = vlaneseq
  %v2151 = vshrl.u32 %v2150, 7
  %v2152 = vsub.s32 0, %v2151
  %v2153 = vrot.slane %v2149, %v2152
  %v2154 = vadd.f32 %v2128, %v2153
  %v2155 = vadd.f32 %v2134, %v2153
  %v2156 = vld [vmem:[%s6 + $0x2] sm:$0x1]
  %v2157 = vlaneseq
  %v2158 = vshrl.u32 %v2157, 7
  %v2159 = vsub.s32 0, %v2158
  %v2160 = vrot.slane %v2156, %v2159
  %v2161 = vadd.f32 %v2129, %v2160
  %v2162 = vadd.f32 %v2135, %v2160
  %v2163 = vld [vmem:[%s6 + $0x3] sm:$0x1]
  %v2164 = vlaneseq
  %v2165 = vshrl.u32 %v2164, 7
  %v2166 = vsub.s32 0, %v2165
  %v2167 = vrot.slane %v2163, %v2166
  %v2168 = vadd.f32 %v2130, %v2167
  %v2169 = vadd.f32 %v2136, %v2167
  %v2170 = vld [vmem:[%s6 + $0x4] sm:$0x1]
  %v2171 = vlaneseq
  %v2172 = vshrl.u32 %v2171, 7
  %v2173 = vsub.s32 0, %v2172
  %v2174 = vrot.slane %v2170, %v2173
  %v2175 = vadd.f32 %v2131, %v2174
  %v2176 = vadd.f32 %v2137, %v2174
  %v2177 = vld [vmem:[%s6 + $0x5] sm:$0x1]
  %v2178 = vlaneseq
  %v2179 = vshrl.u32 %v2178, 7
  %v2180 = vsub.s32 0, %v2179
  %v2181 = vrot.slane %v2177, %v2180
  %v2182 = vadd.f32 %v2132, %v2181
  %v2183 = vadd.f32 %v2138, %v2181
  %v2184 = vld [vmem:[%s6 + $0x6] sm:$0x1]
  %v2185 = vlaneseq
  %v2186 = vshrl.u32 %v2185, 7
  %v2187 = vsub.s32 0, %v2186
  %v2188 = vrot.slane %v2184, %v2187
  %v2189 = vadd.f32 %v2133, %v2188
  %v2190 = vadd.f32 %v2139, %v2188
  %v2191 = vld [vmem:[%s7] sm:$0xff]
  %v2192 = vld [vmem:[%s7 + $0x8] sm:$0xff]
  %v2193 = vld [vmem:[%s7 + $0x10] sm:$0xff]
  %v2194 = vld [vmem:[%s7 + $0x18] sm:$0xff]
  %v2195 = vld [vmem:[%s7 + $0x20] sm:$0xff]
  %v2196 = vld [vmem:[%s7 + $0x28] sm:$0xff]
  %v2197 = vld [vmem:[%s7 + $0x30] sm:$0xff]
  %v2198 = vld [vmem:[%s7 + $0x38] sm:$0xff]
  %v2199 = vld [vmem:[%s7 + $0x40] sm:$0xff]
  %v2200 = vld [vmem:[%s7 + $0x48] sm:$0xff]
  %v2201 = vld [vmem:[%s7 + $0x50] sm:$0xff]
  %v2202 = vld [vmem:[%s7 + $0x58] sm:$0xff]
  %v2203 = vld [vmem:[%s7 + $0x60] sm:$0xff]
  %v2204 = vld [vmem:[%s7 + $0x68] sm:$0xff]
  %v2205 = vld [vmem:[%s8] sm:$0x1]
  %v2206 = vld [vmem:[%s9] sm:$0x1]
  %vm2207 = vcmask 261120
  %v2208 = vsel %vm2207, %v2147, 0.0
  %2209 = vadd.xlane.f32.xlu0 %v2208
  %v2210 = vpop.xlane.xlu0 %2209
  %v2211 = vsel %vm2207, %v2154, 0.0
  %2212 = vadd.xlane.f32.xlu0 %v2211
  %v2213 = vpop.xlane.xlu0 %2212
  %v2214 = vsel %vm2207, %v2155, 0.0
  %2215 = vadd.xlane.f32.xlu0 %v2214
  %v2216 = vpop.xlane.xlu0 %2215
  %v2217 = vsel %vm2207, %v2161, 0.0
  %2218 = vadd.xlane.f32.xlu0 %v2217
  %v2219 = vpop.xlane.xlu0 %2218
  %v2220 = vsel %vm2207, %v2162, 0.0
  %2221 = vadd.xlane.f32.xlu0 %v2220
  %v2222 = vpop.xlane.xlu0 %2221
  %v2223 = vsel %vm2207, %v2168, 0.0
  %2224 = vadd.xlane.f32.xlu0 %v2223
  %v2225 = vpop.xlane.xlu0 %2224
  %v2226 = vsel %vm2207, %v2169, 0.0
  %2227 = vadd.xlane.f32.xlu0 %v2226
  %v2228 = vpop.xlane.xlu0 %2227
  %v2229 = vsel %vm2207, %v2175, 0.0
  %2230 = vadd.xlane.f32.xlu0 %v2229
  %v2231 = vpop.xlane.xlu0 %2230
  %v2232 = vsel %vm2207, %v2176, 0.0
  %2233 = vadd.xlane.f32.xlu0 %v2232
  %v2234 = vpop.xlane.xlu0 %2233
  %v2235 = vsel %vm2207, %v2182, 0.0
  %2236 = vadd.xlane.f32.xlu0 %v2235
  %v2237 = vpop.xlane.xlu0 %2236
  %v2238 = vsel %vm2207, %v2183, 0.0
  %2239 = vadd.xlane.f32.xlu0 %v2238
  %v2240 = vpop.xlane.xlu0 %2239
  %v2241 = vsel %vm2207, %v2189, 0.0
  %2242 = vadd.xlane.f32.xlu0 %v2241
  %v2243 = vpop.xlane.xlu0 %2242
  %v2244 = vsel %vm2207, %v2190, 0.0
  %2245 = vadd.xlane.f32.xlu0 %v2244
  %v2246 = vpop.xlane.xlu0 %2245
  %v2247 = vrcp.pop 32.0
  %v2248 = vmul.f32 %v2210, %v2247
  %v2249 = vmul.f32 %v2213, %v2247
  %v2250 = vmul.f32 %v2216, %v2247
  %v2251 = vmul.f32 %v2219, %v2247
  %v2252 = vmul.f32 %v2222, %v2247
  %v2253 = vmul.f32 %v2225, %v2247
  %v2254 = vmul.f32 %v2228, %v2247
  %v2255 = vmul.f32 %v2231, %v2247
  %v2256 = vmul.f32 %v2234, %v2247
  %v2257 = vmul.f32 %v2237, %v2247
  %v2258 = vmul.f32 %v2240, %v2247
  %v2259 = vmul.f32 %v2243, %v2247
  %v2260 = vmul.f32 %v2246, %v2247
  %v2261 = vsub.f32 %v2147, %v2248
  %v2262 = vsub.f32 %v2154, %v2249
  %v2263 = vsub.f32 %v2155, %v2250
  %v2264 = vsub.f32 %v2161, %v2251
  %v2265 = vsub.f32 %v2162, %v2252
  %v2266 = vsub.f32 %v2168, %v2253
  %v2267 = vsub.f32 %v2169, %v2254
  %v2268 = vsub.f32 %v2175, %v2255
  %v2269 = vsub.f32 %v2176, %v2256
  %v2270 = vsub.f32 %v2182, %v2257
  %v2271 = vsub.f32 %v2183, %v2258
  %v2272 = vsub.f32 %v2189, %v2259
  %v2273 = vsub.f32 %v2190, %v2260
  %v2274 = vmul.f32 %v2261, %v2261
  %v2275 = vmul.f32 %v2262, %v2262
  %v2276 = vmul.f32 %v2263, %v2263
  %v2277 = vmul.f32 %v2264, %v2264
  %v2278 = vmul.f32 %v2265, %v2265
  %v2279 = vmul.f32 %v2266, %v2266
  %v2280 = vmul.f32 %v2267, %v2267
  %v2281 = vmul.f32 %v2268, %v2268
  %v2282 = vmul.f32 %v2269, %v2269
  %v2283 = vmul.f32 %v2270, %v2270
  %v2284 = vmul.f32 %v2271, %v2271
  %v2285 = vmul.f32 %v2272, %v2272
  %v2286 = vmul.f32 %v2273, %v2273
  %v2287 = vsel %vm2207, %v2274, 0.0
  %2288 = vadd.xlane.f32.xlu0 %v2287
  %v2289 = vpop.xlane.xlu0 %2288
  %v2290 = vsel %vm2207, %v2275, 0.0
  %2291 = vadd.xlane.f32.xlu0 %v2290
  %v2292 = vpop.xlane.xlu0 %2291
  %v2293 = vsel %vm2207, %v2276, 0.0
  %2294 = vadd.xlane.f32.xlu0 %v2293
  %v2295 = vpop.xlane.xlu0 %2294
  %v2296 = vsel %vm2207, %v2277, 0.0
  %2297 = vadd.xlane.f32.xlu0 %v2296
  %v2298 = vpop.xlane.xlu0 %2297
  %v2299 = vsel %vm2207, %v2278, 0.0
  %2300 = vadd.xlane.f32.xlu0 %v2299
  %v2301 = vpop.xlane.xlu0 %2300
  %v2302 = vsel %vm2207, %v2279, 0.0
  %2303 = vadd.xlane.f32.xlu0 %v2302
  %v2304 = vpop.xlane.xlu0 %2303
  %v2305 = vsel %vm2207, %v2280, 0.0
  %2306 = vadd.xlane.f32.xlu0 %v2305
  %v2307 = vpop.xlane.xlu0 %2306
  %v2308 = vsel %vm2207, %v2281, 0.0
  %2309 = vadd.xlane.f32.xlu0 %v2308
  %v2310 = vpop.xlane.xlu0 %2309
  %v2311 = vsel %vm2207, %v2282, 0.0
  %2312 = vadd.xlane.f32.xlu0 %v2311
  %v2313 = vpop.xlane.xlu0 %2312
  %v2314 = vsel %vm2207, %v2283, 0.0
  %2315 = vadd.xlane.f32.xlu0 %v2314
  %v2316 = vpop.xlane.xlu0 %2315
  %v2317 = vsel %vm2207, %v2284, 0.0
  %2318 = vadd.xlane.f32.xlu0 %v2317
  %v2319 = vpop.xlane.xlu0 %2318
  %v2320 = vsel %vm2207, %v2285, 0.0
  %2321 = vadd.xlane.f32.xlu0 %v2320
  %v2322 = vpop.xlane.xlu0 %2321
  %v2323 = vsel %vm2207, %v2286, 0.0
  %2324 = vadd.xlane.f32.xlu0 %v2323
  %v2325 = vpop.xlane.xlu0 %2324
  %v2326 = vmul.f32 %v2289, %v2247
  %v2327 = vmul.f32 %v2292, %v2247
  %v2328 = vmul.f32 %v2295, %v2247
  %v2329 = vmul.f32 %v2298, %v2247
  %v2330 = vmul.f32 %v2301, %v2247
  %v2331 = vmul.f32 %v2304, %v2247
  %v2332 = vmul.f32 %v2307, %v2247
  %v2333 = vmul.f32 %v2310, %v2247
  %v2334 = vmul.f32 %v2313, %v2247
  %v2335 = vmul.f32 %v2316, %v2247
  %v2336 = vmul.f32 %v2319, %v2247
  %v2337 = vmul.f32 %v2322, %v2247
  %v2338 = vmul.f32 %v2325, %v2247
  %v2339 = vadd.f32 %v2326, 1e-05
  %v2340 = vadd.f32 %v2327, 1e-05
  %v2341 = vadd.f32 %v2328, 1e-05
  %v2342 = vadd.f32 %v2329, 1e-05
  %v2343 = vadd.f32 %v2330, 1e-05
  %v2344 = vadd.f32 %v2331, 1e-05
  %v2345 = vadd.f32 %v2332, 1e-05
  %v2346 = vadd.f32 %v2333, 1e-05
  %v2347 = vadd.f32 %v2334, 1e-05
  %v2348 = vadd.f32 %v2335, 1e-05
  %v2349 = vadd.f32 %v2336, 1e-05
  %v2350 = vadd.f32 %v2337, 1e-05
  %v2351 = vadd.f32 %v2338, 1e-05
  %v2352 = vrsqrt.pop %v2339
  %v2353 = vrsqrt.pop %v2340
  %v2354 = vrsqrt.pop %v2341
  %v2355 = vrsqrt.pop %v2342
  %v2356 = vrsqrt.pop %v2343
  %v2357 = vrsqrt.pop %v2344
  %v2358 = vrsqrt.pop %v2345
  %v2359 = vrsqrt.pop %v2346
  %v2360 = vrsqrt.pop %v2347
  %v2361 = vrsqrt.pop %v2348
  %v2362 = vrsqrt.pop %v2349
  %v2363 = vrsqrt.pop %v2350
  %v2364 = vrsqrt.pop %v2351
  %v2365 = vmul.f32 %v2261, %v2352
  %v2366 = vmul.f32 %v2262, %v2353
  %v2367 = vmul.f32 %v2263, %v2354
  %v2368 = vmul.f32 %v2264, %v2355
  %v2369 = vmul.f32 %v2265, %v2356
  %v2370 = vmul.f32 %v2266, %v2357
  %v2371 = vmul.f32 %v2267, %v2358
  %v2372 = vmul.f32 %v2268, %v2359
  %v2373 = vmul.f32 %v2269, %v2360
  %v2374 = vmul.f32 %v2270, %v2361
  %v2375 = vmul.f32 %v2271, %v2362
  %v2376 = vmul.f32 %v2272, %v2363
  %v2377 = vmul.f32 %v2273, %v2364
  %v2379 = vlaneseq
  %v2380 = vshrl.u32 %v2379, 7
  %v2381 = vsub.s32 0, %v2380
  %v2382 = vrot.slane %v2205, %v2381
  %v2384 = vmul.f32 %v2365, %v2382
  %v2385 = vmul.f32 %v2366, %v2382
  %v2386 = vmul.f32 %v2367, %v2382
  %v2387 = vmul.f32 %v2368, %v2382
  %v2388 = vmul.f32 %v2369, %v2382
  %v2389 = vmul.f32 %v2370, %v2382
  %v2390 = vmul.f32 %v2371, %v2382
  %v2391 = vmul.f32 %v2372, %v2382
  %v2392 = vmul.f32 %v2373, %v2382
  %v2393 = vmul.f32 %v2374, %v2382
  %v2394 = vmul.f32 %v2375, %v2382
  %v2395 = vmul.f32 %v2376, %v2382
  %v2396 = vmul.f32 %v2377, %v2382
  %v2398 = vlaneseq
  %v2399 = vshrl.u32 %v2398, 7
  %v2400 = vsub.s32 0, %v2399
  %v2401 = vrot.slane %v2206, %v2400
  %v2403 = vadd.f32 %v2384, %v2401
  %v2404 = vadd.f32 %v2385, %v2401
  %v2405 = vadd.f32 %v2386, %v2401
  %v2406 = vadd.f32 %v2387, %v2401
  %v2407 = vadd.f32 %v2388, %v2401
  %v2408 = vadd.f32 %v2389, %v2401
  %v2409 = vadd.f32 %v2390, %v2401
  %v2410 = vadd.f32 %v2391, %v2401
  %v2411 = vadd.f32 %v2392, %v2401
  %v2412 = vadd.f32 %v2393, %v2401
  %v2413 = vadd.f32 %v2394, %v2401
  %v2414 = vadd.f32 %v2395, %v2401
  %v2415 = vadd.f32 %v2396, %v2401
  %v2416 = vld [vmem:[%s10] sm:$0xff]
  %v2417 = vld [vmem:[%s10 + $0x8] sm:$0xff]
  %v2418 = vld [vmem:[%s10 + $0x10] sm:$0xff]
  %v2419 = vld [vmem:[%s10 + $0x18] sm:$0xff]
  %v2420 = vld [vmem:[%s11] sm:$0x1]
  %v2422 = vlaneseq
  %v2423 = vshrl.u32 %v2422, 7
  %v2424 = vsub.s32 0, %v2423
  %v2425 = vrot.slane %v2420, %v2424
  %v2428 = vsel %vm2207, %v2403, 0
  %v2431 = vsel %vm2207, %v2404, 0
  %v2434 = vsel %vm2207, %v2405, 0
  %v2437 = vsel %vm2207, %v2406, 0
  %v2440 = vsel %vm2207, %v2407, 0
  %v2443 = vsel %vm2207, %v2408, 0
  %v2446 = vsel %vm2207, %v2409, 0
  %v2449 = vsel %vm2207, %v2410, 0
  %v2452 = vsel %vm2207, %v2411, 0
  %v2455 = vsel %vm2207, %v2412, 0
  %v2458 = vsel %vm2207, %v2413, 0
  %v2461 = vsel %vm2207, %v2414, 0
  %v2464 = vsel %vm2207, %v2415, 0
  %2466 = vmatprep.subr.mxu0 0.0
  %2467 = vmatpush1.msra.mxu0 %v2416
  %2468 = vmatprep.subr.mxu0 0.0
  %2469 = vmatpush1.msra.mxu0 %v2417
  %2470 = vmatprep.subr.mxu0 0.0
  %2471 = vmatpush1.msra.mxu0 %v2418
  %2472 = vmatprep.subr.mxu0 0.0
  %2473 = vmatpush1.msra.mxu0 %v2419
  %2474 = vmatprep.subr.mxu0 0.0
  %2475 = vmatpush1.msra.mxu0 0.0
  %2476 = vmatprep.subr.mxu0 0.0
  %2477 = vmatpush1.msra.mxu0 0.0
  %2478 = vmatprep.subr.mxu0 0.0
  %2479 = vmatpush1.msra.mxu0 0.0
  %2480 = vmatprep.subr.mxu0 0.0
  %2481 = vmatpush1.msra.mxu0 0.0
  %2482 = vmatprep.subr.mxu0 0.0
  %2483 = vmatpush1.msra.mxu0 0.0
  %2484 = vmatprep.subr.mxu0 0.0
  %2485 = vmatpush1.msra.mxu0 0.0
  %2486 = vmatprep.subr.mxu0 0.0
  %2487 = vmatpush1.msra.mxu0 0.0
  %2488 = vmatprep.subr.mxu0 0.0
  %2489 = vmatpush1.msra.mxu0 0.0
  %2490 = vmatprep.subr.mxu0 0.0
  %2491 = vmatpush1.msra.mxu0 0.0
  %2492 = vmatprep.subr.mxu0 0.0
  %2493 = vmatpush1.msra.mxu0 0.0
  %2494 = vmatprep.subr.mxu0 0.0
  %2495 = vmatpush1.msra.mxu0 0.0
  %2496 = vmatprep.subr.mxu0 0.0
  %2497 = vmatpush1.msra.mxu0 0.0
  %2498 = vmatprep.subr.mxu0 0.0
  %2499 = vmatpush1.msra.mxu0 0.0
  %2500 = vmatprep.subr.mxu0 0.0
  %2501 = vmatpush1.msra.mxu0 0.0
  %2502 = vmatprep.subr.mxu0 0.0
  %2503 = vmatpush1.msra.mxu0 0.0
  %2504 = vmatprep.subr.mxu0 0.0
  %2505 = vmatpush1.msra.mxu0 0.0
  %2506 = vmatprep.subr.mxu0 0.0
  %2507 = vmatpush1.msra.mxu0 0.0
  %2508 = vmatprep.subr.mxu0 0.0
  %2509 = vmatpush1.msra.mxu0 0.0
  %2510 = vmatprep.subr.mxu0 0.0
  %2511 = vmatpush1.msra.mxu0 0.0
  %2512 = vmatprep.subr.mxu0 0.0
  %2513 = vmatpush1.msra.mxu0 0.0
  %2514 = vmatprep.subr.mxu0 0.0
  %2515 = vmatpush1.msra.mxu0 0.0
  %2516 = vmatprep.subr.mxu0 0.0
  %2517 = vmatpush1.msra.mxu0 0.0
  %2518 = vmatprep.subr.mxu0 0.0
  %2519 = vmatpush1.msra.mxu0 0.0
  %2520 = vmatprep.subr.mxu0 0.0
  %2521 = vmatpush1.msra.mxu0 0.0
  %2522 = vmatprep.subr.mxu0 0.0
  %2523 = vmatpush1.msra.mxu0 0.0
  %2524 = vmatprep.subr.mxu0 0.0
  %2525 = vmatpush1.msra.mxu0 0.0
  %2526 = vmatprep.subr.mxu0 0.0
  %2527 = vmatpush1.msra.mxu0 0.0
  %2528 = vmatprep.subr.mxu0 0.0
  %2529 = vmatpush1.msra.mxu0 0.0
  %2530 = vmatprep.mubr.f32.mxu0 0.0
  %2531 = vmatmul.mubr.f32.gmra.mrb[0].mxu0 %v2428
  %v2532 = vpop.f32.mrb[0].mxu0
  %v2533 = vadd.f32 %v2425, %v2532
  %v2534 = vpop.f32.mrb[0].mxu0
  %2535 = vmatprep.mubr.f32.mxu0 0.0
  %2536 = vmatmul.mubr.f32.gmra.mrb[0].mxu0 %v2428
  %v2537 = vpop.f32.mrb[0].mxu0
  %v2538 = vadd.f32 %v2425, %v2537
  %v2539 = vpop.f32.mrb[0].mxu0
  %2540 = vmatprep.mubr.f32.mxu0 0.0
  %2541 = vmatmul.mubr.f32.gmra.mrb[0].mxu0 %v2431
  %v2542 = vpop.f32.mrb[0].mxu0
  %v2543 = vadd.f32 %v2425, %v2542
  %v2544 = vpop.f32.mrb[0].mxu0
  %2545 = vmatprep.mubr.f32.mxu0 0.0
  %2546 = vmatmul.mubr.f32.gmra.mrb[0].mxu0 %v2434
  %v2547 = vpop.f32.mrb[0].mxu0
  %v2548 = vadd.f32 %v2425, %v2547
  %v2549 = vpop.f32.mrb[0].mxu0
  %2550 = vmatprep.mubr.f32.mxu0 0.0
  %2551 = vmatmul.mubr.f32.gmra.mrb[0].mxu0 %v2437
  %v2552 = vpop.f32.mrb[0].mxu0
  %v2553 = vadd.f32 %v2425, %v2552
  %v2554 = vpop.f32.mrb[0].mxu0
  %2555 = vmatprep.mubr.f32.mxu0 0.0
  %2556 = vmatmul.mubr.f32.gmra.mrb[0].mxu0 %v2440
  %v2557 = vpop.f32.mrb[0].mxu0
  %v2558 = vadd.f32 %v2425, %v2557
  %v2559 = vpop.f32.mrb[0].mxu0
  %2560 = vmatprep.mubr.f32.mxu0 0.0
  %2561 = vmatmul.mubr.f32.gmra.mrb[0].mxu0 %v2443
  %v2562 = vpop.f32.mrb[0].mxu0
  %v2563 = vadd.f32 %v2425, %v2562
  %v2564 = vpop.f32.mrb[0].mxu0
  %2565 = vmatprep.mubr.f32.mxu0 0.0
  %2566 = vmatmul.mubr.f32.gmra.mrb[0].mxu0 %v2446
  %v2567 = vpop.f32.mrb[0].mxu0
  %v2568 = vadd.f32 %v2425, %v2567
  %v2569 = vpop.f32.mrb[0].mxu0
  %2570 = vmatprep.mubr.f32.mxu0 0.0
  %2571 = vmatmul.mubr.f32.gmra.mrb[0].mxu0 %v2449
  %v2572 = vpop.f32.mrb[0].mxu0
  %v2573 = vadd.f32 %v2425, %v2572
  %v2574 = vpop.f32.mrb[0].mxu0
  %2575 = vmatprep.mubr.f32.mxu0 0.0
  %2576 = vmatmul.mubr.f32.gmra.mrb[0].mxu0 %v2452
  %v2577 = vpop.f32.mrb[0].mxu0
  %v2578 = vadd.f32 %v2425, %v2577
  %v2579 = vpop.f32.mrb[0].mxu0
  %2580 = vmatprep.mubr.f32.mxu0 0.0
  %2581 = vmatmul.mubr.f32.gmra.mrb[0].mxu0 %v2455
  %v2582 = vpop.f32.mrb[0].mxu0
  %v2583 = vadd.f32 %v2425, %v2582
  %v2584 = vpop.f32.mrb[0].mxu0
  %2585 = vmatprep.mubr.f32.mxu0 0.0
  %2586 = vmatmul.mubr.f32.gmra.mrb[0].mxu0 %v2458
  %v2587 = vpop.f32.mrb[0].mxu0
  %v2588 = vadd.f32 %v2425, %v2587
  %v2589 = vpop.f32.mrb[0].mxu0
  %2590 = vmatprep.mubr.f32.mxu0 0.0
  %2591 = vmatmul.mubr.f32.gmra.mrb[0].mxu0 %v2461
  %v2592 = vpop.f32.mrb[0].mxu0
  %v2593 = vadd.f32 %v2425, %v2592
  %v2594 = vpop.f32.mrb[0].mxu0
  %2595 = vmatprep.mubr.f32.mxu0 0.0
  %2596 = vmatmul.mubr.f32.gmra.mrb[0].mxu0 %v2464
  %v2597 = vpop.f32.mrb[0].mxu0
  %v2598 = vadd.f32 %v2425, %v2597
  %v2599 = vpop.f32.mrb[0].mxu0
  %2600 = vdwg.mxu0
  %2615 = vrot.lane.b32.xlu0 %v2533, 96
  %v2616 = vpop.permute.xlu0 %2615
  %2617 = vrot.lane.b32.xlu0 %v2538, 96
  %v2618 = vpop.permute.xlu0 %2617
  %2619 = vrot.lane.b32.xlu0 %v2543, 96
  %v2620 = vpop.permute.xlu0 %2619
  %2621 = vrot.lane.b32.xlu0 %v2548, 96
  %v2622 = vpop.permute.xlu0 %2621
  %2623 = vrot.lane.b32.xlu0 %v2553, 96
  %v2624 = vpop.permute.xlu0 %2623
  %2625 = vrot.lane.b32.xlu0 %v2558, 96
  %v2626 = vpop.permute.xlu0 %2625
  %2627 = vrot.lane.b32.xlu0 %v2563, 96
  %v2628 = vpop.permute.xlu0 %2627
  %2629 = vrot.lane.b32.xlu0 %v2568, 96
  %v2630 = vpop.permute.xlu0 %2629
  %2631 = vrot.lane.b32.xlu0 %v2573, 96
  %v2632 = vpop.permute.xlu0 %2631
  %2633 = vrot.lane.b32.xlu0 %v2578, 96
  %v2634 = vpop.permute.xlu0 %2633
  %2635 = vrot.lane.b32.xlu0 %v2583, 96
  %v2636 = vpop.permute.xlu0 %2635
  %2637 = vrot.lane.b32.xlu0 %v2588, 96
  %v2638 = vpop.permute.xlu0 %2637
  %2639 = vrot.lane.b32.xlu0 %v2593, 96
  %v2640 = vpop.permute.xlu0 %2639
  %2641 = vrot.lane.b32.xlu0 %v2598, 96
  %v2642 = vpop.permute.xlu0 %2641
  %vm2643 = vcmask 130048
  %v2644 = vsel %vm2643, %v2533, 0
  %v2646 = vsel %vm2643, %v2538, 0
  %v2648 = vsel %vm2643, %v2543, 0
  %v2650 = vsel %vm2643, %v2548, 0
  %v2652 = vsel %vm2643, %v2553, 0
  %v2654 = vsel %vm2643, %v2558, 0
  %v2656 = vsel %vm2643, %v2563, 0
  %v2658 = vsel %vm2643, %v2568, 0
  %v2660 = vsel %vm2643, %v2573, 0
  %v2662 = vsel %vm2643, %v2578, 0
  %v2664 = vsel %vm2643, %v2583, 0
  %v2666 = vsel %vm2643, %v2588, 0
  %v2668 = vsel %vm2643, %v2593, 0
  %v2670 = vsel %vm2643, %v2598, 0
  %v2672 = vsel %vm2643, %v2616, 0
  %v2674 = vsel %vm2643, %v2618, 0
  %v2676 = vsel %vm2643, %v2620, 0
  %v2678 = vsel %vm2643, %v2622, 0
  %v2680 = vsel %vm2643, %v2624, 0
  %v2682 = vsel %vm2643, %v2626, 0
  %v2684 = vsel %vm2643, %v2628, 0
  %v2686 = vsel %vm2643, %v2630, 0
  %v2688 = vsel %vm2643, %v2632, 0
  %v2690 = vsel %vm2643, %v2634, 0
  %v2692 = vsel %vm2643, %v2636, 0
  %v2694 = vsel %vm2643, %v2638, 0
  %v2696 = vsel %vm2643, %v2640, 0
  %v2698 = vsel %vm2643, %v2642, 0
  %2700 = vmatprep.subr.mxu0 0.0
  %2701 = vmatpush1.xpose.msra.mxu0 %v2672
  %2702 = vmatprep.subr.mxu0 0.0
  %2703 = vmatpush1.xpose.msra.mxu0 %v2674
  %2704 = vmatprep.subr.mxu0 0.0
  %2705 = vmatpush1.xpose.msra.mxu0 %v2676
  %2706 = vmatprep.subr.mxu0 0.0
  %2707 = vmatpush1.xpose.msra.mxu0 %v2678
  %2708 = vmatprep.subr.mxu0 0.0
  %2709 = vmatpush1.xpose.msra.mxu0 %v2680
  %2710 = vmatprep.subr.mxu0 0.0
  %2711 = vmatpush1.xpose.msra.mxu0 %v2682
  %2712 = vmatprep.subr.mxu0 0.0
  %2713 = vmatpush1.xpose.msra.mxu0 %v2684
  %2714 = vmatprep.subr.mxu0 0.0
  %2715 = vmatpush1.xpose.msra.mxu0 %v2686
  %2716 = vmatprep.subr.mxu0 0.0
  %2717 = vmatpush1.xpose.msra.mxu0 %v2688
  %2718 = vmatprep.subr.mxu0 0.0
  %2719 = vmatpush1.xpose.msra.mxu0 %v2690
  %2720 = vmatprep.subr.mxu0 0.0
  %2721 = vmatpush1.xpose.msra.mxu0 %v2692
  %2722 = vmatprep.subr.mxu0 0.0
  %2723 = vmatpush1.xpose.msra.mxu0 %v2694
  %2724 = vmatprep.subr.mxu0 0.0
  %2725 = vmatpush1.xpose.msra.mxu0 %v2696
  %2726 = vmatprep.subr.mxu0 0.0
  %2727 = vmatpush1.xpose.msra.mxu0 %v2698
  %2728 = vmatprep.subr.mxu0 0.0
  %2729 = vmatpush1.xpose.msra.mxu0 0.0
  %2730 = vmatprep.subr.mxu0 0.0
  %2731 = vmatpush1.xpose.msra.mxu0 0.0
  %2732 = vmatprep.subr.mxu0 0.0
  %2733 = vmatpush1.xpose.msra.mxu0 0.0
  %2734 = vmatprep.subr.mxu0 0.0
  %2735 = vmatpush1.xpose.msra.mxu0 0.0
  %2736 = vmatprep.subr.mxu0 0.0
  %2737 = vmatpush1.xpose.msra.mxu0 0.0
  %2738 = vmatprep.subr.mxu0 0.0
  %2739 = vmatpush1.xpose.msra.mxu0 0.0
  %2740 = vmatprep.subr.mxu0 0.0
  %2741 = vmatpush1.xpose.msra.mxu0 0.0
  %2742 = vmatprep.subr.mxu0 0.0
  %2743 = vmatpush1.xpose.msra.mxu0 0.0
  %2744 = vmatprep.subr.mxu0 0.0
  %2745 = vmatpush1.xpose.msra.mxu0 0.0
  %2746 = vmatprep.subr.mxu0 0.0
  %2747 = vmatpush1.xpose.msra.mxu0 0.0
  %2748 = vmatprep.subr.mxu0 0.0
  %2749 = vmatpush1.xpose.msra.mxu0 0.0
  %2750 = vmatprep.subr.mxu0 0.0
  %2751 = vmatpush1.xpose.msra.mxu0 0.0
  %2752 = vmatprep.subr.mxu0 0.0
  %2753 = vmatpush1.xpose.msra.mxu0 0.0
  %2754 = vmatprep.subr.mxu0 0.0
  %2755 = vmatpush1.xpose.msra.mxu0 0.0
  %2756 = vmatprep.subr.mxu0 0.0
  %2757 = vmatpush1.xpose.msra.mxu0 0.0
  %2758 = vmatprep.subr.mxu0 0.0
  %2759 = vmatpush1.xpose.msra.mxu0 0.0
  %2760 = vmatprep.subr.mxu0 0.0
  %2761 = vmatpush1.xpose.msra.mxu0 0.0
  %2762 = vmatprep.subr.mxu0 0.0
  %2763 = vmatpush1.xpose.msra.mxu0 0.0
  %2764 = vmatprep.mubr.f32.mxu0 0.0
  %2765 = vmatmul.mubr.f32.gmra.mrb[0].mxu0 %v2644
  %v2766 = vpop.f32.mrb[0].mxu0
  %v2767 = vadd.f32 0.0, %v2766
  %v2768 = vpop.f32.mrb[0].mxu0
  %2769 = vmatprep.mubr.f32.mxu0 0.0
  %2770 = vmatmul.mubr.f32.gmra.mrb[0].mxu0 %v2646
  %v2771 = vpop.f32.mrb[0].mxu0
  %v2772 = vadd.f32 0.0, %v2771
  %v2773 = vpop.f32.mrb[0].mxu0
  %2774 = vmatprep.mubr.f32.mxu0 0.0
  %2775 = vmatmul.mubr.f32.gmra.mrb[0].mxu0 %v2648
  %v2776 = vpop.f32.mrb[0].mxu0
  %v2777 = vadd.f32 0.0, %v2776
  %v2778 = vpop.f32.mrb[0].mxu0
  %2779 = vmatprep.mubr.f32.mxu0 0.0
  %2780 = vmatmul.mubr.f32.gmra.mrb[0].mxu0 %v2650
  %v2781 = vpop.f32.mrb[0].mxu0
  %v2782 = vadd.f32 0.0, %v2781
  %v2783 = vpop.f32.mrb[0].mxu0
  %2784 = vmatprep.mubr.f32.mxu0 0.0
  %2785 = vmatmul.mubr.f32.gmra.mrb[0].mxu0 %v2652
  %v2786 = vpop.f32.mrb[0].mxu0
  %v2787 = vadd.f32 0.0, %v2786
  %v2788 = vpop.f32.mrb[0].mxu0
  %2789 = vmatprep.mubr.f32.mxu0 0.0
  %2790 = vmatmul.mubr.f32.gmra.mrb[0].mxu0 %v2654
  %v2791 = vpop.f32.mrb[0].mxu0
  %v2792 = vadd.f32 0.0, %v2791
  %v2793 = vpop.f32.mrb[0].mxu0
  %2794 = vmatprep.mubr.f32.mxu0 0.0
  %2795 = vmatmul.mubr.f32.gmra.mrb[0].mxu0 %v2656
  %v2796 = vpop.f32.mrb[0].mxu0
  %v2797 = vadd.f32 0.0, %v2796
  %v2798 = vpop.f32.mrb[0].mxu0
  %2799 = vmatprep.mubr.f32.mxu0 0.0
  %2800 = vmatmul.mubr.f32.gmra.mrb[0].mxu0 %v2658
  %v2801 = vpop.f32.mrb[0].mxu0
  %v2802 = vadd.f32 0.0, %v2801
  %v2803 = vpop.f32.mrb[0].mxu0
  %2804 = vmatprep.mubr.f32.mxu0 0.0
  %2805 = vmatmul.mubr.f32.gmra.mrb[0].mxu0 %v2660
  %v2806 = vpop.f32.mrb[0].mxu0
  %v2807 = vadd.f32 0.0, %v2806
  %v2808 = vpop.f32.mrb[0].mxu0
  %2809 = vmatprep.mubr.f32.mxu0 0.0
  %2810 = vmatmul.mubr.f32.gmra.mrb[0].mxu0 %v2662
  %v2811 = vpop.f32.mrb[0].mxu0
  %v2812 = vadd.f32 0.0, %v2811
  %v2813 = vpop.f32.mrb[0].mxu0
  %2814 = vmatprep.mubr.f32.mxu0 0.0
  %2815 = vmatmul.mubr.f32.gmra.mrb[0].mxu0 %v2664
  %v2816 = vpop.f32.mrb[0].mxu0
  %v2817 = vadd.f32 0.0, %v2816
  %v2818 = vpop.f32.mrb[0].mxu0
  %2819 = vmatprep.mubr.f32.mxu0 0.0
  %2820 = vmatmul.mubr.f32.gmra.mrb[0].mxu0 %v2666
  %v2821 = vpop.f32.mrb[0].mxu0
  %v2822 = vadd.f32 0.0, %v2821
  %v2823 = vpop.f32.mrb[0].mxu0
  %2824 = vmatprep.mubr.f32.mxu0 0.0
  %2825 = vmatmul.mubr.f32.gmra.mrb[0].mxu0 %v2668
  %v2826 = vpop.f32.mrb[0].mxu0
  %v2827 = vadd.f32 0.0, %v2826
  %v2828 = vpop.f32.mrb[0].mxu0
  %2829 = vmatprep.mubr.f32.mxu0 0.0
  %2830 = vmatmul.mubr.f32.gmra.mrb[0].mxu0 %v2670
  %v2831 = vpop.f32.mrb[0].mxu0
  %v2832 = vadd.f32 0.0, %v2831
  %v2833 = vpop.f32.mrb[0].mxu0
  %2834 = vdwg.mxu0
  %v2835 = vmul.f32 %v2767, 0.25
  %v2836 = vmul.f32 %v2772, 0.25
  %v2837 = vmul.f32 %v2777, 0.25
  %v2838 = vmul.f32 %v2782, 0.25
  %v2839 = vmul.f32 %v2787, 0.25
  %v2840 = vmul.f32 %v2792, 0.25
  %v2841 = vmul.f32 %v2797, 0.25
  %v2842 = vmul.f32 %v2802, 0.25
  %v2843 = vmul.f32 %v2807, 0.25
  %v2844 = vmul.f32 %v2812, 0.25
  %v2845 = vmul.f32 %v2817, 0.25
  %v2846 = vmul.f32 %v2822, 0.25
  %v2847 = vmul.f32 %v2827, 0.25
  %v2848 = vmul.f32 %v2832, 0.25
  %v2849 = vadd.f32 %v2835, %v2191
  %v2850 = vadd.f32 %v2836, %v2192
  %v2851 = vadd.f32 %v2837, %v2193
  %v2852 = vadd.f32 %v2838, %v2194
  %v2853 = vadd.f32 %v2839, %v2195
  %v2854 = vadd.f32 %v2840, %v2196
  %v2855 = vadd.f32 %v2841, %v2197
  %v2856 = vadd.f32 %v2842, %v2198
  %v2857 = vadd.f32 %v2843, %v2199
  %v2858 = vadd.f32 %v2844, %v2200
  %v2859 = vadd.f32 %v2845, %v2201
  %v2860 = vadd.f32 %v2846, %v2202
  %v2861 = vadd.f32 %v2847, %v2203
  %v2862 = vadd.f32 %v2848, %v2204
  %vm2863 = vcmask 916480
  %v2864 = vsel %vm2863, %v2849, -inf
  %2865 = vmax.xlane.f32.xlu0 %v2864
  %v2866 = vpop.xlane.xlu0 %2865
  %v2867 = vsel %vm2863, %v2850, -inf
  %2868 = vmax.xlane.f32.xlu0 %v2867
  %v2869 = vpop.xlane.xlu0 %2868
  %v2870 = vsel %vm2863, %v2851, -inf
  %2871 = vmax.xlane.f32.xlu0 %v2870
  %v2872 = vpop.xlane.xlu0 %2871
  %v2873 = vsel %vm2863, %v2852, -inf
  %2874 = vmax.xlane.f32.xlu0 %v2873
  %v2875 = vpop.xlane.xlu0 %2874
  %v2876 = vsel %vm2863, %v2853, -inf
  %2877 = vmax.xlane.f32.xlu0 %v2876
  %v2878 = vpop.xlane.xlu0 %2877
  %v2879 = vsel %vm2863, %v2854, -inf
  %2880 = vmax.xlane.f32.xlu0 %v2879
  %v2881 = vpop.xlane.xlu0 %2880
  %v2882 = vsel %vm2863, %v2855, -inf
  %2883 = vmax.xlane.f32.xlu0 %v2882
  %v2884 = vpop.xlane.xlu0 %2883
  %v2885 = vsel %vm2863, %v2856, -inf
  %2886 = vmax.xlane.f32.xlu0 %v2885
  %v2887 = vpop.xlane.xlu0 %2886
  %v2888 = vsel %vm2863, %v2857, -inf
  %2889 = vmax.xlane.f32.xlu0 %v2888
  %v2890 = vpop.xlane.xlu0 %2889
  %v2891 = vsel %vm2863, %v2858, -inf
  %2892 = vmax.xlane.f32.xlu0 %v2891
  %v2893 = vpop.xlane.xlu0 %2892
  %v2894 = vsel %vm2863, %v2859, -inf
  %2895 = vmax.xlane.f32.xlu0 %v2894
  %v2896 = vpop.xlane.xlu0 %2895
  %v2897 = vsel %vm2863, %v2860, -inf
  %2898 = vmax.xlane.f32.xlu0 %v2897
  %v2899 = vpop.xlane.xlu0 %2898
  %v2900 = vsel %vm2863, %v2861, -inf
  %2901 = vmax.xlane.f32.xlu0 %v2900
  %v2902 = vpop.xlane.xlu0 %2901
  %v2903 = vsel %vm2863, %v2862, -inf
  %2904 = vmax.xlane.f32.xlu0 %v2903
  %v2905 = vpop.xlane.xlu0 %2904
  %v2906 = vsub.f32 %v2849, %v2866
  %v2907 = vsub.f32 %v2850, %v2869
  %v2908 = vsub.f32 %v2851, %v2872
  %v2909 = vsub.f32 %v2852, %v2875
  %v2910 = vsub.f32 %v2853, %v2878
  %v2911 = vsub.f32 %v2854, %v2881
  %v2912 = vsub.f32 %v2855, %v2884
  %v2913 = vsub.f32 %v2856, %v2887
  %v2914 = vsub.f32 %v2857, %v2890
  %v2915 = vsub.f32 %v2858, %v2893
  %v2916 = vsub.f32 %v2859, %v2896
  %v2917 = vsub.f32 %v2860, %v2899
  %v2918 = vsub.f32 %v2861, %v2902
  %v2919 = vsub.f32 %v2862, %v2905
  %v2920 = vmul.f32 %v2906, 1.442695
  %v2921 = vpow.pop %v2920
  %v2922 = vmul.f32 %v2907, 1.442695
  %v2923 = vpow.pop %v2922
  %v2924 = vmul.f32 %v2908, 1.442695
  %v2925 = vpow.pop %v2924
  %v2926 = vmul.f32 %v2909, 1.442695
  %v2927 = vpow.pop %v2926
  %v2928 = vmul.f32 %v2910, 1.442695
  %v2929 = vpow.pop %v2928
  %v2930 = vmul.f32 %v2911, 1.442695
  %v2931 = vpow.pop %v2930
  %v2932 = vmul.f32 %v2912, 1.442695
  %v2933 = vpow.pop %v2932
  %v2934 = vmul.f32 %v2913, 1.442695
  %v2935 = vpow.pop %v2934
  %v2936 = vmul.f32 %v2914, 1.442695
  %v2937 = vpow.pop %v2936
  %v2938 = vmul.f32 %v2915, 1.442695
  %v2939 = vpow.pop %v2938
  %v2940 = vmul.f32 %v2916, 1.442695
  %v2941 = vpow.pop %v2940
  %v2942 = vmul.f32 %v2917, 1.442695
  %v2943 = vpow.pop %v2942
  %v2944 = vmul.f32 %v2918, 1.442695
  %v2945 = vpow.pop %v2944
  %v2946 = vmul.f32 %v2919, 1.442695
  %v2947 = vpow.pop %v2946
  %v2948 = vsel %vm2863, %v2921, 0.0
  %2949 = vadd.xlane.f32.xlu0 %v2948
  %v2950 = vpop.xlane.xlu0 %2949
  %v2951 = vsel %vm2863, %v2923, 0.0
  %2952 = vadd.xlane.f32.xlu0 %v2951
  %v2953 = vpop.xlane.xlu0 %2952
  %v2954 = vsel %vm2863, %v2925, 0.0
  %2955 = vadd.xlane.f32.xlu0 %v2954
  %v2956 = vpop.xlane.xlu0 %2955
  %v2957 = vsel %vm2863, %v2927, 0.0
  %2958 = vadd.xlane.f32.xlu0 %v2957
  %v2959 = vpop.xlane.xlu0 %2958
  %v2960 = vsel %vm2863, %v2929, 0.0
  %2961 = vadd.xlane.f32.xlu0 %v2960
  %v2962 = vpop.xlane.xlu0 %2961
  %v2963 = vsel %vm2863, %v2931, 0.0
  %2964 = vadd.xlane.f32.xlu0 %v2963
  %v2965 = vpop.xlane.xlu0 %2964
  %v2966 = vsel %vm2863, %v2933, 0.0
  %2967 = vadd.xlane.f32.xlu0 %v2966
  %v2968 = vpop.xlane.xlu0 %2967
  %v2969 = vsel %vm2863, %v2935, 0.0
  %2970 = vadd.xlane.f32.xlu0 %v2969
  %v2971 = vpop.xlane.xlu0 %2970
  %v2972 = vsel %vm2863, %v2937, 0.0
  %2973 = vadd.xlane.f32.xlu0 %v2972
  %v2974 = vpop.xlane.xlu0 %2973
  %v2975 = vsel %vm2863, %v2939, 0.0
  %2976 = vadd.xlane.f32.xlu0 %v2975
  %v2977 = vpop.xlane.xlu0 %2976
  %v2978 = vsel %vm2863, %v2941, 0.0
  %2979 = vadd.xlane.f32.xlu0 %v2978
  %v2980 = vpop.xlane.xlu0 %2979
  %v2981 = vsel %vm2863, %v2943, 0.0
  %2982 = vadd.xlane.f32.xlu0 %v2981
  %v2983 = vpop.xlane.xlu0 %2982
  %v2984 = vsel %vm2863, %v2945, 0.0
  %2985 = vadd.xlane.f32.xlu0 %v2984
  %v2986 = vpop.xlane.xlu0 %2985
  %v2987 = vsel %vm2863, %v2947, 0.0
  %2988 = vadd.xlane.f32.xlu0 %v2987
  %v2989 = vpop.xlane.xlu0 %2988
  %v2990 = vrcp.pop %v2950
  %v2991 = vrcp.pop %v2953
  %v2992 = vrcp.pop %v2956
  %v2993 = vrcp.pop %v2959
  %v2994 = vrcp.pop %v2962
  %v2995 = vrcp.pop %v2965
  %v2996 = vrcp.pop %v2968
  %v2997 = vrcp.pop %v2971
  %v2998 = vrcp.pop %v2974
  %v2999 = vrcp.pop %v2977
  %v3000 = vrcp.pop %v2980
  %v3001 = vrcp.pop %v2983
  %v3002 = vrcp.pop %v2986
  %v3003 = vrcp.pop %v2989
  %v3004 = vmul.f32 %v2921, %v2990
  %v3005 = vmul.f32 %v2923, %v2991
  %v3006 = vmul.f32 %v2925, %v2992
  %v3007 = vmul.f32 %v2927, %v2993
  %v3008 = vmul.f32 %v2929, %v2994
  %v3009 = vmul.f32 %v2931, %v2995
  %v3010 = vmul.f32 %v2933, %v2996
  %v3011 = vmul.f32 %v2935, %v2997
  %v3012 = vmul.f32 %v2937, %v2998
  %v3013 = vmul.f32 %v2939, %v2999
  %v3014 = vmul.f32 %v2941, %v3000
  %v3015 = vmul.f32 %v2943, %v3001
  %v3016 = vmul.f32 %v2945, %v3002
  %v3017 = vmul.f32 %v2947, %v3003
  %3018 = vrot.lane.b32.xlu0 %v2533, 64
  %v3019 = vpop.permute.xlu0 %3018
  %3020 = vrot.lane.b32.xlu0 %v2538, 64
  %v3021 = vpop.permute.xlu0 %3020
  %3022 = vrot.lane.b32.xlu0 %v2543, 64
  %v3023 = vpop.permute.xlu0 %3022
  %3024 = vrot.lane.b32.xlu0 %v2548, 64
  %v3025 = vpop.permute.xlu0 %3024
  %3026 = vrot.lane.b32.xlu0 %v2553, 64
  %v3027 = vpop.permute.xlu0 %3026
  %3028 = vrot.lane.b32.xlu0 %v2558, 64
  %v3029 = vpop.permute.xlu0 %3028
  %3030 = vrot.lane.b32.xlu0 %v2563, 64
  %v3031 = vpop.permute.xlu0 %3030
  %3032 = vrot.lane.b32.xlu0 %v2568, 64
  %v3033 = vpop.permute.xlu0 %3032
  %3034 = vrot.lane.b32.xlu0 %v2573, 64
  %v3035 = vpop.permute.xlu0 %3034
  %3036 = vrot.lane.b32.xlu0 %v2578, 64
  %v3037 = vpop.permute.xlu0 %3036
  %3038 = vrot.lane.b32.xlu0 %v2583, 64
  %v3039 = vpop.permute.xlu0 %3038
  %3040 = vrot.lane.b32.xlu0 %v2588, 64
  %v3041 = vpop.permute.xlu0 %3040
  %3042 = vrot.lane.b32.xlu0 %v2593, 64
  %v3043 = vpop.permute.xlu0 %3042
  %3044 = vrot.lane.b32.xlu0 %v2598, 64
  %v3045 = vpop.permute.xlu0 %3044
  %v3061 = vsel %vm2863, %v3004, 0
  %v3064 = vsel %vm2863, %v3005, 0
  %v3067 = vsel %vm2863, %v3006, 0
  %v3070 = vsel %vm2863, %v3007, 0
  %v3073 = vsel %vm2863, %v3008, 0
  %v3076 = vsel %vm2863, %v3009, 0
  %v3079 = vsel %vm2863, %v3010, 0
  %v3082 = vsel %vm2863, %v3011, 0
  %v3085 = vsel %vm2863, %v3012, 0
  %v3088 = vsel %vm2863, %v3013, 0
  %v3091 = vsel %vm2863, %v3014, 0
  %v3094 = vsel %vm2863, %v3015, 0
  %v3097 = vsel %vm2863, %v3016, 0
  %v3100 = vsel %vm2863, %v3017, 0
  %3102 = vmatprep.subr.mxu0 0.0
  %3103 = vmatpush1.msra.mxu0 %v3019
  %3104 = vmatprep.subr.mxu0 0.0
  %3105 = vmatpush1.msra.mxu0 %v3021
  %3106 = vmatprep.subr.mxu0 0.0
  %3107 = vmatpush1.msra.mxu0 %v3023
  %3108 = vmatprep.subr.mxu0 0.0
  %3109 = vmatpush1.msra.mxu0 %v3025
  %3110 = vmatprep.subr.mxu0 0.0
  %3111 = vmatpush1.msra.mxu0 %v3027
  %3112 = vmatprep.subr.mxu0 0.0
  %3113 = vmatpush1.msra.mxu0 %v3029
  %3114 = vmatprep.subr.mxu0 0.0
  %3115 = vmatpush1.msra.mxu0 %v3031
  %3116 = vmatprep.subr.mxu0 0.0
  %3117 = vmatpush1.msra.mxu0 %v3033
  %3118 = vmatprep.subr.mxu0 0.0
  %3119 = vmatpush1.msra.mxu0 %v3035
  %3120 = vmatprep.subr.mxu0 0.0
  %3121 = vmatpush1.msra.mxu0 %v3037
  %3122 = vmatprep.subr.mxu0 0.0
  %3123 = vmatpush1.msra.mxu0 %v3039
  %3124 = vmatprep.subr.mxu0 0.0
  %3125 = vmatpush1.msra.mxu0 %v3041
  %3126 = vmatprep.subr.mxu0 0.0
  %3127 = vmatpush1.msra.mxu0 %v3043
  %3128 = vmatprep.subr.mxu0 0.0
  %3129 = vmatpush1.msra.mxu0 %v3045
  %3130 = vmatprep.subr.mxu0 0.0
  %3131 = vmatpush1.msra.mxu0 0.0
  %3132 = vmatprep.subr.mxu0 0.0
  %3133 = vmatpush1.msra.mxu0 0.0
  %3134 = vmatprep.subr.mxu0 0.0
  %3135 = vmatpush1.msra.mxu0 0.0
  %3136 = vmatprep.subr.mxu0 0.0
  %3137 = vmatpush1.msra.mxu0 0.0
  %3138 = vmatprep.subr.mxu0 0.0
  %3139 = vmatpush1.msra.mxu0 0.0
  %3140 = vmatprep.subr.mxu0 0.0
  %3141 = vmatpush1.msra.mxu0 0.0
  %3142 = vmatprep.subr.mxu0 0.0
  %3143 = vmatpush1.msra.mxu0 0.0
  %3144 = vmatprep.subr.mxu0 0.0
  %3145 = vmatpush1.msra.mxu0 0.0
  %3146 = vmatprep.subr.mxu0 0.0
  %3147 = vmatpush1.msra.mxu0 0.0
  %3148 = vmatprep.subr.mxu0 0.0
  %3149 = vmatpush1.msra.mxu0 0.0
  %3150 = vmatprep.subr.mxu0 0.0
  %3151 = vmatpush1.msra.mxu0 0.0
  %3152 = vmatprep.subr.mxu0 0.0
  %3153 = vmatpush1.msra.mxu0 0.0
  %3154 = vmatprep.subr.mxu0 0.0
  %3155 = vmatpush1.msra.mxu0 0.0
  %3156 = vmatprep.subr.mxu0 0.0
  %3157 = vmatpush1.msra.mxu0 0.0
  %3158 = vmatprep.subr.mxu0 0.0
  %3159 = vmatpush1.msra.mxu0 0.0
  %3160 = vmatprep.subr.mxu0 0.0
  %3161 = vmatpush1.msra.mxu0 0.0
  %3162 = vmatprep.subr.mxu0 0.0
  %3163 = vmatpush1.msra.mxu0 0.0
  %3164 = vmatprep.subr.mxu0 0.0
  %3165 = vmatpush1.msra.mxu0 0.0
  %3166 = vmatprep.mubr.f32.mxu0 0.0
  %3167 = vmatmul.mubr.f32.gmra.mrb[0].mxu0 %v3061
  %v3168 = vpop.f32.mrb[0].mxu0
  %v3169 = vadd.f32 0.0, %v3168
  %v3170 = vpop.f32.mrb[0].mxu0
  %3171 = vmatprep.mubr.f32.mxu0 0.0
  %3172 = vmatmul.mubr.f32.gmra.mrb[0].mxu0 %v3064
  %v3173 = vpop.f32.mrb[0].mxu0
  %v3174 = vadd.f32 0.0, %v3173
  %v3175 = vpop.f32.mrb[0].mxu0
  %3176 = vmatprep.mubr.f32.mxu0 0.0
  %3177 = vmatmul.mubr.f32.gmra.mrb[0].mxu0 %v3067
  %v3178 = vpop.f32.mrb[0].mxu0
  %v3179 = vadd.f32 0.0, %v3178
  %v3180 = vpop.f32.mrb[0].mxu0
  %3181 = vmatprep.mubr.f32.mxu0 0.0
  %3182 = vmatmul.mubr.f32.gmra.mrb[0].mxu0 %v3070
  %v3183 = vpop.f32.mrb[0].mxu0
  %v3184 = vadd.f32 0.0, %v3183
  %v3185 = vpop.f32.mrb[0].mxu0
  %3186 = vmatprep.mubr.f32.mxu0 0.0
  %3187 = vmatmul.mubr.f32.gmra.mrb[0].mxu0 %v3073
  %v3188 = vpop.f32.mrb[0].mxu0
  %v3189 = vadd.f32 0.0, %v3188
  %v3190 = vpop.f32.mrb[0].mxu0
  %3191 = vmatprep.mubr.f32.mxu0 0.0
  %3192 = vmatmul.mubr.f32.gmra.mrb[0].mxu0 %v3076
  %v3193 = vpop.f32.mrb[0].mxu0
  %v3194 = vadd.f32 0.0, %v3193
  %v3195 = vpop.f32.mrb[0].mxu0
  %3196 = vmatprep.mubr.f32.mxu0 0.0
  %3197 = vmatmul.mubr.f32.gmra.mrb[0].mxu0 %v3079
  %v3198 = vpop.f32.mrb[0].mxu0
  %v3199 = vadd.f32 0.0, %v3198
  %v3200 = vpop.f32.mrb[0].mxu0
  %3201 = vmatprep.mubr.f32.mxu0 0.0
  %3202 = vmatmul.mubr.f32.gmra.mrb[0].mxu0 %v3082
  %v3203 = vpop.f32.mrb[0].mxu0
  %v3204 = vadd.f32 0.0, %v3203
  %v3205 = vpop.f32.mrb[0].mxu0
  %3206 = vmatprep.mubr.f32.mxu0 0.0
  %3207 = vmatmul.mubr.f32.gmra.mrb[0].mxu0 %v3085
  %v3208 = vpop.f32.mrb[0].mxu0
  %v3209 = vadd.f32 0.0, %v3208
  %v3210 = vpop.f32.mrb[0].mxu0
  %3211 = vmatprep.mubr.f32.mxu0 0.0
  %3212 = vmatmul.mubr.f32.gmra.mrb[0].mxu0 %v3088
  %v3213 = vpop.f32.mrb[0].mxu0
  %v3214 = vadd.f32 0.0, %v3213
  %v3215 = vpop.f32.mrb[0].mxu0
  %3216 = vmatprep.mubr.f32.mxu0 0.0
  %3217 = vmatmul.mubr.f32.gmra.mrb[0].mxu0 %v3091
  %v3218 = vpop.f32.mrb[0].mxu0
  %v3219 = vadd.f32 0.0, %v3218
  %v3220 = vpop.f32.mrb[0].mxu0
  %3221 = vmatprep.mubr.f32.mxu0 0.0
  %3222 = vmatmul.mubr.f32.gmra.mrb[0].mxu0 %v3094
  %v3223 = vpop.f32.mrb[0].mxu0
  %v3224 = vadd.f32 0.0, %v3223
  %v3225 = vpop.f32.mrb[0].mxu0
  %3226 = vmatprep.mubr.f32.mxu0 0.0
  %3227 = vmatmul.mubr.f32.gmra.mrb[0].mxu0 %v3097
  %v3228 = vpop.f32.mrb[0].mxu0
  %v3229 = vadd.f32 0.0, %v3228
  %v3230 = vpop.f32.mrb[0].mxu0
  %3231 = vmatprep.mubr.f32.mxu0 0.0
  %3232 = vmatmul.mubr.f32.gmra.mrb[0].mxu0 %v3100
  %v3233 = vpop.f32.mrb[0].mxu0
  %v3234 = vadd.f32 0.0, %v3233
  %v3235 = vpop.f32.mrb[0].mxu0
  %3236 = vdwg.mxu0
  %3237 = vrot.lane.b32.xlu0 %v2533, 112
  %v3238 = vpop.permute.xlu0 %3237
  %3239 = vrot.lane.b32.xlu0 %v2538, 112
  %v3240 = vpop.permute.xlu0 %3239
  %3241 = vrot.lane.b32.xlu0 %v2543, 112
  %v3242 = vpop.permute.xlu0 %3241
  %3243 = vrot.lane.b32.xlu0 %v2548, 112
  %v3244 = vpop.permute.xlu0 %3243
  %3245 = vrot.lane.b32.xlu0 %v2553, 112
  %v3246 = vpop.permute.xlu0 %3245
  %3247 = vrot.lane.b32.xlu0 %v2558, 112
  %v3248 = vpop.permute.xlu0 %3247
  %3249 = vrot.lane.b32.xlu0 %v2563, 112
  %v3250 = vpop.permute.xlu0 %3249
  %3251 = vrot.lane.b32.xlu0 %v2568, 112
  %v3252 = vpop.permute.xlu0 %3251
  %3253 = vrot.lane.b32.xlu0 %v2573, 112
  %v3254 = vpop.permute.xlu0 %3253
  %3255 = vrot.lane.b32.xlu0 %v2578, 112
  %v3256 = vpop.permute.xlu0 %3255
  %3257 = vrot.lane.b32.xlu0 %v2583, 112
  %v3258 = vpop.permute.xlu0 %3257
  %3259 = vrot.lane.b32.xlu0 %v2588, 112
  %v3260 = vpop.permute.xlu0 %3259
  %3261 = vrot.lane.b32.xlu0 %v2593, 112
  %v3262 = vpop.permute.xlu0 %3261
  %3263 = vrot.lane.b32.xlu0 %v2598, 112
  %v3264 = vpop.permute.xlu0 %3263
  %3265 = vrot.lane.b32.xlu0 %v2533, 80
  %v3266 = vpop.permute.xlu0 %3265
  %3267 = vrot.lane.b32.xlu0 %v2538, 80
  %v3268 = vpop.permute.xlu0 %3267
  %3269 = vrot.lane.b32.xlu0 %v2543, 80
  %v3270 = vpop.permute.xlu0 %3269
  %3271 = vrot.lane.b32.xlu0 %v2548, 80
  %v3272 = vpop.permute.xlu0 %3271
  %3273 = vrot.lane.b32.xlu0 %v2553, 80
  %v3274 = vpop.permute.xlu0 %3273
  %3275 = vrot.lane.b32.xlu0 %v2558, 80
  %v3276 = vpop.permute.xlu0 %3275
  %3277 = vrot.lane.b32.xlu0 %v2563, 80
  %v3278 = vpop.permute.xlu0 %3277
  %3279 = vrot.lane.b32.xlu0 %v2568, 80
  %v3280 = vpop.permute.xlu0 %3279
  %3281 = vrot.lane.b32.xlu0 %v2573, 80
  %v3282 = vpop.permute.xlu0 %3281
  %3283 = vrot.lane.b32.xlu0 %v2578, 80
  %v3284 = vpop.permute.xlu0 %3283
  %3285 = vrot.lane.b32.xlu0 %v2583, 80
  %v3286 = vpop.permute.xlu0 %3285
  %3287 = vrot.lane.b32.xlu0 %v2588, 80
  %v3288 = vpop.permute.xlu0 %3287
  %3289 = vrot.lane.b32.xlu0 %v2593, 80
  %v3290 = vpop.permute.xlu0 %3289
  %3291 = vrot.lane.b32.xlu0 %v2598, 80
  %v3292 = vpop.permute.xlu0 %3291
  %v3293 = vsel %vm2643, %v3238, 0
  %v3295 = vsel %vm2643, %v3240, 0
  %v3297 = vsel %vm2643, %v3242, 0
  %v3299 = vsel %vm2643, %v3244, 0
  %v3301 = vsel %vm2643, %v3246, 0
  %v3303 = vsel %vm2643, %v3248, 0
  %v3305 = vsel %vm2643, %v3250, 0
  %v3307 = vsel %vm2643, %v3252, 0
  %v3309 = vsel %vm2643, %v3254, 0
  %v3311 = vsel %vm2643, %v3256, 0
  %v3313 = vsel %vm2643, %v3258, 0
  %v3315 = vsel %vm2643, %v3260, 0
  %v3317 = vsel %vm2643, %v3262, 0
  %v3319 = vsel %vm2643, %v3264, 0
  %v3321 = vsel %vm2643, %v3266, 0
  %v3323 = vsel %vm2643, %v3268, 0
  %v3325 = vsel %vm2643, %v3270, 0
  %v3327 = vsel %vm2643, %v3272, 0
  %v3329 = vsel %vm2643, %v3274, 0
  %v3331 = vsel %vm2643, %v3276, 0
  %v3333 = vsel %vm2643, %v3278, 0
  %v3335 = vsel %vm2643, %v3280, 0
  %v3337 = vsel %vm2643, %v3282, 0
  %v3339 = vsel %vm2643, %v3284, 0
  %v3341 = vsel %vm2643, %v3286, 0
  %v3343 = vsel %vm2643, %v3288, 0
  %v3345 = vsel %vm2643, %v3290, 0
  %v3347 = vsel %vm2643, %v3292, 0
  %3349 = vmatprep.subr.mxu0 0.0
  %3350 = vmatpush1.xpose.msra.mxu0 %v3321
  %3351 = vmatprep.subr.mxu0 0.0
  %3352 = vmatpush1.xpose.msra.mxu0 %v3323
  %3353 = vmatprep.subr.mxu0 0.0
  %3354 = vmatpush1.xpose.msra.mxu0 %v3325
  %3355 = vmatprep.subr.mxu0 0.0
  %3356 = vmatpush1.xpose.msra.mxu0 %v3327
  %3357 = vmatprep.subr.mxu0 0.0
  %3358 = vmatpush1.xpose.msra.mxu0 %v3329
  %3359 = vmatprep.subr.mxu0 0.0
  %3360 = vmatpush1.xpose.msra.mxu0 %v3331
  %3361 = vmatprep.subr.mxu0 0.0
  %3362 = vmatpush1.xpose.msra.mxu0 %v3333
  %3363 = vmatprep.subr.mxu0 0.0
  %3364 = vmatpush1.xpose.msra.mxu0 %v3335
  %3365 = vmatprep.subr.mxu0 0.0
  %3366 = vmatpush1.xpose.msra.mxu0 %v3337
  %3367 = vmatprep.subr.mxu0 0.0
  %3368 = vmatpush1.xpose.msra.mxu0 %v3339
  %3369 = vmatprep.subr.mxu0 0.0
  %3370 = vmatpush1.xpose.msra.mxu0 %v3341
  %3371 = vmatprep.subr.mxu0 0.0
  %3372 = vmatpush1.xpose.msra.mxu0 %v3343
  %3373 = vmatprep.subr.mxu0 0.0
  %3374 = vmatpush1.xpose.msra.mxu0 %v3345
  %3375 = vmatprep.subr.mxu0 0.0
  %3376 = vmatpush1.xpose.msra.mxu0 %v3347
  %3377 = vmatprep.subr.mxu0 0.0
  %3378 = vmatpush1.xpose.msra.mxu0 0.0
  %3379 = vmatprep.subr.mxu0 0.0
  %3380 = vmatpush1.xpose.msra.mxu0 0.0
  %3381 = vmatprep.subr.mxu0 0.0
  %3382 = vmatpush1.xpose.msra.mxu0 0.0
  %3383 = vmatprep.subr.mxu0 0.0
  %3384 = vmatpush1.xpose.msra.mxu0 0.0
  %3385 = vmatprep.subr.mxu0 0.0
  %3386 = vmatpush1.xpose.msra.mxu0 0.0
  %3387 = vmatprep.subr.mxu0 0.0
  %3388 = vmatpush1.xpose.msra.mxu0 0.0
  %3389 = vmatprep.subr.mxu0 0.0
  %3390 = vmatpush1.xpose.msra.mxu0 0.0
  %3391 = vmatprep.subr.mxu0 0.0
  %3392 = vmatpush1.xpose.msra.mxu0 0.0
  %3393 = vmatprep.subr.mxu0 0.0
  %3394 = vmatpush1.xpose.msra.mxu0 0.0
  %3395 = vmatprep.subr.mxu0 0.0
  %3396 = vmatpush1.xpose.msra.mxu0 0.0
  %3397 = vmatprep.subr.mxu0 0.0
  %3398 = vmatpush1.xpose.msra.mxu0 0.0
  %3399 = vmatprep.subr.mxu0 0.0
  %3400 = vmatpush1.xpose.msra.mxu0 0.0
  %3401 = vmatprep.subr.mxu0 0.0
  %3402 = vmatpush1.xpose.msra.mxu0 0.0
  %3403 = vmatprep.subr.mxu0 0.0
  %3404 = vmatpush1.xpose.msra.mxu0 0.0
  %3405 = vmatprep.subr.mxu0 0.0
  %3406 = vmatpush1.xpose.msra.mxu0 0.0
  %3407 = vmatprep.subr.mxu0 0.0
  %3408 = vmatpush1.xpose.msra.mxu0 0.0
  %3409 = vmatprep.subr.mxu0 0.0
  %3410 = vmatpush1.xpose.msra.mxu0 0.0
  %3411 = vmatprep.subr.mxu0 0.0
  %3412 = vmatpush1.xpose.msra.mxu0 0.0
  %3413 = vmatprep.mubr.f32.mxu0 0.0
  %3414 = vmatmul.mubr.f32.gmra.mrb[0].mxu0 %v3293
  %v3415 = vpop.f32.mrb[0].mxu0
  %v3416 = vadd.f32 0.0, %v3415
  %v3417 = vpop.f32.mrb[0].mxu0
  %3418 = vmatprep.mubr.f32.mxu0 0.0
  %3419 = vmatmul.mubr.f32.gmra.mrb[0].mxu0 %v3295
  %v3420 = vpop.f32.mrb[0].mxu0
  %v3421 = vadd.f32 0.0, %v3420
  %v3422 = vpop.f32.mrb[0].mxu0
  %3423 = vmatprep.mubr.f32.mxu0 0.0
  %3424 = vmatmul.mubr.f32.gmra.mrb[0].mxu0 %v3297
  %v3425 = vpop.f32.mrb[0].mxu0
  %v3426 = vadd.f32 0.0, %v3425
  %v3427 = vpop.f32.mrb[0].mxu0
  %3428 = vmatprep.mubr.f32.mxu0 0.0
  %3429 = vmatmul.mubr.f32.gmra.mrb[0].mxu0 %v3299
  %v3430 = vpop.f32.mrb[0].mxu0
  %v3431 = vadd.f32 0.0, %v3430
  %v3432 = vpop.f32.mrb[0].mxu0
  %3433 = vmatprep.mubr.f32.mxu0 0.0
  %3434 = vmatmul.mubr.f32.gmra.mrb[0].mxu0 %v3301
  %v3435 = vpop.f32.mrb[0].mxu0
  %v3436 = vadd.f32 0.0, %v3435
  %v3437 = vpop.f32.mrb[0].mxu0
  %3438 = vmatprep.mubr.f32.mxu0 0.0
  %3439 = vmatmul.mubr.f32.gmra.mrb[0].mxu0 %v3303
  %v3440 = vpop.f32.mrb[0].mxu0
  %v3441 = vadd.f32 0.0, %v3440
  %v3442 = vpop.f32.mrb[0].mxu0
  %3443 = vmatprep.mubr.f32.mxu0 0.0
  %3444 = vmatmul.mubr.f32.gmra.mrb[0].mxu0 %v3305
  %v3445 = vpop.f32.mrb[0].mxu0
  %v3446 = vadd.f32 0.0, %v3445
  %v3447 = vpop.f32.mrb[0].mxu0
  %3448 = vmatprep.mubr.f32.mxu0 0.0
  %3449 = vmatmul.mubr.f32.gmra.mrb[0].mxu0 %v3307
  %v3450 = vpop.f32.mrb[0].mxu0
  %v3451 = vadd.f32 0.0, %v3450
  %v3452 = vpop.f32.mrb[0].mxu0
  %3453 = vmatprep.mubr.f32.mxu0 0.0
  %3454 = vmatmul.mubr.f32.gmra.mrb[0].mxu0 %v3309
  %v3455 = vpop.f32.mrb[0].mxu0
  %v3456 = vadd.f32 0.0, %v3455
  %v3457 = vpop.f32.mrb[0].mxu0
  %3458 = vmatprep.mubr.f32.mxu0 0.0
  %3459 = vmatmul.mubr.f32.gmra.mrb[0].mxu0 %v3311
  %v3460 = vpop.f32.mrb[0].mxu0
  %v3461 = vadd.f32 0.0, %v3460
  %v3462 = vpop.f32.mrb[0].mxu0
  %3463 = vmatprep.mubr.f32.mxu0 0.0
  %3464 = vmatmul.mubr.f32.gmra.mrb[0].mxu0 %v3313
  %v3465 = vpop.f32.mrb[0].mxu0
  %v3466 = vadd.f32 0.0, %v3465
  %v3467 = vpop.f32.mrb[0].mxu0
  %3468 = vmatprep.mubr.f32.mxu0 0.0
  %3469 = vmatmul.mubr.f32.gmra.mrb[0].mxu0 %v3315
  %v3470 = vpop.f32.mrb[0].mxu0
  %v3471 = vadd.f32 0.0, %v3470
  %v3472 = vpop.f32.mrb[0].mxu0
  %3473 = vmatprep.mubr.f32.mxu0 0.0
  %3474 = vmatmul.mubr.f32.gmra.mrb[0].mxu0 %v3317
  %v3475 = vpop.f32.mrb[0].mxu0
  %v3476 = vadd.f32 0.0, %v3475
  %v3477 = vpop.f32.mrb[0].mxu0
  %3478 = vmatprep.mubr.f32.mxu0 0.0
  %3479 = vmatmul.mubr.f32.gmra.mrb[0].mxu0 %v3319
  %v3480 = vpop.f32.mrb[0].mxu0
  %v3481 = vadd.f32 0.0, %v3480
  %v3482 = vpop.f32.mrb[0].mxu0
  %3483 = vdwg.mxu0
  %v3484 = vmul.f32 %v3416, 0.25
  %v3485 = vmul.f32 %v3421, 0.25
  %v3486 = vmul.f32 %v3426, 0.25
  %v3487 = vmul.f32 %v3431, 0.25
  %v3488 = vmul.f32 %v3436, 0.25
  %v3489 = vmul.f32 %v3441, 0.25
  %v3490 = vmul.f32 %v3446, 0.25
  %v3491 = vmul.f32 %v3451, 0.25
  %v3492 = vmul.f32 %v3456, 0.25
  %v3493 = vmul.f32 %v3461, 0.25
  %v3494 = vmul.f32 %v3466, 0.25
  %v3495 = vmul.f32 %v3471, 0.25
  %v3496 = vmul.f32 %v3476, 0.25
  %v3497 = vmul.f32 %v3481, 0.25
  %v3498 = vadd.f32 %v3484, %v2191
  %v3499 = vadd.f32 %v3485, %v2192
  %v3500 = vadd.f32 %v3486, %v2193
  %v3501 = vadd.f32 %v3487, %v2194
  %v3502 = vadd.f32 %v3488, %v2195
  %v3503 = vadd.f32 %v3489, %v2196
  %v3504 = vadd.f32 %v3490, %v2197
  %v3505 = vadd.f32 %v3491, %v2198
  %v3506 = vadd.f32 %v3492, %v2199
  %v3507 = vadd.f32 %v3493, %v2200
  %v3508 = vadd.f32 %v3494, %v2201
  %v3509 = vadd.f32 %v3495, %v2202
  %v3510 = vadd.f32 %v3496, %v2203
  %v3511 = vadd.f32 %v3497, %v2204
  %v3512 = vsel %vm2863, %v3498, -inf
  %3513 = vmax.xlane.f32.xlu0 %v3512
  %v3514 = vpop.xlane.xlu0 %3513
  %v3515 = vsel %vm2863, %v3499, -inf
  %3516 = vmax.xlane.f32.xlu0 %v3515
  %v3517 = vpop.xlane.xlu0 %3516
  %v3518 = vsel %vm2863, %v3500, -inf
  %3519 = vmax.xlane.f32.xlu0 %v3518
  %v3520 = vpop.xlane.xlu0 %3519
  %v3521 = vsel %vm2863, %v3501, -inf
  %3522 = vmax.xlane.f32.xlu0 %v3521
  %v3523 = vpop.xlane.xlu0 %3522
  %v3524 = vsel %vm2863, %v3502, -inf
  %3525 = vmax.xlane.f32.xlu0 %v3524
  %v3526 = vpop.xlane.xlu0 %3525
  %v3527 = vsel %vm2863, %v3503, -inf
  %3528 = vmax.xlane.f32.xlu0 %v3527
  %v3529 = vpop.xlane.xlu0 %3528
  %v3530 = vsel %vm2863, %v3504, -inf
  %3531 = vmax.xlane.f32.xlu0 %v3530
  %v3532 = vpop.xlane.xlu0 %3531
  %v3533 = vsel %vm2863, %v3505, -inf
  %3534 = vmax.xlane.f32.xlu0 %v3533
  %v3535 = vpop.xlane.xlu0 %3534
  %v3536 = vsel %vm2863, %v3506, -inf
  %3537 = vmax.xlane.f32.xlu0 %v3536
  %v3538 = vpop.xlane.xlu0 %3537
  %v3539 = vsel %vm2863, %v3507, -inf
  %3540 = vmax.xlane.f32.xlu0 %v3539
  %v3541 = vpop.xlane.xlu0 %3540
  %v3542 = vsel %vm2863, %v3508, -inf
  %3543 = vmax.xlane.f32.xlu0 %v3542
  %v3544 = vpop.xlane.xlu0 %3543
  %v3545 = vsel %vm2863, %v3509, -inf
  %3546 = vmax.xlane.f32.xlu0 %v3545
  %v3547 = vpop.xlane.xlu0 %3546
  %v3548 = vsel %vm2863, %v3510, -inf
  %3549 = vmax.xlane.f32.xlu0 %v3548
  %v3550 = vpop.xlane.xlu0 %3549
  %v3551 = vsel %vm2863, %v3511, -inf
  %3552 = vmax.xlane.f32.xlu0 %v3551
  %v3553 = vpop.xlane.xlu0 %3552
  %v3554 = vsub.f32 %v3498, %v3514
  %v3555 = vsub.f32 %v3499, %v3517
  %v3556 = vsub.f32 %v3500, %v3520
  %v3557 = vsub.f32 %v3501, %v3523
  %v3558 = vsub.f32 %v3502, %v3526
  %v3559 = vsub.f32 %v3503, %v3529
  %v3560 = vsub.f32 %v3504, %v3532
  %v3561 = vsub.f32 %v3505, %v3535
  %v3562 = vsub.f32 %v3506, %v3538
  %v3563 = vsub.f32 %v3507, %v3541
  %v3564 = vsub.f32 %v3508, %v3544
  %v3565 = vsub.f32 %v3509, %v3547
  %v3566 = vsub.f32 %v3510, %v3550
  %v3567 = vsub.f32 %v3511, %v3553
  %v3568 = vmul.f32 %v3554, 1.442695
  %v3569 = vpow.pop %v3568
  %v3570 = vmul.f32 %v3555, 1.442695
  %v3571 = vpow.pop %v3570
  %v3572 = vmul.f32 %v3556, 1.442695
  %v3573 = vpow.pop %v3572
  %v3574 = vmul.f32 %v3557, 1.442695
  %v3575 = vpow.pop %v3574
  %v3576 = vmul.f32 %v3558, 1.442695
  %v3577 = vpow.pop %v3576
  %v3578 = vmul.f32 %v3559, 1.442695
  %v3579 = vpow.pop %v3578
  %v3580 = vmul.f32 %v3560, 1.442695
  %v3581 = vpow.pop %v3580
  %v3582 = vmul.f32 %v3561, 1.442695
  %v3583 = vpow.pop %v3582
  %v3584 = vmul.f32 %v3562, 1.442695
  %v3585 = vpow.pop %v3584
  %v3586 = vmul.f32 %v3563, 1.442695
  %v3587 = vpow.pop %v3586
  %v3588 = vmul.f32 %v3564, 1.442695
  %v3589 = vpow.pop %v3588
  %v3590 = vmul.f32 %v3565, 1.442695
  %v3591 = vpow.pop %v3590
  %v3592 = vmul.f32 %v3566, 1.442695
  %v3593 = vpow.pop %v3592
  %v3594 = vmul.f32 %v3567, 1.442695
  %v3595 = vpow.pop %v3594
  %v3596 = vsel %vm2863, %v3569, 0.0
  %3597 = vadd.xlane.f32.xlu0 %v3596
  %v3598 = vpop.xlane.xlu0 %3597
  %v3599 = vsel %vm2863, %v3571, 0.0
  %3600 = vadd.xlane.f32.xlu0 %v3599
  %v3601 = vpop.xlane.xlu0 %3600
  %v3602 = vsel %vm2863, %v3573, 0.0
  %3603 = vadd.xlane.f32.xlu0 %v3602
  %v3604 = vpop.xlane.xlu0 %3603
  %v3605 = vsel %vm2863, %v3575, 0.0
  %3606 = vadd.xlane.f32.xlu0 %v3605
  %v3607 = vpop.xlane.xlu0 %3606
  %v3608 = vsel %vm2863, %v3577, 0.0
  %3609 = vadd.xlane.f32.xlu0 %v3608
  %v3610 = vpop.xlane.xlu0 %3609
  %v3611 = vsel %vm2863, %v3579, 0.0
  %3612 = vadd.xlane.f32.xlu0 %v3611
  %v3613 = vpop.xlane.xlu0 %3612
  %v3614 = vsel %vm2863, %v3581, 0.0
  %3615 = vadd.xlane.f32.xlu0 %v3614
  %v3616 = vpop.xlane.xlu0 %3615
  %v3617 = vsel %vm2863, %v3583, 0.0
  %3618 = vadd.xlane.f32.xlu0 %v3617
  %v3619 = vpop.xlane.xlu0 %3618
  %v3620 = vsel %vm2863, %v3585, 0.0
  %3621 = vadd.xlane.f32.xlu0 %v3620
  %v3622 = vpop.xlane.xlu0 %3621
  %v3623 = vsel %vm2863, %v3587, 0.0
  %3624 = vadd.xlane.f32.xlu0 %v3623
  %v3625 = vpop.xlane.xlu0 %3624
  %v3626 = vsel %vm2863, %v3589, 0.0
  %3627 = vadd.xlane.f32.xlu0 %v3626
  %v3628 = vpop.xlane.xlu0 %3627
  %v3629 = vsel %vm2863, %v3591, 0.0
  %3630 = vadd.xlane.f32.xlu0 %v3629
  %v3631 = vpop.xlane.xlu0 %3630
  %v3632 = vsel %vm2863, %v3593, 0.0
  %3633 = vadd.xlane.f32.xlu0 %v3632
  %v3634 = vpop.xlane.xlu0 %3633
  %v3635 = vsel %vm2863, %v3595, 0.0
  %3636 = vadd.xlane.f32.xlu0 %v3635
  %v3637 = vpop.xlane.xlu0 %3636
  %v3638 = vrcp.pop %v3598
  %v3639 = vrcp.pop %v3601
  %v3640 = vrcp.pop %v3604
  %v3641 = vrcp.pop %v3607
  %v3642 = vrcp.pop %v3610
  %v3643 = vrcp.pop %v3613
  %v3644 = vrcp.pop %v3616
  %v3645 = vrcp.pop %v3619
  %v3646 = vrcp.pop %v3622
  %v3647 = vrcp.pop %v3625
  %v3648 = vrcp.pop %v3628
  %v3649 = vrcp.pop %v3631
  %v3650 = vrcp.pop %v3634
  %v3651 = vrcp.pop %v3637
  %v3652 = vmul.f32 %v3569, %v3638
  %v3653 = vmul.f32 %v3571, %v3639
  %v3654 = vmul.f32 %v3573, %v3640
  %v3655 = vmul.f32 %v3575, %v3641
  %v3656 = vmul.f32 %v3577, %v3642
  %v3657 = vmul.f32 %v3579, %v3643
  %v3658 = vmul.f32 %v3581, %v3644
  %v3659 = vmul.f32 %v3583, %v3645
  %v3660 = vmul.f32 %v3585, %v3646
  %v3661 = vmul.f32 %v3587, %v3647
  %v3662 = vmul.f32 %v3589, %v3648
  %v3663 = vmul.f32 %v3591, %v3649
  %v3664 = vmul.f32 %v3593, %v3650
  %v3665 = vmul.f32 %v3595, %v3651
  %3666 = vrot.lane.b32.xlu0 %v2533, 48
  %v3667 = vpop.permute.xlu0 %3666
  %3668 = vrot.lane.b32.xlu0 %v2538, 48
  %v3669 = vpop.permute.xlu0 %3668
  %3670 = vrot.lane.b32.xlu0 %v2543, 48
  %v3671 = vpop.permute.xlu0 %3670
  %3672 = vrot.lane.b32.xlu0 %v2548, 48
  %v3673 = vpop.permute.xlu0 %3672
  %3674 = vrot.lane.b32.xlu0 %v2553, 48
  %v3675 = vpop.permute.xlu0 %3674
  %3676 = vrot.lane.b32.xlu0 %v2558, 48
  %v3677 = vpop.permute.xlu0 %3676
  %3678 = vrot.lane.b32.xlu0 %v2563, 48
  %v3679 = vpop.permute.xlu0 %3678
  %3680 = vrot.lane.b32.xlu0 %v2568, 48
  %v3681 = vpop.permute.xlu0 %3680
  %3682 = vrot.lane.b32.xlu0 %v2573, 48
  %v3683 = vpop.permute.xlu0 %3682
  %3684 = vrot.lane.b32.xlu0 %v2578, 48
  %v3685 = vpop.permute.xlu0 %3684
  %3686 = vrot.lane.b32.xlu0 %v2583, 48
  %v3687 = vpop.permute.xlu0 %3686
  %3688 = vrot.lane.b32.xlu0 %v2588, 48
  %v3689 = vpop.permute.xlu0 %3688
  %3690 = vrot.lane.b32.xlu0 %v2593, 48
  %v3691 = vpop.permute.xlu0 %3690
  %3692 = vrot.lane.b32.xlu0 %v2598, 48
  %v3693 = vpop.permute.xlu0 %3692
  %v3709 = vsel %vm2863, %v3652, 0
  %v3712 = vsel %vm2863, %v3653, 0
  %v3715 = vsel %vm2863, %v3654, 0
  %v3718 = vsel %vm2863, %v3655, 0
  %v3721 = vsel %vm2863, %v3656, 0
  %v3724 = vsel %vm2863, %v3657, 0
  %v3727 = vsel %vm2863, %v3658, 0
  %v3730 = vsel %vm2863, %v3659, 0
  %v3733 = vsel %vm2863, %v3660, 0
  %v3736 = vsel %vm2863, %v3661, 0
  %v3739 = vsel %vm2863, %v3662, 0
  %v3742 = vsel %vm2863, %v3663, 0
  %v3745 = vsel %vm2863, %v3664, 0
  %v3748 = vsel %vm2863, %v3665, 0
  %3750 = vmatprep.subr.mxu0 0.0
  %3751 = vmatpush1.msra.mxu0 %v3667
  %3752 = vmatprep.subr.mxu0 0.0
  %3753 = vmatpush1.msra.mxu0 %v3669
  %3754 = vmatprep.subr.mxu0 0.0
  %3755 = vmatpush1.msra.mxu0 %v3671
  %3756 = vmatprep.subr.mxu0 0.0
  %3757 = vmatpush1.msra.mxu0 %v3673
  %3758 = vmatprep.subr.mxu0 0.0
  %3759 = vmatpush1.msra.mxu0 %v3675
  %3760 = vmatprep.subr.mxu0 0.0
  %3761 = vmatpush1.msra.mxu0 %v3677
  %3762 = vmatprep.subr.mxu0 0.0
  %3763 = vmatpush1.msra.mxu0 %v3679
  %3764 = vmatprep.subr.mxu0 0.0
  %3765 = vmatpush1.msra.mxu0 %v3681
  %3766 = vmatprep.subr.mxu0 0.0
  %3767 = vmatpush1.msra.mxu0 %v3683
  %3768 = vmatprep.subr.mxu0 0.0
  %3769 = vmatpush1.msra.mxu0 %v3685
  %3770 = vmatprep.subr.mxu0 0.0
  %3771 = vmatpush1.msra.mxu0 %v3687
  %3772 = vmatprep.subr.mxu0 0.0
  %3773 = vmatpush1.msra.mxu0 %v3689
  %3774 = vmatprep.subr.mxu0 0.0
  %3775 = vmatpush1.msra.mxu0 %v3691
  %3776 = vmatprep.subr.mxu0 0.0
  %3777 = vmatpush1.msra.mxu0 %v3693
  %3778 = vmatprep.subr.mxu0 0.0
  %3779 = vmatpush1.msra.mxu0 0.0
  %3780 = vmatprep.subr.mxu0 0.0
  %3781 = vmatpush1.msra.mxu0 0.0
  %3782 = vmatprep.subr.mxu0 0.0
  %3783 = vmatpush1.msra.mxu0 0.0
  %3784 = vmatprep.subr.mxu0 0.0
  %3785 = vmatpush1.msra.mxu0 0.0
  %3786 = vmatprep.subr.mxu0 0.0
  %3787 = vmatpush1.msra.mxu0 0.0
  %3788 = vmatprep.subr.mxu0 0.0
  %3789 = vmatpush1.msra.mxu0 0.0
  %3790 = vmatprep.subr.mxu0 0.0
  %3791 = vmatpush1.msra.mxu0 0.0
  %3792 = vmatprep.subr.mxu0 0.0
  %3793 = vmatpush1.msra.mxu0 0.0
  %3794 = vmatprep.subr.mxu0 0.0
  %3795 = vmatpush1.msra.mxu0 0.0
  %3796 = vmatprep.subr.mxu0 0.0
  %3797 = vmatpush1.msra.mxu0 0.0
  %3798 = vmatprep.subr.mxu0 0.0
  %3799 = vmatpush1.msra.mxu0 0.0
  %3800 = vmatprep.subr.mxu0 0.0
  %3801 = vmatpush1.msra.mxu0 0.0
  %3802 = vmatprep.subr.mxu0 0.0
  %3803 = vmatpush1.msra.mxu0 0.0
  %3804 = vmatprep.subr.mxu0 0.0
  %3805 = vmatpush1.msra.mxu0 0.0
  %3806 = vmatprep.subr.mxu0 0.0
  %3807 = vmatpush1.msra.mxu0 0.0
  %3808 = vmatprep.subr.mxu0 0.0
  %3809 = vmatpush1.msra.mxu0 0.0
  %3810 = vmatprep.subr.mxu0 0.0
  %3811 = vmatpush1.msra.mxu0 0.0
  %3812 = vmatprep.subr.mxu0 0.0
  %3813 = vmatpush1.msra.mxu0 0.0
  %3814 = vmatprep.mubr.f32.mxu0 0.0
  %3815 = vmatmul.mubr.f32.gmra.mrb[0].mxu0 %v3709
  %v3816 = vpop.f32.mrb[0].mxu0
  %v3817 = vadd.f32 0.0, %v3816
  %v3818 = vpop.f32.mrb[0].mxu0
  %3819 = vmatprep.mubr.f32.mxu0 0.0
  %3820 = vmatmul.mubr.f32.gmra.mrb[0].mxu0 %v3712
  %v3821 = vpop.f32.mrb[0].mxu0
  %v3822 = vadd.f32 0.0, %v3821
  %v3823 = vpop.f32.mrb[0].mxu0
  %3824 = vmatprep.mubr.f32.mxu0 0.0
  %3825 = vmatmul.mubr.f32.gmra.mrb[0].mxu0 %v3715
  %v3826 = vpop.f32.mrb[0].mxu0
  %v3827 = vadd.f32 0.0, %v3826
  %v3828 = vpop.f32.mrb[0].mxu0
  %3829 = vmatprep.mubr.f32.mxu0 0.0
  %3830 = vmatmul.mubr.f32.gmra.mrb[0].mxu0 %v3718
  %v3831 = vpop.f32.mrb[0].mxu0
  %v3832 = vadd.f32 0.0, %v3831
  %v3833 = vpop.f32.mrb[0].mxu0
  %3834 = vmatprep.mubr.f32.mxu0 0.0
  %3835 = vmatmul.mubr.f32.gmra.mrb[0].mxu0 %v3721
  %v3836 = vpop.f32.mrb[0].mxu0
  %v3837 = vadd.f32 0.0, %v3836
  %v3838 = vpop.f32.mrb[0].mxu0
  %3839 = vmatprep.mubr.f32.mxu0 0.0
  %3840 = vmatmul.mubr.f32.gmra.mrb[0].mxu0 %v3724
  %v3841 = vpop.f32.mrb[0].mxu0
  %v3842 = vadd.f32 0.0, %v3841
  %v3843 = vpop.f32.mrb[0].mxu0
  %3844 = vmatprep.mubr.f32.mxu0 0.0
  %3845 = vmatmul.mubr.f32.gmra.mrb[0].mxu0 %v3727
  %v3846 = vpop.f32.mrb[0].mxu0
  %v3847 = vadd.f32 0.0, %v3846
  %v3848 = vpop.f32.mrb[0].mxu0
  %3849 = vmatprep.mubr.f32.mxu0 0.0
  %3850 = vmatmul.mubr.f32.gmra.mrb[0].mxu0 %v3730
  %v3851 = vpop.f32.mrb[0].mxu0
  %v3852 = vadd.f32 0.0, %v3851
  %v3853 = vpop.f32.mrb[0].mxu0
  %3854 = vmatprep.mubr.f32.mxu0 0.0
  %3855 = vmatmul.mubr.f32.gmra.mrb[0].mxu0 %v3733
  %v3856 = vpop.f32.mrb[0].mxu0
  %v3857 = vadd.f32 0.0, %v3856
  %v3858 = vpop.f32.mrb[0].mxu0
  %3859 = vmatprep.mubr.f32.mxu0 0.0
  %3860 = vmatmul.mubr.f32.gmra.mrb[0].mxu0 %v3736
  %v3861 = vpop.f32.mrb[0].mxu0
  %v3862 = vadd.f32 0.0, %v3861
  %v3863 = vpop.f32.mrb[0].mxu0
  %3864 = vmatprep.mubr.f32.mxu0 0.0
  %3865 = vmatmul.mubr.f32.gmra.mrb[0].mxu0 %v3739
  %v3866 = vpop.f32.mrb[0].mxu0
  %v3867 = vadd.f32 0.0, %v3866
  %v3868 = vpop.f32.mrb[0].mxu0
  %3869 = vmatprep.mubr.f32.mxu0 0.0
  %3870 = vmatmul.mubr.f32.gmra.mrb[0].mxu0 %v3742
  %v3871 = vpop.f32.mrb[0].mxu0
  %v3872 = vadd.f32 0.0, %v3871
  %v3873 = vpop.f32.mrb[0].mxu0
  %3874 = vmatprep.mubr.f32.mxu0 0.0
  %3875 = vmatmul.mubr.f32.gmra.mrb[0].mxu0 %v3745
  %v3876 = vpop.f32.mrb[0].mxu0
  %v3877 = vadd.f32 0.0, %v3876
  %v3878 = vpop.f32.mrb[0].mxu0
  %3879 = vmatprep.mubr.f32.mxu0 0.0
  %3880 = vmatmul.mubr.f32.gmra.mrb[0].mxu0 %v3748
  %v3881 = vpop.f32.mrb[0].mxu0
  %v3882 = vadd.f32 0.0, %v3881
  %v3883 = vpop.f32.mrb[0].mxu0
  %3884 = vdwg.mxu0
  %3899 = vrot.lane.b32.xlu0 %v3817, 16
  %v3900 = vpop.permute.xlu0 %3899
  %3901 = vrot.lane.b32.xlu0 %v3822, 16
  %v3902 = vpop.permute.xlu0 %3901
  %3903 = vrot.lane.b32.xlu0 %v3827, 16
  %v3904 = vpop.permute.xlu0 %3903
  %3905 = vrot.lane.b32.xlu0 %v3832, 16
  %v3906 = vpop.permute.xlu0 %3905
  %3907 = vrot.lane.b32.xlu0 %v3837, 16
  %v3908 = vpop.permute.xlu0 %3907
  %3909 = vrot.lane.b32.xlu0 %v3842, 16
  %v3910 = vpop.permute.xlu0 %3909
  %3911 = vrot.lane.b32.xlu0 %v3847, 16
  %v3912 = vpop.permute.xlu0 %3911
  %3913 = vrot.lane.b32.xlu0 %v3852, 16
  %v3914 = vpop.permute.xlu0 %3913
  %3915 = vrot.lane.b32.xlu0 %v3857, 16
  %v3916 = vpop.permute.xlu0 %3915
  %3917 = vrot.lane.b32.xlu0 %v3862, 16
  %v3918 = vpop.permute.xlu0 %3917
  %3919 = vrot.lane.b32.xlu0 %v3867, 16
  %v3920 = vpop.permute.xlu0 %3919
  %3921 = vrot.lane.b32.xlu0 %v3872, 16
  %v3922 = vpop.permute.xlu0 %3921
  %3923 = vrot.lane.b32.xlu0 %v3877, 16
  %v3924 = vpop.permute.xlu0 %3923
  %3925 = vrot.lane.b32.xlu0 %v3882, 16
  %v3926 = vpop.permute.xlu0 %3925
  %v3941 = vsel %vm2643, %v3169, %v3900
  %v3942 = vsel %vm2643, %v3174, %v3902
  %v3943 = vsel %vm2643, %v3179, %v3904
  %v3944 = vsel %vm2643, %v3184, %v3906
  %v3945 = vsel %vm2643, %v3189, %v3908
  %v3946 = vsel %vm2643, %v3194, %v3910
  %v3947 = vsel %vm2643, %v3199, %v3912
  %v3948 = vsel %vm2643, %v3204, %v3914
  %v3949 = vsel %vm2643, %v3209, %v3916
  %v3950 = vsel %vm2643, %v3214, %v3918
  %v3951 = vsel %vm2643, %v3219, %v3920
  %v3952 = vsel %vm2643, %v3224, %v3922
  %v3953 = vsel %vm2643, %v3229, %v3924
  %v3954 = vsel %vm2643, %v3234, %v3926
  %v3955 = vld [vmem:[%s12] sm:$0xff]
  %v3956 = vld [vmem:[%s12 + $0x8] sm:$0xff]
  %v3957 = vld [vmem:[%s12 + $0x10] sm:$0xff]
  %v3958 = vld [vmem:[%s12 + $0x18] sm:$0xff]
  %v3959 = vld [vmem:[%s13] sm:$0x1]
  %v3961 = vlaneseq
  %v3962 = vshrl.u32 %v3961, 7
  %v3963 = vsub.s32 0, %v3962
  %v3964 = vrot.slane %v3959, %v3963
  %v3967 = vsel %vm2207, %v3941, 0
  %v3970 = vsel %vm2207, %v3942, 0
  %v3973 = vsel %vm2207, %v3943, 0
  %v3976 = vsel %vm2207, %v3944, 0
  %v3979 = vsel %vm2207, %v3945, 0
  %v3982 = vsel %vm2207, %v3946, 0
  %v3985 = vsel %vm2207, %v3947, 0
  %v3988 = vsel %vm2207, %v3948, 0
  %v3991 = vsel %vm2207, %v3949, 0
  %v3994 = vsel %vm2207, %v3950, 0
  %v3997 = vsel %vm2207, %v3951, 0
  %v4000 = vsel %vm2207, %v3952, 0
  %v4003 = vsel %vm2207, %v3953, 0
  %v4006 = vsel %vm2207, %v3954, 0
  %4008 = vmatprep.subr.mxu0 0.0
  %4009 = vmatpush1.msra.mxu0 %v3955
  %4010 = vmatprep.subr.mxu0 0.0
  %4011 = vmatpush1.msra.mxu0 %v3956
  %4012 = vmatprep.subr.mxu0 0.0
  %4013 = vmatpush1.msra.mxu0 %v3957
  %4014 = vmatprep.subr.mxu0 0.0
  %4015 = vmatpush1.msra.mxu0 %v3958
  %4016 = vmatprep.subr.mxu0 0.0
  %4017 = vmatpush1.msra.mxu0 0.0
  %4018 = vmatprep.subr.mxu0 0.0
  %4019 = vmatpush1.msra.mxu0 0.0
  %4020 = vmatprep.subr.mxu0 0.0
  %4021 = vmatpush1.msra.mxu0 0.0
  %4022 = vmatprep.subr.mxu0 0.0
  %4023 = vmatpush1.msra.mxu0 0.0
  %4024 = vmatprep.subr.mxu0 0.0
  %4025 = vmatpush1.msra.mxu0 0.0
  %4026 = vmatprep.subr.mxu0 0.0
  %4027 = vmatpush1.msra.mxu0 0.0
  %4028 = vmatprep.subr.mxu0 0.0
  %4029 = vmatpush1.msra.mxu0 0.0
  %4030 = vmatprep.subr.mxu0 0.0
  %4031 = vmatpush1.msra.mxu0 0.0
  %4032 = vmatprep.subr.mxu0 0.0
  %4033 = vmatpush1.msra.mxu0 0.0
  %4034 = vmatprep.subr.mxu0 0.0
  %4035 = vmatpush1.msra.mxu0 0.0
  %4036 = vmatprep.subr.mxu0 0.0
  %4037 = vmatpush1.msra.mxu0 0.0
  %4038 = vmatprep.subr.mxu0 0.0
  %4039 = vmatpush1.msra.mxu0 0.0
  %4040 = vmatprep.subr.mxu0 0.0
  %4041 = vmatpush1.msra.mxu0 0.0
  %4042 = vmatprep.subr.mxu0 0.0
  %4043 = vmatpush1.msra.mxu0 0.0
  %4044 = vmatprep.subr.mxu0 0.0
  %4045 = vmatpush1.msra.mxu0 0.0
  %4046 = vmatprep.subr.mxu0 0.0
  %4047 = vmatpush1.msra.mxu0 0.0
  %4048 = vmatprep.subr.mxu0 0.0
  %4049 = vmatpush1.msra.mxu0 0.0
  %4050 = vmatprep.subr.mxu0 0.0
  %4051 = vmatpush1.msra.mxu0 0.0
  %4052 = vmatprep.subr.mxu0 0.0
  %4053 = vmatpush1.msra.mxu0 0.0
  %4054 = vmatprep.subr.mxu0 0.0
  %4055 = vmatpush1.msra.mxu0 0.0
  %4056 = vmatprep.subr.mxu0 0.0
  %4057 = vmatpush1.msra.mxu0 0.0
  %4058 = vmatprep.subr.mxu0 0.0
  %4059 = vmatpush1.msra.mxu0 0.0
  %4060 = vmatprep.subr.mxu0 0.0
  %4061 = vmatpush1.msra.mxu0 0.0
  %4062 = vmatprep.subr.mxu0 0.0
  %4063 = vmatpush1.msra.mxu0 0.0
  %4064 = vmatprep.subr.mxu0 0.0
  %4065 = vmatpush1.msra.mxu0 0.0
  %4066 = vmatprep.subr.mxu0 0.0
  %4067 = vmatpush1.msra.mxu0 0.0
  %4068 = vmatprep.subr.mxu0 0.0
  %4069 = vmatpush1.msra.mxu0 0.0
  %4070 = vmatprep.subr.mxu0 0.0
  %4071 = vmatpush1.msra.mxu0 0.0
  %4072 = vmatprep.mubr.f32.mxu0 0.0
  %4073 = vmatmul.mubr.f32.gmra.mrb[0].mxu0 %v3967
  %v4074 = vpop.f32.mrb[0].mxu0
  %v4075 = vadd.f32 %v3964, %v4074
  %v4076 = vpop.f32.mrb[0].mxu0
  %4077 = vmatprep.mubr.f32.mxu0 0.0
  %4078 = vmatmul.mubr.f32.gmra.mrb[0].mxu0 %v3970
  %v4079 = vpop.f32.mrb[0].mxu0
  %v4080 = vadd.f32 %v3964, %v4079
  %v4081 = vpop.f32.mrb[0].mxu0
  %4082 = vmatprep.mubr.f32.mxu0 0.0
  %4083 = vmatmul.mubr.f32.gmra.mrb[0].mxu0 %v3973
  %v4084 = vpop.f32.mrb[0].mxu0
  %v4085 = vadd.f32 %v3964, %v4084
  %v4086 = vpop.f32.mrb[0].mxu0
  %4087 = vmatprep.mubr.f32.mxu0 0.0
  %4088 = vmatmul.mubr.f32.gmra.mrb[0].mxu0 %v3976
  %v4089 = vpop.f32.mrb[0].mxu0
  %v4090 = vadd.f32 %v3964, %v4089
  %v4091 = vpop.f32.mrb[0].mxu0
  %4092 = vmatprep.mubr.f32.mxu0 0.0
  %4093 = vmatmul.mubr.f32.gmra.mrb[0].mxu0 %v3979
  %v4094 = vpop.f32.mrb[0].mxu0
  %v4095 = vadd.f32 %v3964, %v4094
  %v4096 = vpop.f32.mrb[0].mxu0
  %4097 = vmatprep.mubr.f32.mxu0 0.0
  %4098 = vmatmul.mubr.f32.gmra.mrb[0].mxu0 %v3982
  %v4099 = vpop.f32.mrb[0].mxu0
  %v4100 = vadd.f32 %v3964, %v4099
  %v4101 = vpop.f32.mrb[0].mxu0
  %4102 = vmatprep.mubr.f32.mxu0 0.0
  %4103 = vmatmul.mubr.f32.gmra.mrb[0].mxu0 %v3985
  %v4104 = vpop.f32.mrb[0].mxu0
  %v4105 = vadd.f32 %v3964, %v4104
  %v4106 = vpop.f32.mrb[0].mxu0
  %4107 = vmatprep.mubr.f32.mxu0 0.0
  %4108 = vmatmul.mubr.f32.gmra.mrb[0].mxu0 %v3988
  %v4109 = vpop.f32.mrb[0].mxu0
  %v4110 = vadd.f32 %v3964, %v4109
  %v4111 = vpop.f32.mrb[0].mxu0
  %4112 = vmatprep.mubr.f32.mxu0 0.0
  %4113 = vmatmul.mubr.f32.gmra.mrb[0].mxu0 %v3991
  %v4114 = vpop.f32.mrb[0].mxu0
  %v4115 = vadd.f32 %v3964, %v4114
  %v4116 = vpop.f32.mrb[0].mxu0
  %4117 = vmatprep.mubr.f32.mxu0 0.0
  %4118 = vmatmul.mubr.f32.gmra.mrb[0].mxu0 %v3994
  %v4119 = vpop.f32.mrb[0].mxu0
  %v4120 = vadd.f32 %v3964, %v4119
  %v4121 = vpop.f32.mrb[0].mxu0
  %4122 = vmatprep.mubr.f32.mxu0 0.0
  %4123 = vmatmul.mubr.f32.gmra.mrb[0].mxu0 %v3997
  %v4124 = vpop.f32.mrb[0].mxu0
  %v4125 = vadd.f32 %v3964, %v4124
  %v4126 = vpop.f32.mrb[0].mxu0
  %4127 = vmatprep.mubr.f32.mxu0 0.0
  %4128 = vmatmul.mubr.f32.gmra.mrb[0].mxu0 %v4000
  %v4129 = vpop.f32.mrb[0].mxu0
  %v4130 = vadd.f32 %v3964, %v4129
  %v4131 = vpop.f32.mrb[0].mxu0
  %4132 = vmatprep.mubr.f32.mxu0 0.0
  %4133 = vmatmul.mubr.f32.gmra.mrb[0].mxu0 %v4003
  %v4134 = vpop.f32.mrb[0].mxu0
  %v4135 = vadd.f32 %v3964, %v4134
  %v4136 = vpop.f32.mrb[0].mxu0
  %4137 = vmatprep.mubr.f32.mxu0 0.0
  %4138 = vmatmul.mubr.f32.gmra.mrb[0].mxu0 %v4006
  %v4139 = vpop.f32.mrb[0].mxu0
  %v4140 = vadd.f32 %v3964, %v4139
  %v4141 = vpop.f32.mrb[0].mxu0
  %4142 = vdwg.mxu0
  %v4143 = vadd.f32 %v2147, %v4075
  %v4144 = vadd.f32 %v2147, %v4080
  %v4145 = vadd.f32 %v2154, %v4085
  %v4146 = vadd.f32 %v2155, %v4090
  %v4147 = vadd.f32 %v2161, %v4095
  %v4148 = vadd.f32 %v2162, %v4100
  %v4149 = vadd.f32 %v2168, %v4105
  %v4150 = vadd.f32 %v2169, %v4110
  %v4151 = vadd.f32 %v2175, %v4115
  %v4152 = vadd.f32 %v2176, %v4120
  %v4153 = vadd.f32 %v2182, %v4125
  %v4154 = vadd.f32 %v2183, %v4130
  %v4155 = vadd.f32 %v2189, %v4135
  %v4156 = vadd.f32 %v2190, %v4140
  %v4157 = vld [vmem:[%s14] sm:$0x1]
  %v4158 = vld [vmem:[%s15] sm:$0x1]
  %v4159 = vsel %vm2207, %v4143, 0.0
  %4160 = vadd.xlane.f32.xlu0 %v4159
  %v4161 = vpop.xlane.xlu0 %4160
  %v4162 = vsel %vm2207, %v4144, 0.0
  %4163 = vadd.xlane.f32.xlu0 %v4162
  %v4164 = vpop.xlane.xlu0 %4163
  %v4165 = vsel %vm2207, %v4145, 0.0
  %4166 = vadd.xlane.f32.xlu0 %v4165
  %v4167 = vpop.xlane.xlu0 %4166
  %v4168 = vsel %vm2207, %v4146, 0.0
  %4169 = vadd.xlane.f32.xlu0 %v4168
  %v4170 = vpop.xlane.xlu0 %4169
  %v4171 = vsel %vm2207, %v4147, 0.0
  %4172 = vadd.xlane.f32.xlu0 %v4171
  %v4173 = vpop.xlane.xlu0 %4172
  %v4174 = vsel %vm2207, %v4148, 0.0
  %4175 = vadd.xlane.f32.xlu0 %v4174
  %v4176 = vpop.xlane.xlu0 %4175
  %v4177 = vsel %vm2207, %v4149, 0.0
  %4178 = vadd.xlane.f32.xlu0 %v4177
  %v4179 = vpop.xlane.xlu0 %4178
  %v4180 = vsel %vm2207, %v4150, 0.0
  %4181 = vadd.xlane.f32.xlu0 %v4180
  %v4182 = vpop.xlane.xlu0 %4181
  %v4183 = vsel %vm2207, %v4151, 0.0
  %4184 = vadd.xlane.f32.xlu0 %v4183
  %v4185 = vpop.xlane.xlu0 %4184
  %v4186 = vsel %vm2207, %v4152, 0.0
  %4187 = vadd.xlane.f32.xlu0 %v4186
  %v4188 = vpop.xlane.xlu0 %4187
  %v4189 = vsel %vm2207, %v4153, 0.0
  %4190 = vadd.xlane.f32.xlu0 %v4189
  %v4191 = vpop.xlane.xlu0 %4190
  %v4192 = vsel %vm2207, %v4154, 0.0
  %4193 = vadd.xlane.f32.xlu0 %v4192
  %v4194 = vpop.xlane.xlu0 %4193
  %v4195 = vsel %vm2207, %v4155, 0.0
  %4196 = vadd.xlane.f32.xlu0 %v4195
  %v4197 = vpop.xlane.xlu0 %4196
  %v4198 = vsel %vm2207, %v4156, 0.0
  %4199 = vadd.xlane.f32.xlu0 %v4198
  %v4200 = vpop.xlane.xlu0 %4199
  %v4201 = vmul.f32 %v4161, %v2247
  %v4202 = vmul.f32 %v4164, %v2247
  %v4203 = vmul.f32 %v4167, %v2247
  %v4204 = vmul.f32 %v4170, %v2247
  %v4205 = vmul.f32 %v4173, %v2247
  %v4206 = vmul.f32 %v4176, %v2247
  %v4207 = vmul.f32 %v4179, %v2247
  %v4208 = vmul.f32 %v4182, %v2247
  %v4209 = vmul.f32 %v4185, %v2247
  %v4210 = vmul.f32 %v4188, %v2247
  %v4211 = vmul.f32 %v4191, %v2247
  %v4212 = vmul.f32 %v4194, %v2247
  %v4213 = vmul.f32 %v4197, %v2247
  %v4214 = vmul.f32 %v4200, %v2247
  %v4215 = vsub.f32 %v4143, %v4201
  %v4216 = vsub.f32 %v4144, %v4202
  %v4217 = vsub.f32 %v4145, %v4203
  %v4218 = vsub.f32 %v4146, %v4204
  %v4219 = vsub.f32 %v4147, %v4205
  %v4220 = vsub.f32 %v4148, %v4206
  %v4221 = vsub.f32 %v4149, %v4207
  %v4222 = vsub.f32 %v4150, %v4208
  %v4223 = vsub.f32 %v4151, %v4209
  %v4224 = vsub.f32 %v4152, %v4210
  %v4225 = vsub.f32 %v4153, %v4211
  %v4226 = vsub.f32 %v4154, %v4212
  %v4227 = vsub.f32 %v4155, %v4213
  %v4228 = vsub.f32 %v4156, %v4214
  %v4229 = vmul.f32 %v4215, %v4215
  %v4230 = vmul.f32 %v4216, %v4216
  %v4231 = vmul.f32 %v4217, %v4217
  %v4232 = vmul.f32 %v4218, %v4218
  %v4233 = vmul.f32 %v4219, %v4219
  %v4234 = vmul.f32 %v4220, %v4220
  %v4235 = vmul.f32 %v4221, %v4221
  %v4236 = vmul.f32 %v4222, %v4222
  %v4237 = vmul.f32 %v4223, %v4223
  %v4238 = vmul.f32 %v4224, %v4224
  %v4239 = vmul.f32 %v4225, %v4225
  %v4240 = vmul.f32 %v4226, %v4226
  %v4241 = vmul.f32 %v4227, %v4227
  %v4242 = vmul.f32 %v4228, %v4228
  %v4243 = vsel %vm2207, %v4229, 0.0
  %4244 = vadd.xlane.f32.xlu0 %v4243
  %v4245 = vpop.xlane.xlu0 %4244
  %v4246 = vsel %vm2207, %v4230, 0.0
  %4247 = vadd.xlane.f32.xlu0 %v4246
  %v4248 = vpop.xlane.xlu0 %4247
  %v4249 = vsel %vm2207, %v4231, 0.0
  %4250 = vadd.xlane.f32.xlu0 %v4249
  %v4251 = vpop.xlane.xlu0 %4250
  %v4252 = vsel %vm2207, %v4232, 0.0
  %4253 = vadd.xlane.f32.xlu0 %v4252
  %v4254 = vpop.xlane.xlu0 %4253
  %v4255 = vsel %vm2207, %v4233, 0.0
  %4256 = vadd.xlane.f32.xlu0 %v4255
  %v4257 = vpop.xlane.xlu0 %4256
  %v4258 = vsel %vm2207, %v4234, 0.0
  %4259 = vadd.xlane.f32.xlu0 %v4258
  %v4260 = vpop.xlane.xlu0 %4259
  %v4261 = vsel %vm2207, %v4235, 0.0
  %4262 = vadd.xlane.f32.xlu0 %v4261
  %v4263 = vpop.xlane.xlu0 %4262
  %v4264 = vsel %vm2207, %v4236, 0.0
  %4265 = vadd.xlane.f32.xlu0 %v4264
  %v4266 = vpop.xlane.xlu0 %4265
  %v4267 = vsel %vm2207, %v4237, 0.0
  %4268 = vadd.xlane.f32.xlu0 %v4267
  %v4269 = vpop.xlane.xlu0 %4268
  %v4270 = vsel %vm2207, %v4238, 0.0
  %4271 = vadd.xlane.f32.xlu0 %v4270
  %v4272 = vpop.xlane.xlu0 %4271
  %v4273 = vsel %vm2207, %v4239, 0.0
  %4274 = vadd.xlane.f32.xlu0 %v4273
  %v4275 = vpop.xlane.xlu0 %4274
  %v4276 = vsel %vm2207, %v4240, 0.0
  %4277 = vadd.xlane.f32.xlu0 %v4276
  %v4278 = vpop.xlane.xlu0 %4277
  %v4279 = vsel %vm2207, %v4241, 0.0
  %4280 = vadd.xlane.f32.xlu0 %v4279
  %v4281 = vpop.xlane.xlu0 %4280
  %v4282 = vsel %vm2207, %v4242, 0.0
  %4283 = vadd.xlane.f32.xlu0 %v4282
  %v4284 = vpop.xlane.xlu0 %4283
  %v4285 = vmul.f32 %v4245, %v2247
  %v4286 = vmul.f32 %v4248, %v2247
  %v4287 = vmul.f32 %v4251, %v2247
  %v4288 = vmul.f32 %v4254, %v2247
  %v4289 = vmul.f32 %v4257, %v2247
  %v4290 = vmul.f32 %v4260, %v2247
  %v4291 = vmul.f32 %v4263, %v2247
  %v4292 = vmul.f32 %v4266, %v2247
  %v4293 = vmul.f32 %v4269, %v2247
  %v4294 = vmul.f32 %v4272, %v2247
  %v4295 = vmul.f32 %v4275, %v2247
  %v4296 = vmul.f32 %v4278, %v2247
  %v4297 = vmul.f32 %v4281, %v2247
  %v4298 = vmul.f32 %v4284, %v2247
  %v4299 = vadd.f32 %v4285, 1e-05
  %v4300 = vadd.f32 %v4286, 1e-05
  %v4301 = vadd.f32 %v4287, 1e-05
  %v4302 = vadd.f32 %v4288, 1e-05
  %v4303 = vadd.f32 %v4289, 1e-05
  %v4304 = vadd.f32 %v4290, 1e-05
  %v4305 = vadd.f32 %v4291, 1e-05
  %v4306 = vadd.f32 %v4292, 1e-05
  %v4307 = vadd.f32 %v4293, 1e-05
  %v4308 = vadd.f32 %v4294, 1e-05
  %v4309 = vadd.f32 %v4295, 1e-05
  %v4310 = vadd.f32 %v4296, 1e-05
  %v4311 = vadd.f32 %v4297, 1e-05
  %v4312 = vadd.f32 %v4298, 1e-05
  %v4313 = vrsqrt.pop %v4299
  %v4314 = vrsqrt.pop %v4300
  %v4315 = vrsqrt.pop %v4301
  %v4316 = vrsqrt.pop %v4302
  %v4317 = vrsqrt.pop %v4303
  %v4318 = vrsqrt.pop %v4304
  %v4319 = vrsqrt.pop %v4305
  %v4320 = vrsqrt.pop %v4306
  %v4321 = vrsqrt.pop %v4307
  %v4322 = vrsqrt.pop %v4308
  %v4323 = vrsqrt.pop %v4309
  %v4324 = vrsqrt.pop %v4310
  %v4325 = vrsqrt.pop %v4311
  %v4326 = vrsqrt.pop %v4312
  %v4327 = vmul.f32 %v4215, %v4313
  %v4328 = vmul.f32 %v4216, %v4314
  %v4329 = vmul.f32 %v4217, %v4315
  %v4330 = vmul.f32 %v4218, %v4316
  %v4331 = vmul.f32 %v4219, %v4317
  %v4332 = vmul.f32 %v4220, %v4318
  %v4333 = vmul.f32 %v4221, %v4319
  %v4334 = vmul.f32 %v4222, %v4320
  %v4335 = vmul.f32 %v4223, %v4321
  %v4336 = vmul.f32 %v4224, %v4322
  %v4337 = vmul.f32 %v4225, %v4323
  %v4338 = vmul.f32 %v4226, %v4324
  %v4339 = vmul.f32 %v4227, %v4325
  %v4340 = vmul.f32 %v4228, %v4326
  %v4342 = vlaneseq
  %v4343 = vshrl.u32 %v4342, 7
  %v4344 = vsub.s32 0, %v4343
  %v4345 = vrot.slane %v4157, %v4344
  %v4347 = vmul.f32 %v4327, %v4345
  %v4348 = vmul.f32 %v4328, %v4345
  %v4349 = vmul.f32 %v4329, %v4345
  %v4350 = vmul.f32 %v4330, %v4345
  %v4351 = vmul.f32 %v4331, %v4345
  %v4352 = vmul.f32 %v4332, %v4345
  %v4353 = vmul.f32 %v4333, %v4345
  %v4354 = vmul.f32 %v4334, %v4345
  %v4355 = vmul.f32 %v4335, %v4345
  %v4356 = vmul.f32 %v4336, %v4345
  %v4357 = vmul.f32 %v4337, %v4345
  %v4358 = vmul.f32 %v4338, %v4345
  %v4359 = vmul.f32 %v4339, %v4345
  %v4360 = vmul.f32 %v4340, %v4345
  %v4362 = vlaneseq
  %v4363 = vshrl.u32 %v4362, 7
  %v4364 = vsub.s32 0, %v4363
  %v4365 = vrot.slane %v4158, %v4364
  %v4367 = vadd.f32 %v4347, %v4365
  %v4368 = vadd.f32 %v4348, %v4365
  %v4369 = vadd.f32 %v4349, %v4365
  %v4370 = vadd.f32 %v4350, %v4365
  %v4371 = vadd.f32 %v4351, %v4365
  %v4372 = vadd.f32 %v4352, %v4365
  %v4373 = vadd.f32 %v4353, %v4365
  %v4374 = vadd.f32 %v4354, %v4365
  %v4375 = vadd.f32 %v4355, %v4365
  %v4376 = vadd.f32 %v4356, %v4365
  %v4377 = vadd.f32 %v4357, %v4365
  %v4378 = vadd.f32 %v4358, %v4365
  %v4379 = vadd.f32 %v4359, %v4365
  %v4380 = vadd.f32 %v4360, %v4365
  %v4381 = vld [vmem:[%s16] sm:$0xff]
  %v4382 = vld [vmem:[%s16 + $0x8] sm:$0xff]
  %v4383 = vld [vmem:[%s16 + $0x10] sm:$0xff]
  %v4384 = vld [vmem:[%s16 + $0x18] sm:$0xff]
  %v4385 = vld [vmem:[%s17] sm:$0x1]
  %v4387 = vlaneseq
  %v4388 = vshrl.u32 %v4387, 7
  %v4389 = vsub.s32 0, %v4388
  %v4390 = vrot.slane %v4385, %v4389
  %v4393 = vsel %vm2207, %v4367, 0
  %v4396 = vsel %vm2207, %v4368, 0
  %v4399 = vsel %vm2207, %v4369, 0
  %v4402 = vsel %vm2207, %v4370, 0
  %v4405 = vsel %vm2207, %v4371, 0
  %v4408 = vsel %vm2207, %v4372, 0
  %v4411 = vsel %vm2207, %v4373, 0
  %v4414 = vsel %vm2207, %v4374, 0
  %v4417 = vsel %vm2207, %v4375, 0
  %v4420 = vsel %vm2207, %v4376, 0
  %v4423 = vsel %vm2207, %v4377, 0
  %v4426 = vsel %vm2207, %v4378, 0
  %v4429 = vsel %vm2207, %v4379, 0
  %v4432 = vsel %vm2207, %v4380, 0
  %4434 = vmatprep.subr.mxu0 0.0
  %4435 = vmatpush1.msra.mxu0 %v4381
  %4436 = vmatprep.subr.mxu0 0.0
  %4437 = vmatpush1.msra.mxu0 %v4382
  %4438 = vmatprep.subr.mxu0 0.0
  %4439 = vmatpush1.msra.mxu0 %v4383
  %4440 = vmatprep.subr.mxu0 0.0
  %4441 = vmatpush1.msra.mxu0 %v4384
  %4442 = vmatprep.subr.mxu0 0.0
  %4443 = vmatpush1.msra.mxu0 0.0
  %4444 = vmatprep.subr.mxu0 0.0
  %4445 = vmatpush1.msra.mxu0 0.0
  %4446 = vmatprep.subr.mxu0 0.0
  %4447 = vmatpush1.msra.mxu0 0.0
  %4448 = vmatprep.subr.mxu0 0.0
  %4449 = vmatpush1.msra.mxu0 0.0
  %4450 = vmatprep.subr.mxu0 0.0
  %4451 = vmatpush1.msra.mxu0 0.0
  %4452 = vmatprep.subr.mxu0 0.0
  %4453 = vmatpush1.msra.mxu0 0.0
  %4454 = vmatprep.subr.mxu0 0.0
  %4455 = vmatpush1.msra.mxu0 0.0
  %4456 = vmatprep.subr.mxu0 0.0
  %4457 = vmatpush1.msra.mxu0 0.0
  %4458 = vmatprep.subr.mxu0 0.0
  %4459 = vmatpush1.msra.mxu0 0.0
  %4460 = vmatprep.subr.mxu0 0.0
  %4461 = vmatpush1.msra.mxu0 0.0
  %4462 = vmatprep.subr.mxu0 0.0
  %4463 = vmatpush1.msra.mxu0 0.0
  %4464 = vmatprep.subr.mxu0 0.0
  %4465 = vmatpush1.msra.mxu0 0.0
  %4466 = vmatprep.subr.mxu0 0.0
  %4467 = vmatpush1.msra.mxu0 0.0
  %4468 = vmatprep.subr.mxu0 0.0
  %4469 = vmatpush1.msra.mxu0 0.0
  %4470 = vmatprep.subr.mxu0 0.0
  %4471 = vmatpush1.msra.mxu0 0.0
  %4472 = vmatprep.subr.mxu0 0.0
  %4473 = vmatpush1.msra.mxu0 0.0
  %4474 = vmatprep.subr.mxu0 0.0
  %4475 = vmatpush1.msra.mxu0 0.0
  %4476 = vmatprep.subr.mxu0 0.0
  %4477 = vmatpush1.msra.mxu0 0.0
  %4478 = vmatprep.subr.mxu0 0.0
  %4479 = vmatpush1.msra.mxu0 0.0
  %4480 = vmatprep.subr.mxu0 0.0
  %4481 = vmatpush1.msra.mxu0 0.0
  %4482 = vmatprep.subr.mxu0 0.0
  %4483 = vmatpush1.msra.mxu0 0.0
  %4484 = vmatprep.subr.mxu0 0.0
  %4485 = vmatpush1.msra.mxu0 0.0
  %4486 = vmatprep.subr.mxu0 0.0
  %4487 = vmatpush1.msra.mxu0 0.0
  %4488 = vmatprep.subr.mxu0 0.0
  %4489 = vmatpush1.msra.mxu0 0.0
  %4490 = vmatprep.subr.mxu0 0.0
  %4491 = vmatpush1.msra.mxu0 0.0
  %4492 = vmatprep.subr.mxu0 0.0
  %4493 = vmatpush1.msra.mxu0 0.0
  %4494 = vmatprep.subr.mxu0 0.0
  %4495 = vmatpush1.msra.mxu0 0.0
  %4496 = vmatprep.subr.mxu0 0.0
  %4497 = vmatpush1.msra.mxu0 0.0
  %4498 = vmatprep.mubr.f32.mxu0 0.0
  %4499 = vmatmul.mubr.f32.gmra.mrb[0].mxu0 %v4393
  %v4500 = vpop.f32.mrb[0].mxu0
  %v4501 = vadd.f32 %v4390, %v4500
  %v4502 = vpop.f32.mrb[0].mxu0
  %4503 = vmatprep.mubr.f32.mxu0 0.0
  %4504 = vmatmul.mubr.f32.gmra.mrb[0].mxu0 %v4396
  %v4505 = vpop.f32.mrb[0].mxu0
  %v4506 = vadd.f32 %v4390, %v4505
  %v4507 = vpop.f32.mrb[0].mxu0
  %4508 = vmatprep.mubr.f32.mxu0 0.0
  %4509 = vmatmul.mubr.f32.gmra.mrb[0].mxu0 %v4399
  %v4510 = vpop.f32.mrb[0].mxu0
  %v4511 = vadd.f32 %v4390, %v4510
  %v4512 = vpop.f32.mrb[0].mxu0
  %4513 = vmatprep.mubr.f32.mxu0 0.0
  %4514 = vmatmul.mubr.f32.gmra.mrb[0].mxu0 %v4402
  %v4515 = vpop.f32.mrb[0].mxu0
  %v4516 = vadd.f32 %v4390, %v4515
  %v4517 = vpop.f32.mrb[0].mxu0
  %4518 = vmatprep.mubr.f32.mxu0 0.0
  %4519 = vmatmul.mubr.f32.gmra.mrb[0].mxu0 %v4405
  %v4520 = vpop.f32.mrb[0].mxu0
  %v4521 = vadd.f32 %v4390, %v4520
  %v4522 = vpop.f32.mrb[0].mxu0
  %4523 = vmatprep.mubr.f32.mxu0 0.0
  %4524 = vmatmul.mubr.f32.gmra.mrb[0].mxu0 %v4408
  %v4525 = vpop.f32.mrb[0].mxu0
  %v4526 = vadd.f32 %v4390, %v4525
  %v4527 = vpop.f32.mrb[0].mxu0
  %4528 = vmatprep.mubr.f32.mxu0 0.0
  %4529 = vmatmul.mubr.f32.gmra.mrb[0].mxu0 %v4411
  %v4530 = vpop.f32.mrb[0].mxu0
  %v4531 = vadd.f32 %v4390, %v4530
  %v4532 = vpop.f32.mrb[0].mxu0
  %4533 = vmatprep.mubr.f32.mxu0 0.0
  %4534 = vmatmul.mubr.f32.gmra.mrb[0].mxu0 %v4414
  %v4535 = vpop.f32.mrb[0].mxu0
  %v4536 = vadd.f32 %v4390, %v4535
  %v4537 = vpop.f32.mrb[0].mxu0
  %4538 = vmatprep.mubr.f32.mxu0 0.0
  %4539 = vmatmul.mubr.f32.gmra.mrb[0].mxu0 %v4417
  %v4540 = vpop.f32.mrb[0].mxu0
  %v4541 = vadd.f32 %v4390, %v4540
  %v4542 = vpop.f32.mrb[0].mxu0
  %4543 = vmatprep.mubr.f32.mxu0 0.0
  %4544 = vmatmul.mubr.f32.gmra.mrb[0].mxu0 %v4420
  %v4545 = vpop.f32.mrb[0].mxu0
  %v4546 = vadd.f32 %v4390, %v4545
  %v4547 = vpop.f32.mrb[0].mxu0
  %4548 = vmatprep.mubr.f32.mxu0 0.0
  %4549 = vmatmul.mubr.f32.gmra.mrb[0].mxu0 %v4423
  %v4550 = vpop.f32.mrb[0].mxu0
  %v4551 = vadd.f32 %v4390, %v4550
  %v4552 = vpop.f32.mrb[0].mxu0
  %4553 = vmatprep.mubr.f32.mxu0 0.0
  %4554 = vmatmul.mubr.f32.gmra.mrb[0].mxu0 %v4426
  %v4555 = vpop.f32.mrb[0].mxu0
  %v4556 = vadd.f32 %v4390, %v4555
  %v4557 = vpop.f32.mrb[0].mxu0
  %4558 = vmatprep.mubr.f32.mxu0 0.0
  %4559 = vmatmul.mubr.f32.gmra.mrb[0].mxu0 %v4429
  %v4560 = vpop.f32.mrb[0].mxu0
  %v4561 = vadd.f32 %v4390, %v4560
  %v4562 = vpop.f32.mrb[0].mxu0
  %4563 = vmatprep.mubr.f32.mxu0 0.0
  %4564 = vmatmul.mubr.f32.gmra.mrb[0].mxu0 %v4432
  %v4565 = vpop.f32.mrb[0].mxu0
  %v4566 = vadd.f32 %v4390, %v4565
  %v4567 = vpop.f32.mrb[0].mxu0
  %4568 = vdwg.mxu0
  %v4569 = vmul.f32 %v4501, 0.5
  %v4570 = vmul.f32 %v4506, 0.5
  %v4571 = vmul.f32 %v4511, 0.5
  %v4572 = vmul.f32 %v4516, 0.5
  %v4573 = vmul.f32 %v4521, 0.5
  %v4574 = vmul.f32 %v4526, 0.5
  %v4575 = vmul.f32 %v4531, 0.5
  %v4576 = vmul.f32 %v4536, 0.5
  %v4577 = vmul.f32 %v4541, 0.5
  %v4578 = vmul.f32 %v4546, 0.5
  %v4579 = vmul.f32 %v4551, 0.5
  %v4580 = vmul.f32 %v4556, 0.5
  %v4581 = vmul.f32 %v4561, 0.5
  %v4582 = vmul.f32 %v4566, 0.5
  %v4583 = vmul.f32 %v4501, 0.044715
  %v4584 = vmul.f32 %v4506, 0.044715
  %v4585 = vmul.f32 %v4511, 0.044715
  %v4586 = vmul.f32 %v4516, 0.044715
  %v4587 = vmul.f32 %v4521, 0.044715
  %v4588 = vmul.f32 %v4526, 0.044715
  %v4589 = vmul.f32 %v4531, 0.044715
  %v4590 = vmul.f32 %v4536, 0.044715
  %v4591 = vmul.f32 %v4541, 0.044715
  %v4592 = vmul.f32 %v4546, 0.044715
  %v4593 = vmul.f32 %v4551, 0.044715
  %v4594 = vmul.f32 %v4556, 0.044715
  %v4595 = vmul.f32 %v4561, 0.044715
  %v4596 = vmul.f32 %v4566, 0.044715
  %v4597 = vmul.f32 %v4583, %v4501
  %v4598 = vmul.f32 %v4584, %v4506
  %v4599 = vmul.f32 %v4585, %v4511
  %v4600 = vmul.f32 %v4586, %v4516
  %v4601 = vmul.f32 %v4587, %v4521
  %v4602 = vmul.f32 %v4588, %v4526
  %v4603 = vmul.f32 %v4589, %v4531
  %v4604 = vmul.f32 %v4590, %v4536
  %v4605 = vmul.f32 %v4591, %v4541
  %v4606 = vmul.f32 %v4592, %v4546
  %v4607 = vmul.f32 %v4593, %v4551
  %v4608 = vmul.f32 %v4594, %v4556
  %v4609 = vmul.f32 %v4595, %v4561
  %v4610 = vmul.f32 %v4596, %v4566
  %v4611 = vmul.f32 %v4597, %v4501
  %v4612 = vmul.f32 %v4598, %v4506
  %v4613 = vmul.f32 %v4599, %v4511
  %v4614 = vmul.f32 %v4600, %v4516
  %v4615 = vmul.f32 %v4601, %v4521
  %v4616 = vmul.f32 %v4602, %v4526
  %v4617 = vmul.f32 %v4603, %v4531
  %v4618 = vmul.f32 %v4604, %v4536
  %v4619 = vmul.f32 %v4605, %v4541
  %v4620 = vmul.f32 %v4606, %v4546
  %v4621 = vmul.f32 %v4607, %v4551
  %v4622 = vmul.f32 %v4608, %v4556
  %v4623 = vmul.f32 %v4609, %v4561
  %v4624 = vmul.f32 %v4610, %v4566
  %v4625 = vadd.f32 %v4501, %v4611
  %v4626 = vadd.f32 %v4506, %v4612
  %v4627 = vadd.f32 %v4511, %v4613
  %v4628 = vadd.f32 %v4516, %v4614
  %v4629 = vadd.f32 %v4521, %v4615
  %v4630 = vadd.f32 %v4526, %v4616
  %v4631 = vadd.f32 %v4531, %v4617
  %v4632 = vadd.f32 %v4536, %v4618
  %v4633 = vadd.f32 %v4541, %v4619
  %v4634 = vadd.f32 %v4546, %v4620
  %v4635 = vadd.f32 %v4551, %v4621
  %v4636 = vadd.f32 %v4556, %v4622
  %v4637 = vadd.f32 %v4561, %v4623
  %v4638 = vadd.f32 %v4566, %v4624
  %v4639 = vmul.f32 %v4625, 0.7978846
  %v4640 = vmul.f32 %v4626, 0.7978846
  %v4641 = vmul.f32 %v4627, 0.7978846
  %v4642 = vmul.f32 %v4628, 0.7978846
  %v4643 = vmul.f32 %v4629, 0.7978846
  %v4644 = vmul.f32 %v4630, 0.7978846
  %v4645 = vmul.f32 %v4631, 0.7978846
  %v4646 = vmul.f32 %v4632, 0.7978846
  %v4647 = vmul.f32 %v4633, 0.7978846
  %v4648 = vmul.f32 %v4634, 0.7978846
  %v4649 = vmul.f32 %v4635, 0.7978846
  %v4650 = vmul.f32 %v4636, 0.7978846
  %v4651 = vmul.f32 %v4637, 0.7978846
  %v4652 = vmul.f32 %v4638, 0.7978846
  %v4653 = vtanh.pop %v4639
  %v4654 = vtanh.pop %v4640
  %v4655 = vtanh.pop %v4641
  %v4656 = vtanh.pop %v4642
  %v4657 = vtanh.pop %v4643
  %v4658 = vtanh.pop %v4644
  %v4659 = vtanh.pop %v4645
  %v4660 = vtanh.pop %v4646
  %v4661 = vtanh.pop %v4647
  %v4662 = vtanh.pop %v4648
  %v4663 = vtanh.pop %v4649
  %v4664 = vtanh.pop %v4650
  %v4665 = vtanh.pop %v4651
  %v4666 = vtanh.pop %v4652
  %v4667 = vadd.f32 %v4653, 1.0
  %v4668 = vadd.f32 %v4654, 1.0
  %v4669 = vadd.f32 %v4655, 1.0
  %v4670 = vadd.f32 %v4656, 1.0
  %v4671 = vadd.f32 %v4657, 1.0
  %v4672 = vadd.f32 %v4658, 1.0
  %v4673 = vadd.f32 %v4659, 1.0
  %v4674 = vadd.f32 %v4660, 1.0
  %v4675 = vadd.f32 %v4661, 1.0
  %v4676 = vadd.f32 %v4662, 1.0
  %v4677 = vadd.f32 %v4663, 1.0
  %v4678 = vadd.f32 %v4664, 1.0
  %v4679 = vadd.f32 %v4665, 1.0
  %v4680 = vadd.f32 %v4666, 1.0
  %v4681 = vmul.f32 %v4569, %v4667
  %v4682 = vmul.f32 %v4570, %v4668
  %v4683 = vmul.f32 %v4571, %v4669
  %v4684 = vmul.f32 %v4572, %v4670
  %v4685 = vmul.f32 %v4573, %v4671
  %v4686 = vmul.f32 %v4574, %v4672
  %v4687 = vmul.f32 %v4575, %v4673
  %v4688 = vmul.f32 %v4576, %v4674
  %v4689 = vmul.f32 %v4577, %v4675
  %v4690 = vmul.f32 %v4578, %v4676
  %v4691 = vmul.f32 %v4579, %v4677
  %v4692 = vmul.f32 %v4580, %v4678
  %v4693 = vmul.f32 %v4581, %v4679
  %v4694 = vmul.f32 %v4582, %v4680
  %v4695 = vld [vmem:[%s18] sm:$0xff]
  %v4696 = vld [vmem:[%s18 + $0x8] sm:$0xff]
  %v4697 = vld [vmem:[%s18 + $0x10] sm:$0xff]
  %v4698 = vld [vmem:[%s18 + $0x18] sm:$0xff]
  %v4699 = vld [vmem:[%s18 + $0x20] sm:$0xff]
  %v4700 = vld [vmem:[%s18 + $0x28] sm:$0xff]
  %v4701 = vld [vmem:[%s18 + $0x30] sm:$0xff]
  %v4702 = vld [vmem:[%s18 + $0x38] sm:$0xff]
  %v4703 = vld [vmem:[%s19] sm:$0x1]
  %v4705 = vlaneseq
  %v4706 = vshrl.u32 %v4705, 7
  %v4707 = vsub.s32 0, %v4706
  %v4708 = vrot.slane %v4703, %v4707
  %vm4710 = vcmask 523264
  %v4712 = vsel %vm4710, %v4681, 0
  %v4715 = vsel %vm4710, %v4682, 0
  %v4718 = vsel %vm4710, %v4683, 0
  %v4721 = vsel %vm4710, %v4684, 0
  %v4724 = vsel %vm4710, %v4685, 0
  %v4727 = vsel %vm4710, %v4686, 0
  %v4730 = vsel %vm4710, %v4687, 0
  %v4733 = vsel %vm4710, %v4688, 0
  %v4736 = vsel %vm4710, %v4689, 0
  %v4739 = vsel %vm4710, %v4690, 0
  %v4742 = vsel %vm4710, %v4691, 0
  %v4745 = vsel %vm4710, %v4692, 0
  %v4748 = vsel %vm4710, %v4693, 0
  %v4751 = vsel %vm4710, %v4694, 0
  %4753 = vmatprep.subr.mxu0 0.0
  %4754 = vmatpush1.msra.mxu0 %v4695
  %4755 = vmatprep.subr.mxu0 0.0
  %4756 = vmatpush1.msra.mxu0 %v4696
  %4757 = vmatprep.subr.mxu0 0.0
  %4758 = vmatpush1.msra.mxu0 %v4697
  %4759 = vmatprep.subr.mxu0 0.0
  %4760 = vmatpush1.msra.mxu0 %v4698
  %4761 = vmatprep.subr.mxu0 0.0
  %4762 = vmatpush1.msra.mxu0 %v4699
  %4763 = vmatprep.subr.mxu0 0.0
  %4764 = vmatpush1.msra.mxu0 %v4700
  %4765 = vmatprep.subr.mxu0 0.0
  %4766 = vmatpush1.msra.mxu0 %v4701
  %4767 = vmatprep.subr.mxu0 0.0
  %4768 = vmatpush1.msra.mxu0 %v4702
  %4769 = vmatprep.subr.mxu0 0.0
  %4770 = vmatpush1.msra.mxu0 0.0
  %4771 = vmatprep.subr.mxu0 0.0
  %4772 = vmatpush1.msra.mxu0 0.0
  %4773 = vmatprep.subr.mxu0 0.0
  %4774 = vmatpush1.msra.mxu0 0.0
  %4775 = vmatprep.subr.mxu0 0.0
  %4776 = vmatpush1.msra.mxu0 0.0
  %4777 = vmatprep.subr.mxu0 0.0
  %4778 = vmatpush1.msra.mxu0 0.0
  %4779 = vmatprep.subr.mxu0 0.0
  %4780 = vmatpush1.msra.mxu0 0.0
  %4781 = vmatprep.subr.mxu0 0.0
  %4782 = vmatpush1.msra.mxu0 0.0
  %4783 = vmatprep.subr.mxu0 0.0
  %4784 = vmatpush1.msra.mxu0 0.0
  %4785 = vmatprep.subr.mxu0 0.0
  %4786 = vmatpush1.msra.mxu0 0.0
  %4787 = vmatprep.subr.mxu0 0.0
  %4788 = vmatpush1.msra.mxu0 0.0
  %4789 = vmatprep.subr.mxu0 0.0
  %4790 = vmatpush1.msra.mxu0 0.0
  %4791 = vmatprep.subr.mxu0 0.0
  %4792 = vmatpush1.msra.mxu0 0.0
  %4793 = vmatprep.subr.mxu0 0.0
  %4794 = vmatpush1.msra.mxu0 0.0
  %4795 = vmatprep.subr.mxu0 0.0
  %4796 = vmatpush1.msra.mxu0 0.0
  %4797 = vmatprep.subr.mxu0 0.0
  %4798 = vmatpush1.msra.mxu0 0.0
  %4799 = vmatprep.subr.mxu0 0.0
  %4800 = vmatpush1.msra.mxu0 0.0
  %4801 = vmatprep.subr.mxu0 0.0
  %4802 = vmatpush1.msra.mxu0 0.0
  %4803 = vmatprep.subr.mxu0 0.0
  %4804 = vmatpush1.msra.mxu0 0.0
  %4805 = vmatprep.subr.mxu0 0.0
  %4806 = vmatpush1.msra.mxu0 0.0
  %4807 = vmatprep.subr.mxu0 0.0
  %4808 = vmatpush1.msra.mxu0 0.0
  %4809 = vmatprep.subr.mxu0 0.0
  %4810 = vmatpush1.msra.mxu0 0.0
  %4811 = vmatprep.subr.mxu0 0.0
  %4812 = vmatpush1.msra.mxu0 0.0
  %4813 = vmatprep.subr.mxu0 0.0
  %4814 = vmatpush1.msra.mxu0 0.0
  %4815 = vmatprep.subr.mxu0 0.0
  %4816 = vmatpush1.msra.mxu0 0.0
  %4817 = vmatprep.mubr.f32.mxu0 0.0
  %4818 = vmatmul.mubr.f32.gmra.mrb[0].mxu0 %v4712
  %v4819 = vpop.f32.mrb[0].mxu0
  %v4820 = vadd.f32 %v4708, %v4819
  %v4821 = vpop.f32.mrb[0].mxu0
  %4822 = vmatprep.mubr.f32.mxu0 0.0
  %4823 = vmatmul.mubr.f32.gmra.mrb[0].mxu0 %v4715
  %v4824 = vpop.f32.mrb[0].mxu0
  %v4825 = vadd.f32 %v4708, %v4824
  %v4826 = vpop.f32.mrb[0].mxu0
  %4827 = vmatprep.mubr.f32.mxu0 0.0
  %4828 = vmatmul.mubr.f32.gmra.mrb[0].mxu0 %v4718
  %v4829 = vpop.f32.mrb[0].mxu0
  %v4830 = vpop.f32.mrb[0].mxu0
  %4831 = vmatprep.mubr.f32.mxu0 0.0
  %4832 = vmatmul.mubr.f32.gmra.mrb[0].mxu0 %v4721
  %v4833 = vpop.f32.mrb[0].mxu0
  %v4834 = vpop.f32.mrb[0].mxu0
  %4835 = vmatprep.mubr.f32.mxu0 0.0
  %4836 = vmatmul.mubr.f32.gmra.mrb[0].mxu0 %v4724
  %v4837 = vpop.f32.mrb[0].mxu0
  %v4838 = vpop.f32.mrb[0].mxu0
  %4839 = vmatprep.mubr.f32.mxu0 0.0
  %4840 = vmatmul.mubr.f32.gmra.mrb[0].mxu0 %v4727
  %v4841 = vpop.f32.mrb[0].mxu0
  %v4842 = vpop.f32.mrb[0].mxu0
  %4843 = vmatprep.mubr.f32.mxu0 0.0
  %4844 = vmatmul.mubr.f32.gmra.mrb[0].mxu0 %v4730
  %v4845 = vpop.f32.mrb[0].mxu0
  %v4846 = vpop.f32.mrb[0].mxu0
  %4847 = vmatprep.mubr.f32.mxu0 0.0
  %4848 = vmatmul.mubr.f32.gmra.mrb[0].mxu0 %v4733
  %v4849 = vpop.f32.mrb[0].mxu0
  %v4850 = vpop.f32.mrb[0].mxu0
  %4851 = vmatprep.mubr.f32.mxu0 0.0
  %4852 = vmatmul.mubr.f32.gmra.mrb[0].mxu0 %v4736
  %v4853 = vpop.f32.mrb[0].mxu0
  %v4854 = vpop.f32.mrb[0].mxu0
  %4855 = vmatprep.mubr.f32.mxu0 0.0
  %4856 = vmatmul.mubr.f32.gmra.mrb[0].mxu0 %v4739
  %v4857 = vpop.f32.mrb[0].mxu0
  %v4858 = vpop.f32.mrb[0].mxu0
  %4859 = vmatprep.mubr.f32.mxu0 0.0
  %4860 = vmatmul.mubr.f32.gmra.mrb[0].mxu0 %v4742
  %v4861 = vpop.f32.mrb[0].mxu0
  %v4862 = vpop.f32.mrb[0].mxu0
  %4863 = vmatprep.mubr.f32.mxu0 0.0
  %4864 = vmatmul.mubr.f32.gmra.mrb[0].mxu0 %v4745
  %v4865 = vpop.f32.mrb[0].mxu0
  %v4866 = vpop.f32.mrb[0].mxu0
  %4867 = vmatprep.mubr.f32.mxu0 0.0
  %4868 = vmatmul.mubr.f32.gmra.mrb[0].mxu0 %v4748
  %v4869 = vpop.f32.mrb[0].mxu0
  %v4870 = vpop.f32.mrb[0].mxu0
  %4871 = vmatprep.mubr.f32.mxu0 0.0
  %4872 = vmatmul.mubr.f32.gmra.mrb[0].mxu0 %v4751
  %v4873 = vpop.f32.mrb[0].mxu0
  %v4874 = vpop.f32.mrb[0].mxu0
  %4875 = vdwg.mxu0
  %v4876 = vadd.f32 %v4143, %v4820
  %v4877 = vadd.f32 %v4144, %v4825
  %v4878 = vld [vmem:[%s21] sm:$0xff]
  %v4879 = vld [vmem:[%s21 + $0x8] sm:$0xff]
  %v4880 = vld [vmem:[%s21 + $0x10] sm:$0xff]
  %v4881 = vld [vmem:[%s21 + $0x18] sm:$0xff]
  %v4882 = vld [vmem:[%s22] sm:$0x1]
  %v4884 = vlaneseq
  %v4885 = vshrl.u32 %v4884, 7
  %v4886 = vsub.s32 0, %v4885
  %v4887 = vrot.slane %v4882, %v4886
  %v4890 = vsel %vm2207, %v4876, 0
  %v4893 = vsel %vm2207, %v4877, 0
  %4895 = vmatprep.subr.mxu0 0.0
  %4896 = vmatpush1.msra.mxu0 %v4878
  %4897 = vmatprep.subr.mxu0 0.0
  %4898 = vmatpush1.msra.mxu0 %v4879
  %4899 = vmatprep.subr.mxu0 0.0
  %4900 = vmatpush1.msra.mxu0 %v4880
  %4901 = vmatprep.subr.mxu0 0.0
  %4902 = vmatpush1.msra.mxu0 %v4881
  %4903 = vmatprep.subr.mxu0 0.0
  %4904 = vmatpush1.msra.mxu0 0.0
  %4905 = vmatprep.subr.mxu0 0.0
  %4906 = vmatpush1.msra.mxu0 0.0
  %4907 = vmatprep.subr.mxu0 0.0
  %4908 = vmatpush1.msra.mxu0 0.0
  %4909 = vmatprep.subr.mxu0 0.0
  %4910 = vmatpush1.msra.mxu0 0.0
  %4911 = vmatprep.subr.mxu0 0.0
  %4912 = vmatpush1.msra.mxu0 0.0
  %4913 = vmatprep.subr.mxu0 0.0
  %4914 = vmatpush1.msra.mxu0 0.0
  %4915 = vmatprep.subr.mxu0 0.0
  %4916 = vmatpush1.msra.mxu0 0.0
  %4917 = vmatprep.subr.mxu0 0.0
  %4918 = vmatpush1.msra.mxu0 0.0
  %4919 = vmatprep.subr.mxu0 0.0
  %4920 = vmatpush1.msra.mxu0 0.0
  %4921 = vmatprep.subr.mxu0 0.0
  %4922 = vmatpush1.msra.mxu0 0.0
  %4923 = vmatprep.subr.mxu0 0.0
  %4924 = vmatpush1.msra.mxu0 0.0
  %4925 = vmatprep.subr.mxu0 0.0
  %4926 = vmatpush1.msra.mxu0 0.0
  %4927 = vmatprep.subr.mxu0 0.0
  %4928 = vmatpush1.msra.mxu0 0.0
  %4929 = vmatprep.subr.mxu0 0.0
  %4930 = vmatpush1.msra.mxu0 0.0
  %4931 = vmatprep.subr.mxu0 0.0
  %4932 = vmatpush1.msra.mxu0 0.0
  %4933 = vmatprep.subr.mxu0 0.0
  %4934 = vmatpush1.msra.mxu0 0.0
  %4935 = vmatprep.subr.mxu0 0.0
  %4936 = vmatpush1.msra.mxu0 0.0
  %4937 = vmatprep.subr.mxu0 0.0
  %4938 = vmatpush1.msra.mxu0 0.0
  %4939 = vmatprep.subr.mxu0 0.0
  %4940 = vmatpush1.msra.mxu0 0.0
  %4941 = vmatprep.subr.mxu0 0.0
  %4942 = vmatpush1.msra.mxu0 0.0
  %4943 = vmatprep.subr.mxu0 0.0
  %4944 = vmatpush1.msra.mxu0 0.0
  %4945 = vmatprep.subr.mxu0 0.0
  %4946 = vmatpush1.msra.mxu0 0.0
  %4947 = vmatprep.subr.mxu0 0.0
  %4948 = vmatpush1.msra.mxu0 0.0
  %4949 = vmatprep.subr.mxu0 0.0
  %4950 = vmatpush1.msra.mxu0 0.0
  %4951 = vmatprep.subr.mxu0 0.0
  %4952 = vmatpush1.msra.mxu0 0.0
  %4953 = vmatprep.subr.mxu0 0.0
  %4954 = vmatpush1.msra.mxu0 0.0
  %4955 = vmatprep.subr.mxu0 0.0
  %4956 = vmatpush1.msra.mxu0 0.0
  %4957 = vmatprep.subr.mxu0 0.0
  %4958 = vmatpush1.msra.mxu0 0.0
  %4959 = vmatprep.mubr.f32.mxu0 0.0
  %4960 = vmatmul.mubr.f32.gmra.mrb[0].mxu0 %v4890
  %v4961 = vpop.f32.mrb[0].mxu0
  %v4962 = vadd.f32 %v4887, %v4961
  %v4963 = vpop.f32.mrb[0].mxu0
  %4964 = vmatprep.mubr.f32.mxu0 0.0
  %4965 = vmatmul.mubr.f32.gmra.mrb[0].mxu0 %v4893
  %v4966 = vpop.f32.mrb[0].mxu0
  %v4967 = vadd.f32 %v4887, %v4966
  %v4968 = vpop.f32.mrb[0].mxu0
  %4969 = vdwg.mxu0
  %v4970 = vld [vmem:[%s23] sm:$0xff]
  %v4971 = vld [vmem:[%s23 + $0x8] sm:$0xff]
  %v4972 = vld [vmem:[%s23 + $0x10] sm:$0xff]
  %v4973 = vld [vmem:[%s23 + $0x18] sm:$0xff]
  %v4974 = vld [vmem:[%s24] sm:$0x1]
  %v4976 = vlaneseq
  %v4977 = vshrl.u32 %v4976, 7
  %v4978 = vsub.s32 0, %v4977
  %v4979 = vrot.slane %v4974, %v4978
  %4981 = vmatprep.subr.mxu0 0.0
  %4982 = vmatpush1.msra.mxu0 %v4970
  %4983 = vmatprep.subr.mxu0 0.0
  %4984 = vmatpush1.msra.mxu0 %v4971
  %4985 = vmatprep.subr.mxu0 0.0
  %4986 = vmatpush1.msra.mxu0 %v4972
  %4987 = vmatprep.subr.mxu0 0.0
  %4988 = vmatpush1.msra.mxu0 %v4973
  %4989 = vmatprep.subr.mxu0 0.0
  %4990 = vmatpush1.msra.mxu0 0.0
  %4991 = vmatprep.subr.mxu0 0.0
  %4992 = vmatpush1.msra.mxu0 0.0
  %4993 = vmatprep.subr.mxu0 0.0
  %4994 = vmatpush1.msra.mxu0 0.0
  %4995 = vmatprep.subr.mxu0 0.0
  %4996 = vmatpush1.msra.mxu0 0.0
  %4997 = vmatprep.subr.mxu0 0.0
  %4998 = vmatpush1.msra.mxu0 0.0
  %4999 = vmatprep.subr.mxu0 0.0
  %5000 = vmatpush1.msra.mxu0 0.0
  %5001 = vmatprep.subr.mxu0 0.0
  %5002 = vmatpush1.msra.mxu0 0.0
  %5003 = vmatprep.subr.mxu0 0.0
  %5004 = vmatpush1.msra.mxu0 0.0
  %5005 = vmatprep.subr.mxu0 0.0
  %5006 = vmatpush1.msra.mxu0 0.0
  %5007 = vmatprep.subr.mxu0 0.0
  %5008 = vmatpush1.msra.mxu0 0.0
  %5009 = vmatprep.subr.mxu0 0.0
  %5010 = vmatpush1.msra.mxu0 0.0
  %5011 = vmatprep.subr.mxu0 0.0
  %5012 = vmatpush1.msra.mxu0 0.0
  %5013 = vmatprep.subr.mxu0 0.0
  %5014 = vmatpush1.msra.mxu0 0.0
  %5015 = vmatprep.subr.mxu0 0.0
  %5016 = vmatpush1.msra.mxu0 0.0
  %5017 = vmatprep.subr.mxu0 0.0
  %5018 = vmatpush1.msra.mxu0 0.0
  %5019 = vmatprep.subr.mxu0 0.0
  %5020 = vmatpush1.msra.mxu0 0.0
  %5021 = vmatprep.subr.mxu0 0.0
  %5022 = vmatpush1.msra.mxu0 0.0
  %5023 = vmatprep.subr.mxu0 0.0
  %5024 = vmatpush1.msra.mxu0 0.0
  %5025 = vmatprep.subr.mxu0 0.0
  %5026 = vmatpush1.msra.mxu0 0.0
  %5027 = vmatprep.subr.mxu0 0.0
  %5028 = vmatpush1.msra.mxu0 0.0
  %5029 = vmatprep.subr.mxu0 0.0
  %5030 = vmatpush1.msra.mxu0 0.0
  %5031 = vmatprep.subr.mxu0 0.0
  %5032 = vmatpush1.msra.mxu0 0.0
  %5033 = vmatprep.subr.mxu0 0.0
  %5034 = vmatpush1.msra.mxu0 0.0
  %5035 = vmatprep.subr.mxu0 0.0
  %5036 = vmatpush1.msra.mxu0 0.0
  %5037 = vmatprep.subr.mxu0 0.0
  %5038 = vmatpush1.msra.mxu0 0.0
  %5039 = vmatprep.subr.mxu0 0.0
  %5040 = vmatpush1.msra.mxu0 0.0
  %5041 = vmatprep.subr.mxu0 0.0
  %5042 = vmatpush1.msra.mxu0 0.0
  %5043 = vmatprep.subr.mxu0 0.0
  %5044 = vmatpush1.msra.mxu0 0.0
  %5045 = vmatprep.mubr.f32.mxu0 0.0
  %5046 = vmatmul.mubr.f32.gmra.mrb[0].mxu0 %v4890
  %v5047 = vpop.f32.mrb[0].mxu0
  %v5048 = vadd.f32 %v4979, %v5047
  %v5049 = vpop.f32.mrb[0].mxu0
  %5050 = vmatprep.mubr.f32.mxu0 0.0
  %5051 = vmatmul.mubr.f32.gmra.mrb[0].mxu0 %v4893
  %v5052 = vpop.f32.mrb[0].mxu0
  %v5053 = vadd.f32 %v4979, %v5052
  %v5054 = vpop.f32.mrb[0].mxu0
  %5055 = vdwg.mxu0
  %v5056 = vmax.f32 %v5048, 0.0
  %v5057 = vmax.f32 %v5053, 0.0
  %v5058 = vand.u32 2147483647, %v5048
  %v5059 = vand.u32 2147483647, %v5053
  %v5060 = vsub.f32 0.0, %v5058
  %v5061 = vsub.f32 0.0, %v5059
  %v5062 = vmul.f32 %v5060, 1.442695
  %v5063 = vpow.pop %v5062
  %v5064 = vmul.f32 %v5061, 1.442695
  %v5065 = vpow.pop %v5064
  %v5066 = vadd.f32 %v5063, 1.0
  %v5067 = vadd.f32 %v5065, 1.0
  %v5068 = vlog2.pop %v5066
  %v5069 = vmul.f32 %v5068, 0.6931472
  %v5070 = vlog2.pop %v5067
  %v5071 = vmul.f32 %v5070, 0.6931472
  %v5072 = vadd.f32 %v5056, %v5069
  %v5073 = vadd.f32 %v5057, %v5071
  %v5074 = vadd.f32 %v5072, 1e-06
  %v5075 = vadd.f32 %v5073, 1e-06
  %v5076 = vld [vmem:[%s20] sm:$0xff]
  %v5077 = vld [vmem:[%s20 + $0x8] sm:$0xff]
  %v5078 = vmul.f32 %v5074, %v5076
  %v5079 = vmul.f32 %v5075, %v5077
  %v5080 = vadd.f32 %v4962, %v5078
  %v5081 = vadd.f32 %v4967, %v5079
  %v5082 = vsub.f32 %v5080, %v4962
  %v5083 = vmul.f32 %v5082, %v5082
  %v5084 = vsub.f32 0.0, %v5083
  %v5085 = vmul.f32 %v5074, 2.0
  %v5086 = vmul.f32 %v5085, %v5074
  %v5087 = vrcp.pop %v5086
  %v5088 = vmul.f32 %v5084, %v5087
  %v5089 = vlog2.pop %v5074
  %v5090 = vmul.f32 %v5089, 0.6931472
  %v5091 = vsub.f32 %v5088, %v5090
  %v5092 = vsub.f32 %v5091, 0.9189385
  %v5093 = vsub.f32 %v5080, %v4967
  %v5094 = vmul.f32 %v5093, %v5093
  %v5095 = vsub.f32 0.0, %v5094
  %v5096 = vmul.f32 %v5075, 2.0
  %v5097 = vmul.f32 %v5096, %v5075
  %v5098 = vrcp.pop %v5097
  %v5099 = vmul.f32 %v5095, %v5098
  %v5100 = vlog2.pop %v5075
  %v5101 = vmul.f32 %v5100, 0.6931472
  %v5102 = vsub.f32 %v5099, %v5101
  %v5103 = vsub.f32 %v5102, 0.9189385
  %v5104 = vsub.f32 %v5092, %v5103
  %v5105 = vsub.f32 %v5081, %v4967
  %v5106 = vmul.f32 %v5105, %v5105
  %v5107 = vsub.f32 0.0, %v5106
  %v5108 = vmul.f32 %v5107, %v5098
  %v5109 = vsub.f32 %v5108, %v5101
  %v5110 = vsub.f32 %v5109, 0.9189385
  %v5111 = vsub.f32 %v5081, %v4962
  %v5112 = vmul.f32 %v5111, %v5111
  %v5113 = vsub.f32 0.0, %v5112
  %v5114 = vmul.f32 %v5113, %v5087
  %v5115 = vsub.f32 %v5114, %v5090
  %v5116 = vsub.f32 %v5115, 0.9189385
  %v5117 = vsub.f32 %v5110, %v5116
  %5119 = vrot.lane.b32.xlu0 %v5081, 32
  %v5120 = vpop.permute.xlu0 %5119
  %5123 = vrot.lane.b32.xlu0 %v5104, 64
  %v5124 = vpop.permute.xlu0 %5123
  %5127 = vrot.lane.b32.xlu0 %v5117, 96
  %v5128 = vpop.permute.xlu0 %5127
  %v5130 = vsel %vm2207, %v5080, %v5120
  %v5131 = vsel %vm4710, %v5130, %v5124
  %vm5132 = vcmask 785408
  %v5133 = vsel %vm5132, %v5131, %v5128
  %5134 = vst [vmem:[%s25] sm:$0xff] %v5133
  // Predicated region
  $region102: #{mib_forward.3} parent=0 // pred_check
    _
  $region103: #{mib_forward.3} parent=0 // pred_check_branch
    %5136 = sbr.rel (0) target = $region105
  $region104: #{mib_forward.3} parent=0 // pred_region
    _
  $region105: #{mib_forward.3} parent=0 // pred_fallthru
    _
  // Predicated region
  $region106: #{mib_forward.3} parent=0 // pred_check
    _
  $region107: #{mib_forward.3} parent=0 // pred_check_branch
    %5138 = sbr.rel (0) target = $region109
  $region108: #{mib_forward.3} parent=0 // pred_region
    _
  $region109: #{mib_forward.3} parent=0 // pred_fallthru
    _

</llo_original>
